<compile_context>
chip_gen: v7x
topology: tpu7x:2x2x1
jax: 0.10.0
libtpu: 0.0.40
codegen_flags: <defaults>
</compile_context>

<pallas_src>
import functools

import jax
import jax.numpy as jnp
from jax.experimental import pallas as pl
from jax.experimental.pallas import tpu as pltpu


# ----------------------------- in-kernel helpers -----------------------------

def _layer_norm(y, g, b, eps=1e-5):
    mean = jnp.mean(y, axis=-1, keepdims=True)
    var = jnp.mean(jnp.square(y - mean), axis=-1, keepdims=True)
    return (y - mean) * jax.lax.rsqrt(var + eps) * g + b


def _im2col_conv(inp_bf, w_flat, bias, k, pad, S):
    # inp_bf: (S, Cin) bf16; w_flat: (k*Cin, Cout) bf16.  Zero padding and the
    # im2col cols buffer are built in bf16 entirely in VMEM; the conv becomes ONE
    # matmul with contraction k*Cin (instead of k small Cin-wide dots).
    if pad > 0:
        z = jnp.zeros((pad, inp_bf.shape[1]), inp_bf.dtype)
        inp_bf = jnp.concatenate([z, inp_bf, z], axis=0)
    if k > 1:
        cols = jnp.concatenate([inp_bf[i:i + S, :] for i in range(k)], axis=-1)
    else:
        cols = inp_bf[:S, :]
    return jnp.dot(cols, w_flat, preferred_element_type=jnp.float32) + bias


# ----------------------------- fused FFT-block layer kernel -----------------------------

def _fft_layer_kernel(x_ref, keypad_ref, npm_ref,
                      wq_ref, wk_ref, wv_ref, bq_ref, bk_ref, bv_ref,
                      wfc_ref, bfc_ref, ln1g_ref, ln1b_ref,
                      w1_ref, b1_ref, w2_ref, b2_ref, ln2g_ref, ln2b_ref,
                      o_ref, *, n_head, k1, p1, k2, p2):
    x = x_ref[0]                                   # (S, D) f32
    S = x.shape[0]
    x_bf = x.astype(jnp.bfloat16)                  # cast once for every matmul LHS
    keypad = keypad_ref[0]                         # (1, S), 1.0 where key is PAD
    npm = npm_ref[0]                               # (S, 1) non-pad mask

    # ---- multi-head self-attention (per-head weights, fc accumulated per head) ----
    mha = None
    for h in range(n_head):                        # static unrolled head loop
        # temperature already folded into wq/bq in preprocess_params
        q = (jnp.dot(x_bf, wq_ref[h], preferred_element_type=jnp.float32)
             + bq_ref[h]).astype(jnp.bfloat16)     # (S, d_k)
        k = (jnp.dot(x_bf, wk_ref[h], preferred_element_type=jnp.float32)
             + bk_ref[h]).astype(jnp.bfloat16)
        v = (jnp.dot(x_bf, wv_ref[h], preferred_element_type=jnp.float32)
             + bv_ref[h]).astype(jnp.bfloat16)     # (S, d_v)
        s = jnp.dot(q, k.T, preferred_element_type=jnp.float32)   # (S, S) f32
        # masked_fill(mask, -inf); -1e30 in f32 so exp underflows to exactly 0.
        # Fully-masked rows give a uniform distribution (PyTorch gives NaN); those
        # rows are zeroed by the non-pad mask below, so outputs match.
        s = jnp.where(keypad > 0.5, -1e30, s)
        m = jnp.max(s, axis=-1, keepdims=True)
        p = jnp.exp(s - m)                          # f32 softmax
        attn = (p * pl.reciprocal(jnp.sum(p, axis=-1, keepdims=True),
                                  approx=True)).astype(jnp.bfloat16)
        head = jnp.dot(attn, v, preferred_element_type=jnp.float32).astype(jnp.bfloat16)
        contrib = jnp.dot(head, wfc_ref[h], preferred_element_type=jnp.float32)
        mha = contrib if mha is None else mha + contrib            # no heads concat

    y1 = mha + bfc_ref[...] + x                                    # fc bias + residual
    a = _layer_norm(y1, ln1g_ref[...], ln1b_ref[...]) * npm        # LN1 + non-pad mask

    # ---- position-wise FFN: conv1(+ReLU) -> conv2 -> residual + LN2 + mask ----
    a_bf = a.astype(jnp.bfloat16)
    h1 = _im2col_conv(a_bf, w1_ref[...], b1_ref[...], k1, p1, S)   # (S, d_hid) f32
    h1 = jnp.maximum(h1, 0.0).astype(jnp.bfloat16)                 # ReLU
    h2 = _im2col_conv(h1, w2_ref[...], b2_ref[...], k2, p2, S)     # (S, D) f32
    y2 = h2 + a                                                    # residual
    o_ref[0] = _layer_norm(y2, ln2g_ref[...], ln2b_ref[...]) * npm


def _const_spec(shape):
    nd = len(shape)
    return pl.BlockSpec(shape, lambda b, _nd=nd: (0,) * _nd)


def fft_block_layer(x, key_pad, npm, lp, *, n_head, kernel_sizes, paddings):
    B, S, D = x.shape
    H = n_head
    d_k = lp['wq'].shape[2]
    d_v = lp['wv'].shape[2]
    d_hid = lp['w1'].shape[1]
    k1, k2 = kernel_sizes
    p1, p2 = paddings
    # residual add requires shape-preserving convs (as in the reference config)
    assert S + 2 * p1 - k1 + 1 == S, "conv1 must be shape-preserving"
    assert S + 2 * p2 - k2 + 1 == S, "conv2 must be shape-preserving"

    kernel = functools.partial(_fft_layer_kernel, n_head=H, k1=k1, p1=p1, k2=k2, p2=p2)

    weight_keys = ('wq', 'wk', 'wv', 'bq', 'bk', 'bv', 'wfc', 'bfc', 'ln1_g', 'ln1_b',
                   'w1', 'b1', 'w2', 'b2', 'ln2_g', 'ln2_b')
    weight_bytes = sum(int(lp[k].size) * lp[k].dtype.itemsize for k in weight_keys)

    # Advisory cost estimate so XLA schedules embedding gathers around the calls.
    flops = B * (2 * S * D * 3 * H * d_k          # QKV projections
                 + 2 * H * S * S * (d_k + d_v)    # scores + attn@V
                 + 2 * S * H * d_v * D            # output projection
                 + 2 * S * k1 * D * d_hid         # conv1 (im2col)
                 + 2 * S * k2 * d_hid * D)        # conv2
    transcendentals = B * H * S * S               # softmax exps
    bytes_accessed = 2 * B * S * D * 4 + 8 * B * S + weight_bytes

    # Per-program VMEM footprint (blocks are double-buffered by the pipeline) with
    # 2x headroom; floored at 32 MiB (>= v5e/v6e defaults), capped at 64 MiB (v7x).
    intermediates = (2 * S * S * 4                         # scores + exp
                     + 3 * S * max(d_k, d_v) * 4           # q / k / v
                     + S * (k1 * D + k2 * d_hid) * 2       # bf16 im2col cols
                     + S * d_hid * 4 + 4 * S * D * 4)      # hidden + activations
    blocks = 2 * (2 * S * D * 4 + 2 * S * 4) + 2 * weight_bytes
    vmem_limit = int(min(max(2 * (intermediates + blocks), 32 << 20), 64 << 20))

    in_specs = [
        pl.BlockSpec((1, S, D), lambda b: (b, 0, 0)),      # x (also residual)
        pl.BlockSpec((1, 1, S), lambda b: (b, 0, 0)),      # key-pad mask (no head tiling)
        pl.BlockSpec((1, S, 1), lambda b: (b, 0, 0)),      # non-pad mask
        _const_spec((H, D, d_k)),                          # wq (temp folded, bf16)
        _const_spec((H, D, d_k)),                          # wk (bf16)
        _const_spec((H, D, d_v)),                          # wv (bf16)
        _const_spec((H, 1, d_k)),                          # bq (temp folded)
        _const_spec((H, 1, d_k)),                          # bk
        _const_spec((H, 1, d_v)),                          # bv
        _const_spec((H, d_v, D)),                          # wfc (bf16, per-head rows)
        _const_spec((1, D)),                               # bfc
        _const_spec((1, D)),                               # ln1 gamma
        _const_spec((1, D)),                               # ln1 beta
        _const_spec((k1 * D, d_hid)),                      # conv1 weight (im2col, bf16)
        _const_spec((1, d_hid)),                           # conv1 bias
        _const_spec((k2 * d_hid, D)),                      # conv2 weight (im2col, bf16)
        _const_spec((1, D)),                               # conv2 bias
        _const_spec((1, D)),                               # ln2 gamma
        _const_spec((1, D)),                               # ln2 beta
    ]

    return pl.pallas_call(
        kernel,
        grid=(B,),
        in_specs=in_specs,
        out_specs=pl.BlockSpec((1, S, D), lambda b: (b, 0, 0)),
        out_shape=jax.ShapeDtypeStruct((B, S, D), jnp.float32),
        compiler_params=pltpu.CompilerParams(
            dimension_semantics=("parallel",),
            vmem_limit_bytes=vmem_limit),
        cost_estimate=pl.CostEstimate(flops=flops,
                                      transcendentals=transcendentals,
                                      bytes_accessed=bytes_accessed),
    )(x, key_pad, npm,
      lp['wq'], lp['wk'], lp['wv'], lp['bq'], lp['bk'], lp['bv'],
      lp['wfc'], lp['bfc'], lp['ln1_g'], lp['ln1_b'],
      lp['w1'], lp['b1'], lp['w2'], lp['b2'], lp['ln2_g'], lp['ln2_b'])


# ----------------------------- one-time parameter preprocessing -----------------------------

def preprocess_params(params, cfg):
    """Runs ONCE outside jit: per-head weight layout, bf16 casts, im2col flattening,
    and the 1/sqrt(d_k) attention temperature folded into the q projection."""
    D = cfg['hidden_size']
    H = cfg['num_heads']
    d_k = D // H
    d_v = D // H
    inv_temp = 1.0 / (float(d_k) ** 0.5)

    layers = []
    for p in params['layers']:
        K0, cin1, d_hid = p['w1'].shape
        K1, cin2, cout2 = p['w2'].shape
        layers.append(dict(
            # (H, D, d_k) so per-head access is a leading-axis index (no lane slices)
            wq=(p['w_qs'] * inv_temp).reshape(D, H, d_k).transpose(1, 0, 2).astype(jnp.bfloat16),
            wk=p['w_ks'].reshape(D, H, d_k).transpose(1, 0, 2).astype(jnp.bfloat16),
            wv=p['w_vs'].reshape(D, H, d_v).transpose(1, 0, 2).astype(jnp.bfloat16),
            bq=(p['b_qs'] * inv_temp).reshape(H, 1, d_k),
            bk=p['b_ks'].reshape(H, 1, d_k),
            bv=p['b_vs'].reshape(H, 1, d_v),
            wfc=p['w_fc'].reshape(H, d_v, D).astype(jnp.bfloat16),   # accumulate fc per head
            bfc=p['b_fc'].reshape(1, D),
            ln1_g=p['ln1_g'].reshape(1, D), ln1_b=p['ln1_b'].reshape(1, D),
            w1=p['w1'].reshape(K0 * cin1, d_hid).astype(jnp.bfloat16),   # im2col-flattened
            b1=p['b1'].reshape(1, d_hid),
            w2=p['w2'].reshape(K1 * cin2, cout2).astype(jnp.bfloat16),
            b2=p['b2'].reshape(1, cout2),
            ln2_g=p['ln2_g'].reshape(1, D), ln2_b=p['ln2_b'].reshape(1, D),
        ))
    return {'emb': params['emb'], 'pos': params['pos'], 'layers': layers}


# ----------------------------- model glue -----------------------------

def encoder_forward(prepped, src_seq, src_pos, cfg):
    pad_id = cfg['pad_id']
    H = cfg['num_heads']
    # key-pad attention mask kept un-tiled as (B, 1, S); broadcast inside kernel
    key_pad = (src_seq == pad_id).astype(jnp.float32)[:, None, :]       # (B, 1, S)
    non_pad_mask = (src_seq != pad_id).astype(jnp.float32)[:, :, None]  # (B, S, 1)
    enc = prepped['emb'][src_seq] + prepped['pos'][src_pos]             # embedding gathers (glue)
    for lp in prepped['layers']:
        enc = fft_block_layer(enc, key_pad, non_pad_mask, lp,
                              n_head=H,
                              kernel_sizes=cfg['fft_conv1d_kernel'],
                              paddings=cfg['fft_conv1d_padding'])
    return enc


# ----------------------------- parameter init -----------------------------

def init_params(key, cfg):
    D = cfg['hidden_size']
    H = cfg['num_heads']
    d_k = D // H
    d_v = D // H
    d_hid = cfg['fft_conv1d_filter_size']
    K0, K1 = cfg['fft_conv1d_kernel']

    keys = jax.random.split(key, 2 + cfg['num_layers'])
    emb = jax.random.normal(keys[0], (cfg['vocab_size'], D), jnp.float32)
    emb = emb.at[cfg['pad_id']].set(0.0)                               # padding_idx row = 0
    pos = jax.random.normal(keys[1], (cfg['max_seq_len'] + 1, D), jnp.float32)
    pos = pos.at[cfg['pad_id']].set(0.0)

    layers = []
    for li in range(cfg['num_layers']):
        lk = jax.random.split(keys[2 + li], 12)
        std_qk = (2.0 / (D + d_k)) ** 0.5
        std_v = (2.0 / (D + d_v)) ** 0.5
        std_fc = (2.0 / (H * d_v + D)) ** 0.5
        layers.append({
            # linear weights stored transposed: (in_features, out_features)
            'w_qs': jax.random.normal(lk[0], (D, H * d_k), jnp.float32) * std_qk,
            'b_qs': jax.random.normal(lk[1], (H * d_k,), jnp.float32) * 0.01,
            'w_ks': jax.random.normal(lk[2], (D, H * d_k), jnp.float32) * std_qk,
            'b_ks': jax.random.normal(lk[3], (H * d_k,), jnp.float32) * 0.01,
            'w_vs': jax.random.normal(lk[4], (D, H * d_v), jnp.float32) * std_v,
            'b_vs': jax.random.normal(lk[5], (H * d_v,), jnp.float32) * 0.01,
            'w_fc': jax.random.normal(lk[6], (H * d_v, D), jnp.float32) * std_fc,
            'b_fc': jax.random.normal(lk[7], (D,), jnp.float32) * 0.01,
            'ln1_g': jnp.ones((D,), jnp.float32),
            'ln1_b': jnp.zeros((D,), jnp.float32),
            # conv weights stored as (K, C_in, C_out) for the channels-last layout
            'w1': jax.random.normal(lk[8], (K0, D, d_hid), jnp.float32) * 0.05,
            'b1': jax.random.normal(lk[9], (d_hid,), jnp.float32) * 0.01,
            'w2': jax.random.normal(lk[10], (K1, d_hid, D), jnp.float32) * 0.05,
            'b2': jax.random.normal(lk[11], (D,), jnp.float32) * 0.01,
            'ln2_g': jnp.ones((D,), jnp.float32),
            'ln2_b': jnp.zeros((D,), jnp.float32),
        })
    return {'emb': emb, 'pos': pos, 'layers': layers}


# ----------------------------- main -----------------------------

if __name__ == "__main__":
    cfg = dict(
        pad_id=0,
        vocab_size=20,
        max_seq_len=16,
        hidden_size=32,
        num_heads=2,
        num_layers=2,
        fft_conv1d_filter_size=64,
        fft_conv1d_kernel=(3, 1),
        fft_conv1d_padding=(1, 0),
        dropout=0.1,  # identity at eval
    )

    B, S = 2, 8
    key = jax.random.PRNGKey(0)
    k_params, k_seq = jax.random.split(key)
    params = init_params(k_params, cfg)
    prepped = preprocess_params(params, cfg)        # one-time weight prep, outside jit

    # deterministic token ids in [1, vocab), with trailing PADs in batch 0
    src_seq = jax.random.randint(k_seq, (B, S), 1, cfg['vocab_size'], dtype=jnp.int32)
    src_seq = src_seq.at[0, 5:].set(cfg['pad_id'])
    pos_ids = jnp.arange(1, S + 1, dtype=jnp.int32)[None, :]
    src_pos = jnp.where(src_seq != cfg['pad_id'], pos_ids, cfg['pad_id']).astype(jnp.int32)

    fwd = jax.jit(lambda p, seq, pos: encoder_forward(p, seq, pos, cfg))
    out = fwd(prepped, src_seq, src_pos)
    out = jax.block_until_ready(out)
    assert out.shape == (B, S, cfg['hidden_size'])
    assert bool(jnp.all(jnp.isfinite(out)))
    print("KERNEL_OK")
</pallas_src>

<mosaic_0001>
module attributes {stable_mosaic.version = 11 : i64} {
  func.func @_fft_layer_kernel(%arg0: i32, %arg1: memref<1x8x32xf32, #tpu.memory_space<vmem>>, %arg2: memref<1x1x8xf32, #tpu.memory_space<vmem>>, %arg3: memref<1x8x1xf32, #tpu.memory_space<vmem>>, %arg4: memref<2x32x16xbf16, #tpu.memory_space<vmem>>, %arg5: memref<2x32x16xbf16, #tpu.memory_space<vmem>>, %arg6: memref<2x32x16xbf16, #tpu.memory_space<vmem>>, %arg7: memref<2x1x16xf32, #tpu.memory_space<vmem>>, %arg8: memref<2x1x16xf32, #tpu.memory_space<vmem>>, %arg9: memref<2x1x16xf32, #tpu.memory_space<vmem>>, %arg10: memref<2x16x32xbf16, #tpu.memory_space<vmem>>, %arg11: memref<1x32xf32, #tpu.memory_space<vmem>>, %arg12: memref<1x32xf32, #tpu.memory_space<vmem>>, %arg13: memref<1x32xf32, #tpu.memory_space<vmem>>, %arg14: memref<96x64xbf16, #tpu.memory_space<vmem>>, %arg15: memref<1x64xf32, #tpu.memory_space<vmem>>, %arg16: memref<64x32xbf16, #tpu.memory_space<vmem>>, %arg17: memref<1x32xf32, #tpu.memory_space<vmem>>, %arg18: memref<1x32xf32, #tpu.memory_space<vmem>>, %arg19: memref<1x32xf32, #tpu.memory_space<vmem>>, %arg20: memref<1x8x32xf32, #tpu.memory_space<vmem>>) attributes {dimension_semantics = [#tpu.dimension_semantics<parallel>], iteration_bounds = array<i64: 2>, scalar_prefetch = 0 : i64, scratch_operands = 0 : i64, tpu.core_type = #tpu.core_type<tc>, window_params = [{transform_indices = @transform_0, window_bounds = array<i64: 1, 8, 32>}, {transform_indices = @transform_1, window_bounds = array<i64: 1, 1, 8>}, {transform_indices = @transform_2, window_bounds = array<i64: 1, 8, 1>}, {pipeline_mode = #tpu.pipeline_mode<synchronous>, transform_indices = @transform_3, window_bounds = array<i64: 2, 32, 16>}, {pipeline_mode = #tpu.pipeline_mode<synchronous>, transform_indices = @transform_4, window_bounds = array<i64: 2, 32, 16>}, {pipeline_mode = #tpu.pipeline_mode<synchronous>, transform_indices = @transform_5, window_bounds = array<i64: 2, 32, 16>}, {pipeline_mode = #tpu.pipeline_mode<synchronous>, transform_indices = @transform_6, window_bounds = array<i64: 2, 1, 16>}, {pipeline_mode = #tpu.pipeline_mode<synchronous>, transform_indices = @transform_7, window_bounds = array<i64: 2, 1, 16>}, {pipeline_mode = #tpu.pipeline_mode<synchronous>, transform_indices = @transform_8, window_bounds = array<i64: 2, 1, 16>}, {pipeline_mode = #tpu.pipeline_mode<synchronous>, transform_indices = @transform_9, window_bounds = array<i64: 2, 16, 32>}, {pipeline_mode = #tpu.pipeline_mode<synchronous>, transform_indices = @transform_10, window_bounds = array<i64: 1, 32>}, {pipeline_mode = #tpu.pipeline_mode<synchronous>, transform_indices = @transform_11, window_bounds = array<i64: 1, 32>}, {pipeline_mode = #tpu.pipeline_mode<synchronous>, transform_indices = @transform_12, window_bounds = array<i64: 1, 32>}, {pipeline_mode = #tpu.pipeline_mode<synchronous>, transform_indices = @transform_13, window_bounds = array<i64: 96, 64>}, {pipeline_mode = #tpu.pipeline_mode<synchronous>, transform_indices = @transform_14, window_bounds = array<i64: 1, 64>}, {pipeline_mode = #tpu.pipeline_mode<synchronous>, transform_indices = @transform_15, window_bounds = array<i64: 64, 32>}, {pipeline_mode = #tpu.pipeline_mode<synchronous>, transform_indices = @transform_16, window_bounds = array<i64: 1, 32>}, {pipeline_mode = #tpu.pipeline_mode<synchronous>, transform_indices = @transform_17, window_bounds = array<i64: 1, 32>}, {pipeline_mode = #tpu.pipeline_mode<synchronous>, transform_indices = @transform_18, window_bounds = array<i64: 1, 32>}, {transform_indices = @transform_19, window_bounds = array<i64: 1, 8, 32>}]} {
    %c0 = arith.constant 0 : index
    %c0_0 = arith.constant 0 : index
    %c0_1 = arith.constant 0 : index
    %0 = vector.load %arg1[%c0, %c0_0, %c0_1] : memref<1x8x32xf32, #tpu.memory_space<vmem>>, vector<1x8x32xf32>
    %1 = vector.shape_cast %0 : vector<1x8x32xf32> to vector<8x32xf32>
    %2 = arith.truncf %1 : vector<8x32xf32> to vector<8x32xbf16>
    %c0_2 = arith.constant 0 : index
    %c0_3 = arith.constant 0 : index
    %c0_4 = arith.constant 0 : index
    %3 = vector.load %arg2[%c0_2, %c0_3, %c0_4] : memref<1x1x8xf32, #tpu.memory_space<vmem>>, vector<1x1x8xf32>
    %4 = vector.shape_cast %3 : vector<1x1x8xf32> to vector<1x8xf32>
    %c0_5 = arith.constant 0 : index
    %c0_6 = arith.constant 0 : index
    %c0_7 = arith.constant 0 : index
    %5 = vector.load %arg3[%c0_5, %c0_6, %c0_7] : memref<1x8x1xf32, #tpu.memory_space<vmem>>, vector<1x8x1xf32>
    %6 = vector.shape_cast %5 : vector<1x8x1xf32> to vector<8x1xf32>
    %c0_8 = arith.constant 0 : index
    %c0_9 = arith.constant 0 : index
    %c0_10 = arith.constant 0 : index
    %7 = vector.load %arg4[%c0_8, %c0_9, %c0_10] : memref<2x32x16xbf16, #tpu.memory_space<vmem>>, vector<1x32x16xbf16>
    %8 = vector.shape_cast %7 : vector<1x32x16xbf16> to vector<32x16xbf16>
    %cst = arith.constant dense<0.000000e+00> : vector<8x16xf32>
    %9 = tpu.matmul %2, %8, %cst {dimension_numbers = #tpu.dot_dimension_numbers<[1], [0], [0], [1], [0, 0, 1, 1], [], []>} : vector<8x32xbf16>, vector<32x16xbf16>, vector<8x16xf32> -> vector<8x16xf32>
    %c0_11 = arith.constant 0 : index
    %c0_12 = arith.constant 0 : index
    %c0_13 = arith.constant 0 : index
    %10 = vector.load %arg7[%c0_11, %c0_12, %c0_13] : memref<2x1x16xf32, #tpu.memory_space<vmem>>, vector<1x1x16xf32>
    %11 = vector.shape_cast %10 : vector<1x1x16xf32> to vector<1x16xf32>
    %12 = vector.broadcast %11 : vector<1x16xf32> to vector<8x16xf32>
    %13 = arith.addf %9, %12 : vector<8x16xf32>
    %14 = arith.truncf %13 : vector<8x16xf32> to vector<8x16xbf16>
    %c0_14 = arith.constant 0 : index
    %c0_15 = arith.constant 0 : index
    %c0_16 = arith.constant 0 : index
    %15 = vector.load %arg5[%c0_14, %c0_15, %c0_16] : memref<2x32x16xbf16, #tpu.memory_space<vmem>>, vector<1x32x16xbf16>
    %16 = vector.shape_cast %15 : vector<1x32x16xbf16> to vector<32x16xbf16>
    %cst_17 = arith.constant dense<0.000000e+00> : vector<8x16xf32>
    %17 = tpu.matmul %2, %16, %cst_17 {dimension_numbers = #tpu.dot_dimension_numbers<[1], [0], [0], [1], [0, 0, 1, 1], [], []>} : vector<8x32xbf16>, vector<32x16xbf16>, vector<8x16xf32> -> vector<8x16xf32>
    %c0_18 = arith.constant 0 : index
    %c0_19 = arith.constant 0 : index
    %c0_20 = arith.constant 0 : index
    %18 = vector.load %arg8[%c0_18, %c0_19, %c0_20] : memref<2x1x16xf32, #tpu.memory_space<vmem>>, vector<1x1x16xf32>
    %19 = vector.shape_cast %18 : vector<1x1x16xf32> to vector<1x16xf32>
    %20 = vector.broadcast %19 : vector<1x16xf32> to vector<8x16xf32>
    %21 = arith.addf %17, %20 : vector<8x16xf32>
    %22 = arith.truncf %21 : vector<8x16xf32> to vector<8x16xbf16>
    %c0_21 = arith.constant 0 : index
    %c0_22 = arith.constant 0 : index
    %c0_23 = arith.constant 0 : index
    %23 = vector.load %arg6[%c0_21, %c0_22, %c0_23] : memref<2x32x16xbf16, #tpu.memory_space<vmem>>, vector<1x32x16xbf16>
    %24 = vector.shape_cast %23 : vector<1x32x16xbf16> to vector<32x16xbf16>
    %cst_24 = arith.constant dense<0.000000e+00> : vector<8x16xf32>
    %25 = tpu.matmul %2, %24, %cst_24 {dimension_numbers = #tpu.dot_dimension_numbers<[1], [0], [0], [1], [0, 0, 1, 1], [], []>} : vector<8x32xbf16>, vector<32x16xbf16>, vector<8x16xf32> -> vector<8x16xf32>
    %c0_25 = arith.constant 0 : index
    %c0_26 = arith.constant 0 : index
    %c0_27 = arith.constant 0 : index
    %26 = vector.load %arg9[%c0_25, %c0_26, %c0_27] : memref<2x1x16xf32, #tpu.memory_space<vmem>>, vector<1x1x16xf32>
    %27 = vector.shape_cast %26 : vector<1x1x16xf32> to vector<1x16xf32>
    %28 = vector.broadcast %27 : vector<1x16xf32> to vector<8x16xf32>
    %29 = arith.addf %25, %28 : vector<8x16xf32>
    %30 = arith.truncf %29 : vector<8x16xf32> to vector<8x16xbf16>
    %31 = tpu.transpose %22, [1, 0] : vector<8x16xbf16> -> vector<16x8xbf16>
    %cst_28 = arith.constant dense<0.000000e+00> : vector<8x8xf32>
    %32 = tpu.matmul %14, %31, %cst_28 {dimension_numbers = #tpu.dot_dimension_numbers<[1], [0], [0], [1], [0, 0, 1, 1], [], []>} : vector<8x16xbf16>, vector<16x8xbf16>, vector<8x8xf32> -> vector<8x8xf32>
    %cst_29 = arith.constant 5.000000e-01 : f32
    %33 = vector.broadcast %cst_29 : f32 to vector<1x8xf32>
    %34 = arith.cmpf ogt, %4, %33 : vector<1x8xf32>
    %cst_30 = arith.constant -1.000000e+30 : f32
    %35 = vector.shape_cast %34 : vector<1x8xi1> to vector<1x8xi1>
    %36 = vector.broadcast %35 : vector<1x8xi1> to vector<8x8xi1>
    %37 = vector.broadcast %cst_30 : f32 to vector<8x8xf32>
    %38 = arith.select %36, %37, %32 : vector<8x8xi1>, vector<8x8xf32>
    %cst_31 = arith.constant dense<0xFF800000> : vector<8xf32>
    %39 = vector.multi_reduction <maximumf>, %38, %cst_31 [1] : vector<8x8xf32> to vector<8xf32>
    %40 = vector.shape_cast %39 : vector<8xf32> to vector<8x1xf32>
    %41 = vector.broadcast %40 : vector<8x1xf32> to vector<8x8xf32>
    %42 = arith.subf %38, %41 : vector<8x8xf32>
    %43 = math.exp %42 : vector<8x8xf32>
    %cst_32 = arith.constant dense<0.000000e+00> : vector<8xf32>
    %44 = vector.multi_reduction <add>, %43, %cst_32 [1] : vector<8x8xf32> to vector<8xf32>
    %45 = vector.shape_cast %44 : vector<8xf32> to vector<8x1xf32>
    %46 = tpu.reciprocal %45 {approx = true} : vector<8x1xf32> -> vector<8x1xf32>
    %47 = vector.broadcast %46 : vector<8x1xf32> to vector<8x8xf32>
    %48 = arith.mulf %43, %47 : vector<8x8xf32>
    %49 = arith.truncf %48 : vector<8x8xf32> to vector<8x8xbf16>
    %cst_33 = arith.constant dense<0.000000e+00> : vector<8x16xf32>
    %50 = tpu.matmul %49, %30, %cst_33 {dimension_numbers = #tpu.dot_dimension_numbers<[1], [0], [0], [1], [0, 0, 1, 1], [], []>} : vector<8x8xbf16>, vector<8x16xbf16>, vector<8x16xf32> -> vector<8x16xf32>
    %51 = arith.truncf %50 : vector<8x16xf32> to vector<8x16xbf16>
    %c0_34 = arith.constant 0 : index
    %c0_35 = arith.constant 0 : index
    %c0_36 = arith.constant 0 : index
    %52 = vector.load %arg10[%c0_34, %c0_35, %c0_36] : memref<2x16x32xbf16, #tpu.memory_space<vmem>>, vector<1x16x32xbf16>
    %53 = vector.shape_cast %52 : vector<1x16x32xbf16> to vector<16x32xbf16>
    %cst_37 = arith.constant dense<0.000000e+00> : vector<8x32xf32>
    %54 = tpu.matmul %51, %53, %cst_37 {dimension_numbers = #tpu.dot_dimension_numbers<[1], [0], [0], [1], [0, 0, 1, 1], [], []>} : vector<8x16xbf16>, vector<16x32xbf16>, vector<8x32xf32> -> vector<8x32xf32>
    %c1 = arith.constant 1 : index
    %c0_38 = arith.constant 0 : index
    %c0_39 = arith.constant 0 : index
    %55 = vector.load %arg4[%c1, %c0_38, %c0_39] : memref<2x32x16xbf16, #tpu.memory_space<vmem>>, vector<1x32x16xbf16>
    %56 = vector.shape_cast %55 : vector<1x32x16xbf16> to vector<32x16xbf16>
    %cst_40 = arith.constant dense<0.000000e+00> : vector<8x16xf32>
    %57 = tpu.matmul %2, %56, %cst_40 {dimension_numbers = #tpu.dot_dimension_numbers<[1], [0], [0], [1], [0, 0, 1, 1], [], []>} : vector<8x32xbf16>, vector<32x16xbf16>, vector<8x16xf32> -> vector<8x16xf32>
    %c1_41 = arith.constant 1 : index
    %c0_42 = arith.constant 0 : index
    %c0_43 = arith.constant 0 : index
    %58 = vector.load %arg7[%c1_41, %c0_42, %c0_43] : memref<2x1x16xf32, #tpu.memory_space<vmem>>, vector<1x1x16xf32>
    %59 = vector.shape_cast %58 : vector<1x1x16xf32> to vector<1x16xf32>
    %60 = vector.broadcast %59 : vector<1x16xf32> to vector<8x16xf32>
    %61 = arith.addf %57, %60 : vector<8x16xf32>
    %62 = arith.truncf %61 : vector<8x16xf32> to vector<8x16xbf16>
    %c1_44 = arith.constant 1 : index
    %c0_45 = arith.constant 0 : index
    %c0_46 = arith.constant 0 : index
    %63 = vector.load %arg5[%c1_44, %c0_45, %c0_46] : memref<2x32x16xbf16, #tpu.memory_space<vmem>>, vector<1x32x16xbf16>
    %64 = vector.shape_cast %63 : vector<1x32x16xbf16> to vector<32x16xbf16>
    %cst_47 = arith.constant dense<0.000000e+00> : vector<8x16xf32>
    %65 = tpu.matmul %2, %64, %cst_47 {dimension_numbers = #tpu.dot_dimension_numbers<[1], [0], [0], [1], [0, 0, 1, 1], [], []>} : vector<8x32xbf16>, vector<32x16xbf16>, vector<8x16xf32> -> vector<8x16xf32>
    %c1_48 = arith.constant 1 : index
    %c0_49 = arith.constant 0 : index
    %c0_50 = arith.constant 0 : index
    %66 = vector.load %arg8[%c1_48, %c0_49, %c0_50] : memref<2x1x16xf32, #tpu.memory_space<vmem>>, vector<1x1x16xf32>
    %67 = vector.shape_cast %66 : vector<1x1x16xf32> to vector<1x16xf32>
    %68 = vector.broadcast %67 : vector<1x16xf32> to vector<8x16xf32>
    %69 = arith.addf %65, %68 : vector<8x16xf32>
    %70 = arith.truncf %69 : vector<8x16xf32> to vector<8x16xbf16>
    %c1_51 = arith.constant 1 : index
    %c0_52 = arith.constant 0 : index
    %c0_53 = arith.constant 0 : index
    %71 = vector.load %arg6[%c1_51, %c0_52, %c0_53] : memref<2x32x16xbf16, #tpu.memory_space<vmem>>, vector<1x32x16xbf16>
    %72 = vector.shape_cast %71 : vector<1x32x16xbf16> to vector<32x16xbf16>
    %cst_54 = arith.constant dense<0.000000e+00> : vector<8x16xf32>
    %73 = tpu.matmul %2, %72, %cst_54 {dimension_numbers = #tpu.dot_dimension_numbers<[1], [0], [0], [1], [0, 0, 1, 1], [], []>} : vector<8x32xbf16>, vector<32x16xbf16>, vector<8x16xf32> -> vector<8x16xf32>
    %c1_55 = arith.constant 1 : index
    %c0_56 = arith.constant 0 : index
    %c0_57 = arith.constant 0 : index
    %74 = vector.load %arg9[%c1_55, %c0_56, %c0_57] : memref<2x1x16xf32, #tpu.memory_space<vmem>>, vector<1x1x16xf32>
    %75 = vector.shape_cast %74 : vector<1x1x16xf32> to vector<1x16xf32>
    %76 = vector.broadcast %75 : vector<1x16xf32> to vector<8x16xf32>
    %77 = arith.addf %73, %76 : vector<8x16xf32>
    %78 = arith.truncf %77 : vector<8x16xf32> to vector<8x16xbf16>
    %79 = tpu.transpose %70, [1, 0] : vector<8x16xbf16> -> vector<16x8xbf16>
    %cst_58 = arith.constant dense<0.000000e+00> : vector<8x8xf32>
    %80 = tpu.matmul %62, %79, %cst_58 {dimension_numbers = #tpu.dot_dimension_numbers<[1], [0], [0], [1], [0, 0, 1, 1], [], []>} : vector<8x16xbf16>, vector<16x8xbf16>, vector<8x8xf32> -> vector<8x8xf32>
    %cst_59 = arith.constant 5.000000e-01 : f32
    %81 = vector.broadcast %cst_59 : f32 to vector<1x8xf32>
    %82 = arith.cmpf ogt, %4, %81 : vector<1x8xf32>
    %cst_60 = arith.constant -1.000000e+30 : f32
    %83 = vector.shape_cast %82 : vector<1x8xi1> to vector<1x8xi1>
    %84 = vector.broadcast %83 : vector<1x8xi1> to vector<8x8xi1>
    %85 = vector.broadcast %cst_60 : f32 to vector<8x8xf32>
    %86 = arith.select %84, %85, %80 : vector<8x8xi1>, vector<8x8xf32>
    %cst_61 = arith.constant dense<0xFF800000> : vector<8xf32>
    %87 = vector.multi_reduction <maximumf>, %86, %cst_61 [1] : vector<8x8xf32> to vector<8xf32>
    %88 = vector.shape_cast %87 : vector<8xf32> to vector<8x1xf32>
    %89 = vector.broadcast %88 : vector<8x1xf32> to vector<8x8xf32>
    %90 = arith.subf %86, %89 : vector<8x8xf32>
    %91 = math.exp %90 : vector<8x8xf32>
    %cst_62 = arith.constant dense<0.000000e+00> : vector<8xf32>
    %92 = vector.multi_reduction <add>, %91, %cst_62 [1] : vector<8x8xf32> to vector<8xf32>
    %93 = vector.shape_cast %92 : vector<8xf32> to vector<8x1xf32>
    %94 = tpu.reciprocal %93 {approx = true} : vector<8x1xf32> -> vector<8x1xf32>
    %95 = vector.broadcast %94 : vector<8x1xf32> to vector<8x8xf32>
    %96 = arith.mulf %91, %95 : vector<8x8xf32>
    %97 = arith.truncf %96 : vector<8x8xf32> to vector<8x8xbf16>
    %cst_63 = arith.constant dense<0.000000e+00> : vector<8x16xf32>
    %98 = tpu.matmul %97, %78, %cst_63 {dimension_numbers = #tpu.dot_dimension_numbers<[1], [0], [0], [1], [0, 0, 1, 1], [], []>} : vector<8x8xbf16>, vector<8x16xbf16>, vector<8x16xf32> -> vector<8x16xf32>
    %99 = arith.truncf %98 : vector<8x16xf32> to vector<8x16xbf16>
    %c1_64 = arith.constant 1 : index
    %c0_65 = arith.constant 0 : index
    %c0_66 = arith.constant 0 : index
    %100 = vector.load %arg10[%c1_64, %c0_65, %c0_66] : memref<2x16x32xbf16, #tpu.memory_space<vmem>>, vector<1x16x32xbf16>
    %101 = vector.shape_cast %100 : vector<1x16x32xbf16> to vector<16x32xbf16>
    %cst_67 = arith.constant dense<0.000000e+00> : vector<8x32xf32>
    %102 = tpu.matmul %99, %101, %cst_67 {dimension_numbers = #tpu.dot_dimension_numbers<[1], [0], [0], [1], [0, 0, 1, 1], [], []>} : vector<8x16xbf16>, vector<16x32xbf16>, vector<8x32xf32> -> vector<8x32xf32>
    %103 = arith.addf %54, %102 : vector<8x32xf32>
    %c0_68 = arith.constant 0 : index
    %c0_69 = arith.constant 0 : index
    %104 = vector.load %arg11[%c0_68, %c0_69] : memref<1x32xf32, #tpu.memory_space<vmem>>, vector<1x32xf32>
    %105 = vector.broadcast %104 : vector<1x32xf32> to vector<8x32xf32>
    %106 = arith.addf %103, %105 : vector<8x32xf32>
    %107 = arith.addf %106, %1 : vector<8x32xf32>
    %c0_70 = arith.constant 0 : index
    %c0_71 = arith.constant 0 : index
    %108 = vector.load %arg12[%c0_70, %c0_71] : memref<1x32xf32, #tpu.memory_space<vmem>>, vector<1x32xf32>
    %c0_72 = arith.constant 0 : index
    %c0_73 = arith.constant 0 : index
    %109 = vector.load %arg13[%c0_72, %c0_73] : memref<1x32xf32, #tpu.memory_space<vmem>>, vector<1x32xf32>
    %cst_74 = arith.constant dense<0.000000e+00> : vector<8xf32>
    %110 = vector.multi_reduction <add>, %107, %cst_74 [1] : vector<8x32xf32> to vector<8xf32>
    %111 = vector.shape_cast %110 : vector<8xf32> to vector<8x1xf32>
    %cst_75 = arith.constant 3.200000e+01 : f32
    %112 = vector.broadcast %cst_75 : f32 to vector<8x1xf32>
    %113 = arith.divf %111, %112 : vector<8x1xf32>
    %114 = vector.broadcast %113 : vector<8x1xf32> to vector<8x32xf32>
    %115 = arith.subf %107, %114 : vector<8x32xf32>
    %116 = arith.mulf %115, %115 : vector<8x32xf32>
    %cst_76 = arith.constant dense<0.000000e+00> : vector<8xf32>
    %117 = vector.multi_reduction <add>, %116, %cst_76 [1] : vector<8x32xf32> to vector<8xf32>
    %118 = vector.shape_cast %117 : vector<8xf32> to vector<8x1xf32>
    %cst_77 = arith.constant 3.200000e+01 : f32
    %119 = vector.broadcast %cst_77 : f32 to vector<8x1xf32>
    %120 = arith.divf %118, %119 : vector<8x1xf32>
    %121 = vector.broadcast %113 : vector<8x1xf32> to vector<8x32xf32>
    %122 = arith.subf %107, %121 : vector<8x32xf32>
    %cst_78 = arith.constant 9.99999974E-6 : f32
    %123 = vector.broadcast %cst_78 : f32 to vector<8x1xf32>
    %124 = arith.addf %120, %123 : vector<8x1xf32>
    %125 = math.rsqrt %124 : vector<8x1xf32>
    %126 = vector.broadcast %125 : vector<8x1xf32> to vector<8x32xf32>
    %127 = arith.mulf %122, %126 : vector<8x32xf32>
    %128 = vector.broadcast %108 : vector<1x32xf32> to vector<8x32xf32>
    %129 = arith.mulf %127, %128 : vector<8x32xf32>
    %130 = vector.broadcast %109 : vector<1x32xf32> to vector<8x32xf32>
    %131 = arith.addf %129, %130 : vector<8x32xf32>
    %132 = vector.broadcast %6 : vector<8x1xf32> to vector<8x32xf32>
    %133 = arith.mulf %131, %132 : vector<8x32xf32>
    %134 = arith.truncf %133 : vector<8x32xf32> to vector<8x32xbf16>
    %c0_79 = arith.constant 0 : index
    %c0_80 = arith.constant 0 : index
    %135 = vector.load %arg14[%c0_79, %c0_80] : memref<96x64xbf16, #tpu.memory_space<vmem>>, vector<96x64xbf16>
    %c0_81 = arith.constant 0 : index
    %c0_82 = arith.constant 0 : index
    %136 = vector.load %arg15[%c0_81, %c0_82] : memref<1x64xf32, #tpu.memory_space<vmem>>, vector<1x64xf32>
    %cst_83 = arith.constant 0.000000e+00 : bf16
    %137 = vector.broadcast %cst_83 : bf16 to vector<1x32xbf16>
    %138 = tpu.concatenate %137, %134, %137 in 0 : vector<1x32xbf16>, vector<8x32xbf16>, vector<1x32xbf16> -> vector<10x32xbf16>
    %139 = vector.extract_strided_slice %138 {offsets = [0, 0], sizes = [8, 32], strides = [1, 1]} : vector<10x32xbf16> to vector<8x32xbf16>
    %140 = vector.extract_strided_slice %138 {offsets = [1, 0], sizes = [8, 32], strides = [1, 1]} : vector<10x32xbf16> to vector<8x32xbf16>
    %141 = vector.extract_strided_slice %138 {offsets = [2, 0], sizes = [8, 32], strides = [1, 1]} : vector<10x32xbf16> to vector<8x32xbf16>
    %142 = tpu.concatenate %139, %140, %141 in 1 : vector<8x32xbf16>, vector<8x32xbf16>, vector<8x32xbf16> -> vector<8x96xbf16>
    %cst_84 = arith.constant dense<0.000000e+00> : vector<8x64xf32>
    %143 = tpu.matmul %142, %135, %cst_84 {dimension_numbers = #tpu.dot_dimension_numbers<[1], [0], [0], [1], [0, 0, 1, 1], [], []>} : vector<8x96xbf16>, vector<96x64xbf16>, vector<8x64xf32> -> vector<8x64xf32>
    %144 = vector.broadcast %136 : vector<1x64xf32> to vector<8x64xf32>
    %145 = arith.addf %143, %144 : vector<8x64xf32>
    %cst_85 = arith.constant 0.000000e+00 : f32
    %146 = vector.broadcast %cst_85 : f32 to vector<8x64xf32>
    %147 = arith.maximumf %145, %146 : vector<8x64xf32>
    %148 = arith.truncf %147 : vector<8x64xf32> to vector<8x64xbf16>
    %c0_86 = arith.constant 0 : index
    %c0_87 = arith.constant 0 : index
    %149 = vector.load %arg16[%c0_86, %c0_87] : memref<64x32xbf16, #tpu.memory_space<vmem>>, vector<64x32xbf16>
    %c0_88 = arith.constant 0 : index
    %c0_89 = arith.constant 0 : index
    %150 = vector.load %arg17[%c0_88, %c0_89] : memref<1x32xf32, #tpu.memory_space<vmem>>, vector<1x32xf32>
    %cst_90 = arith.constant dense<0.000000e+00> : vector<8x32xf32>
    %151 = tpu.matmul %148, %149, %cst_90 {dimension_numbers = #tpu.dot_dimension_numbers<[1], [0], [0], [1], [0, 0, 1, 1], [], []>} : vector<8x64xbf16>, vector<64x32xbf16>, vector<8x32xf32> -> vector<8x32xf32>
    %152 = vector.broadcast %150 : vector<1x32xf32> to vector<8x32xf32>
    %153 = arith.addf %151, %152 : vector<8x32xf32>
    %154 = arith.addf %153, %133 : vector<8x32xf32>
    %c0_91 = arith.constant 0 : index
    %c0_92 = arith.constant 0 : index
    %155 = vector.load %arg18[%c0_91, %c0_92] : memref<1x32xf32, #tpu.memory_space<vmem>>, vector<1x32xf32>
    %c0_93 = arith.constant 0 : index
    %c0_94 = arith.constant 0 : index
    %156 = vector.load %arg19[%c0_93, %c0_94] : memref<1x32xf32, #tpu.memory_space<vmem>>, vector<1x32xf32>
    %cst_95 = arith.constant dense<0.000000e+00> : vector<8xf32>
    %157 = vector.multi_reduction <add>, %154, %cst_95 [1] : vector<8x32xf32> to vector<8xf32>
    %158 = vector.shape_cast %157 : vector<8xf32> to vector<8x1xf32>
    %cst_96 = arith.constant 3.200000e+01 : f32
    %159 = vector.broadcast %cst_96 : f32 to vector<8x1xf32>
    %160 = arith.divf %158, %159 : vector<8x1xf32>
    %161 = vector.broadcast %160 : vector<8x1xf32> to vector<8x32xf32>
    %162 = arith.subf %154, %161 : vector<8x32xf32>
    %163 = arith.mulf %162, %162 : vector<8x32xf32>
    %cst_97 = arith.constant dense<0.000000e+00> : vector<8xf32>
    %164 = vector.multi_reduction <add>, %163, %cst_97 [1] : vector<8x32xf32> to vector<8xf32>
    %165 = vector.shape_cast %164 : vector<8xf32> to vector<8x1xf32>
    %cst_98 = arith.constant 3.200000e+01 : f32
    %166 = vector.broadcast %cst_98 : f32 to vector<8x1xf32>
    %167 = arith.divf %165, %166 : vector<8x1xf32>
    %168 = vector.broadcast %160 : vector<8x1xf32> to vector<8x32xf32>
    %169 = arith.subf %154, %168 : vector<8x32xf32>
    %cst_99 = arith.constant 9.99999974E-6 : f32
    %170 = vector.broadcast %cst_99 : f32 to vector<8x1xf32>
    %171 = arith.addf %167, %170 : vector<8x1xf32>
    %172 = math.rsqrt %171 : vector<8x1xf32>
    %173 = vector.broadcast %172 : vector<8x1xf32> to vector<8x32xf32>
    %174 = arith.mulf %169, %173 : vector<8x32xf32>
    %175 = vector.broadcast %155 : vector<1x32xf32> to vector<8x32xf32>
    %176 = arith.mulf %174, %175 : vector<8x32xf32>
    %177 = vector.broadcast %156 : vector<1x32xf32> to vector<8x32xf32>
    %178 = arith.addf %176, %177 : vector<8x32xf32>
    %179 = vector.broadcast %6 : vector<8x1xf32> to vector<8x32xf32>
    %180 = arith.mulf %178, %179 : vector<8x32xf32>
    %c0_100 = arith.constant 0 : index
    %c0_101 = arith.constant 0 : index
    %c0_102 = arith.constant 0 : index
    %181 = vector.load %arg20[%c0_100, %c0_101, %c0_102] : memref<1x8x32xf32, #tpu.memory_space<vmem>>, vector<1x8x32xf32>
    %182 = vector.shape_cast %181 : vector<1x8x32xf32> to vector<8x32xf32>
    %183 = vector.shape_cast %180 : vector<8x32xf32> to vector<1x8x32xf32>
    tpu.vector_store %arg20[%c0_100, %c0_101, %c0_102], %183 {strides = array<i32>} : memref<1x8x32xf32, #tpu.memory_space<vmem>>, vector<1x8x32xf32>,
    return
  }
  func.func @transform_0(%arg0: i32) -> (i32, i32, i32) {
    %c0_i32 = arith.constant 0 : i32
    %c0_i32_0 = arith.constant 0 : i32
    %c0_i32_1 = arith.constant 0 : i32
    return %arg0, %c0_i32, %c0_i32_0 : i32, i32, i32
  }
  func.func @transform_1(%arg0: i32) -> (i32, i32, i32) {
    %c0_i32 = arith.constant 0 : i32
    %c0_i32_0 = arith.constant 0 : i32
    %c0_i32_1 = arith.constant 0 : i32
    return %arg0, %c0_i32, %c0_i32_0 : i32, i32, i32
  }
  func.func @transform_2(%arg0: i32) -> (i32, i32, i32) {
    %c0_i32 = arith.constant 0 : i32
    %c0_i32_0 = arith.constant 0 : i32
    %c0_i32_1 = arith.constant 0 : i32
    return %arg0, %c0_i32, %c0_i32_0 : i32, i32, i32
  }
  func.func @transform_3(%arg0: i32) -> (i32, i32, i32) {
    %c0_i32 = arith.constant 0 : i32
    %c0_i32_0 = arith.constant 0 : i32
    %c0_i32_1 = arith.constant 0 : i32
    %c0_i32_2 = arith.constant 0 : i32
    return %c0_i32, %c0_i32_0, %c0_i32_1 : i32, i32, i32
  }
  func.func @transform_4(%arg0: i32) -> (i32, i32, i32) {
    %c0_i32 = arith.constant 0 : i32
    %c0_i32_0 = arith.constant 0 : i32
    %c0_i32_1 = arith.constant 0 : i32
    %c0_i32_2 = arith.constant 0 : i32
    return %c0_i32, %c0_i32_0, %c0_i32_1 : i32, i32, i32
  }
  func.func @transform_5(%arg0: i32) -> (i32, i32, i32) {
    %c0_i32 = arith.constant 0 : i32
    %c0_i32_0 = arith.constant 0 : i32
    %c0_i32_1 = arith.constant 0 : i32
    %c0_i32_2 = arith.constant 0 : i32
    return %c0_i32, %c0_i32_0, %c0_i32_1 : i32, i32, i32
  }
  func.func @transform_6(%arg0: i32) -> (i32, i32, i32) {
    %c0_i32 = arith.constant 0 : i32
    %c0_i32_0 = arith.constant 0 : i32
    %c0_i32_1 = arith.constant 0 : i32
    %c0_i32_2 = arith.constant 0 : i32
    return %c0_i32, %c0_i32_0, %c0_i32_1 : i32, i32, i32
  }
  func.func @transform_7(%arg0: i32) -> (i32, i32, i32) {
    %c0_i32 = arith.constant 0 : i32
    %c0_i32_0 = arith.constant 0 : i32
    %c0_i32_1 = arith.constant 0 : i32
    %c0_i32_2 = arith.constant 0 : i32
    return %c0_i32, %c0_i32_0, %c0_i32_1 : i32, i32, i32
  }
  func.func @transform_8(%arg0: i32) -> (i32, i32, i32) {
    %c0_i32 = arith.constant 0 : i32
    %c0_i32_0 = arith.constant 0 : i32
    %c0_i32_1 = arith.constant 0 : i32
    %c0_i32_2 = arith.constant 0 : i32
    return %c0_i32, %c0_i32_0, %c0_i32_1 : i32, i32, i32
  }
  func.func @transform_9(%arg0: i32) -> (i32, i32, i32) {
    %c0_i32 = arith.constant 0 : i32
    %c0_i32_0 = arith.constant 0 : i32
    %c0_i32_1 = arith.constant 0 : i32
    %c0_i32_2 = arith.constant 0 : i32
    return %c0_i32, %c0_i32_0, %c0_i32_1 : i32, i32, i32
  }
  func.func @transform_10(%arg0: i32) -> (i32, i32) {
    %c0_i32 = arith.constant 0 : i32
    %c0_i32_0 = arith.constant 0 : i32
    %c0_i32_1 = arith.constant 0 : i32
    return %c0_i32, %c0_i32_0 : i32, i32
  }
  func.func @transform_11(%arg0: i32) -> (i32, i32) {
    %c0_i32 = arith.constant 0 : i32
    %c0_i32_0 = arith.constant 0 : i32
    %c0_i32_1 = arith.constant 0 : i32
    return %c0_i32, %c0_i32_0 : i32, i32
  }
  func.func @transform_12(%arg0: i32) -> (i32, i32) {
    %c0_i32 = arith.constant 0 : i32
    %c0_i32_0 = arith.constant 0 : i32
    %c0_i32_1 = arith.constant 0 : i32
    return %c0_i32, %c0_i32_0 : i32, i32
  }
  func.func @transform_13(%arg0: i32) -> (i32, i32) {
    %c0_i32 = arith.constant 0 : i32
    %c0_i32_0 = arith.constant 0 : i32
    %c0_i32_1 = arith.constant 0 : i32
    return %c0_i32, %c0_i32_0 : i32, i32
  }
  func.func @transform_14(%arg0: i32) -> (i32, i32) {
    %c0_i32 = arith.constant 0 : i32
    %c0_i32_0 = arith.constant 0 : i32
    %c0_i32_1 = arith.constant 0 : i32
    return %c0_i32, %c0_i32_0 : i32, i32
  }
  func.func @transform_15(%arg0: i32) -> (i32, i32) {
    %c0_i32 = arith.constant 0 : i32
    %c0_i32_0 = arith.constant 0 : i32
    %c0_i32_1 = arith.constant 0 : i32
    return %c0_i32, %c0_i32_0 : i32, i32
  }
  func.func @transform_16(%arg0: i32) -> (i32, i32) {
    %c0_i32 = arith.constant 0 : i32
    %c0_i32_0 = arith.constant 0 : i32
    %c0_i32_1 = arith.constant 0 : i32
    return %c0_i32, %c0_i32_0 : i32, i32
  }
  func.func @transform_17(%arg0: i32) -> (i32, i32) {
    %c0_i32 = arith.constant 0 : i32
    %c0_i32_0 = arith.constant 0 : i32
    %c0_i32_1 = arith.constant 0 : i32
    return %c0_i32, %c0_i32_0 : i32, i32
  }
  func.func @transform_18(%arg0: i32) -> (i32, i32) {
    %c0_i32 = arith.constant 0 : i32
    %c0_i32_0 = arith.constant 0 : i32
    %c0_i32_1 = arith.constant 0 : i32
    return %c0_i32, %c0_i32_0 : i32, i32
  }
  func.func @transform_19(%arg0: i32) -> (i32, i32, i32) {
    %c0_i32 = arith.constant 0 : i32
    %c0_i32_0 = arith.constant 0 : i32
    %c0_i32_1 = arith.constant 0 : i32
    return %arg0, %c0_i32, %c0_i32_0 : i32, i32, i32
  }
}

module attributes {stable_mosaic.version = 11 : i64} {
  func.func @_fft_layer_kernel(%arg0: i32, %arg1: memref<1x8x32xf32, #tpu.memory_space<vmem>>, %arg2: memref<1x1x8xf32, #tpu.memory_space<vmem>>, %arg3: memref<1x8x1xf32, #tpu.memory_space<vmem>>, %arg4: memref<2x32x16xbf16, #tpu.memory_space<vmem>>, %arg5: memref<2x32x16xbf16, #tpu.memory_space<vmem>>, %arg6: memref<2x32x16xbf16, #tpu.memory_space<vmem>>, %arg7: memref<2x1x16xf32, #tpu.memory_space<vmem>>, %arg8: memref<2x1x16xf32, #tpu.memory_space<vmem>>, %arg9: memref<2x1x16xf32, #tpu.memory_space<vmem>>, %arg10: memref<2x16x32xbf16, #tpu.memory_space<vmem>>, %arg11: memref<1x32xf32, #tpu.memory_space<vmem>>, %arg12: memref<1x32xf32, #tpu.memory_space<vmem>>, %arg13: memref<1x32xf32, #tpu.memory_space<vmem>>, %arg14: memref<96x64xbf16, #tpu.memory_space<vmem>>, %arg15: memref<1x64xf32, #tpu.memory_space<vmem>>, %arg16: memref<64x32xbf16, #tpu.memory_space<vmem>>, %arg17: memref<1x32xf32, #tpu.memory_space<vmem>>, %arg18: memref<1x32xf32, #tpu.memory_space<vmem>>, %arg19: memref<1x32xf32, #tpu.memory_space<vmem>>, %arg20: memref<1x8x32xf32, #tpu.memory_space<vmem>>) attributes {dimension_semantics = [#tpu.dimension_semantics<parallel>], iteration_bounds = array<i64: 2>, scalar_prefetch = 0 : i64, scratch_operands = 0 : i64, tpu.core_type = #tpu.core_type<tc>, window_params = [{transform_indices = @transform_0, window_bounds = array<i64: 1, 8, 32>}, {transform_indices = @transform_1, window_bounds = array<i64: 1, 1, 8>}, {transform_indices = @transform_2, window_bounds = array<i64: 1, 8, 1>}, {pipeline_mode = #tpu.pipeline_mode<synchronous>, transform_indices = @transform_3, window_bounds = array<i64: 2, 32, 16>}, {pipeline_mode = #tpu.pipeline_mode<synchronous>, transform_indices = @transform_4, window_bounds = array<i64: 2, 32, 16>}, {pipeline_mode = #tpu.pipeline_mode<synchronous>, transform_indices = @transform_5, window_bounds = array<i64: 2, 32, 16>}, {pipeline_mode = #tpu.pipeline_mode<synchronous>, transform_indices = @transform_6, window_bounds = array<i64: 2, 1, 16>}, {pipeline_mode = #tpu.pipeline_mode<synchronous>, transform_indices = @transform_7, window_bounds = array<i64: 2, 1, 16>}, {pipeline_mode = #tpu.pipeline_mode<synchronous>, transform_indices = @transform_8, window_bounds = array<i64: 2, 1, 16>}, {pipeline_mode = #tpu.pipeline_mode<synchronous>, transform_indices = @transform_9, window_bounds = array<i64: 2, 16, 32>}, {pipeline_mode = #tpu.pipeline_mode<synchronous>, transform_indices = @transform_10, window_bounds = array<i64: 1, 32>}, {pipeline_mode = #tpu.pipeline_mode<synchronous>, transform_indices = @transform_11, window_bounds = array<i64: 1, 32>}, {pipeline_mode = #tpu.pipeline_mode<synchronous>, transform_indices = @transform_12, window_bounds = array<i64: 1, 32>}, {pipeline_mode = #tpu.pipeline_mode<synchronous>, transform_indices = @transform_13, window_bounds = array<i64: 96, 64>}, {pipeline_mode = #tpu.pipeline_mode<synchronous>, transform_indices = @transform_14, window_bounds = array<i64: 1, 64>}, {pipeline_mode = #tpu.pipeline_mode<synchronous>, transform_indices = @transform_15, window_bounds = array<i64: 64, 32>}, {pipeline_mode = #tpu.pipeline_mode<synchronous>, transform_indices = @transform_16, window_bounds = array<i64: 1, 32>}, {pipeline_mode = #tpu.pipeline_mode<synchronous>, transform_indices = @transform_17, window_bounds = array<i64: 1, 32>}, {pipeline_mode = #tpu.pipeline_mode<synchronous>, transform_indices = @transform_18, window_bounds = array<i64: 1, 32>}, {transform_indices = @transform_19, window_bounds = array<i64: 1, 8, 32>}]} {
    %c0 = arith.constant 0 : index
    %c0_0 = arith.constant 0 : index
    %c0_1 = arith.constant 0 : index
    %0 = vector.load %arg1[%c0, %c0_0, %c0_1] : memref<1x8x32xf32, #tpu.memory_space<vmem>>, vector<1x8x32xf32>
    %1 = vector.shape_cast %0 : vector<1x8x32xf32> to vector<8x32xf32>
    %2 = arith.truncf %1 : vector<8x32xf32> to vector<8x32xbf16>
    %c0_2 = arith.constant 0 : index
    %c0_3 = arith.constant 0 : index
    %c0_4 = arith.constant 0 : index
    %3 = vector.load %arg2[%c0_2, %c0_3, %c0_4] : memref<1x1x8xf32, #tpu.memory_space<vmem>>, vector<1x1x8xf32>
    %4 = vector.shape_cast %3 : vector<1x1x8xf32> to vector<1x8xf32>
    %c0_5 = arith.constant 0 : index
    %c0_6 = arith.constant 0 : index
    %c0_7 = arith.constant 0 : index
    %5 = vector.load %arg3[%c0_5, %c0_6, %c0_7] : memref<1x8x1xf32, #tpu.memory_space<vmem>>, vector<1x8x1xf32>
    %6 = vector.shape_cast %5 : vector<1x8x1xf32> to vector<8x1xf32>
    %c0_8 = arith.constant 0 : index
    %c0_9 = arith.constant 0 : index
    %c0_10 = arith.constant 0 : index
    %7 = vector.load %arg4[%c0_8, %c0_9, %c0_10] : memref<2x32x16xbf16, #tpu.memory_space<vmem>>, vector<1x32x16xbf16>
    %8 = vector.shape_cast %7 : vector<1x32x16xbf16> to vector<32x16xbf16>
    %cst = arith.constant dense<0.000000e+00> : vector<8x16xf32>
    %9 = tpu.matmul %2, %8, %cst {dimension_numbers = #tpu.dot_dimension_numbers<[1], [0], [0], [1], [0, 0, 1, 1], [], []>} : vector<8x32xbf16>, vector<32x16xbf16>, vector<8x16xf32> -> vector<8x16xf32>
    %c0_11 = arith.constant 0 : index
    %c0_12 = arith.constant 0 : index
    %c0_13 = arith.constant 0 : index
    %10 = vector.load %arg7[%c0_11, %c0_12, %c0_13] : memref<2x1x16xf32, #tpu.memory_space<vmem>>, vector<1x1x16xf32>
    %11 = vector.shape_cast %10 : vector<1x1x16xf32> to vector<1x16xf32>
    %12 = vector.broadcast %11 : vector<1x16xf32> to vector<8x16xf32>
    %13 = arith.addf %9, %12 : vector<8x16xf32>
    %14 = arith.truncf %13 : vector<8x16xf32> to vector<8x16xbf16>
    %c0_14 = arith.constant 0 : index
    %c0_15 = arith.constant 0 : index
    %c0_16 = arith.constant 0 : index
    %15 = vector.load %arg5[%c0_14, %c0_15, %c0_16] : memref<2x32x16xbf16, #tpu.memory_space<vmem>>, vector<1x32x16xbf16>
    %16 = vector.shape_cast %15 : vector<1x32x16xbf16> to vector<32x16xbf16>
    %cst_17 = arith.constant dense<0.000000e+00> : vector<8x16xf32>
    %17 = tpu.matmul %2, %16, %cst_17 {dimension_numbers = #tpu.dot_dimension_numbers<[1], [0], [0], [1], [0, 0, 1, 1], [], []>} : vector<8x32xbf16>, vector<32x16xbf16>, vector<8x16xf32> -> vector<8x16xf32>
    %c0_18 = arith.constant 0 : index
    %c0_19 = arith.constant 0 : index
    %c0_20 = arith.constant 0 : index
    %18 = vector.load %arg8[%c0_18, %c0_19, %c0_20] : memref<2x1x16xf32, #tpu.memory_space<vmem>>, vector<1x1x16xf32>
    %19 = vector.shape_cast %18 : vector<1x1x16xf32> to vector<1x16xf32>
    %20 = vector.broadcast %19 : vector<1x16xf32> to vector<8x16xf32>
    %21 = arith.addf %17, %20 : vector<8x16xf32>
    %22 = arith.truncf %21 : vector<8x16xf32> to vector<8x16xbf16>
    %c0_21 = arith.constant 0 : index
    %c0_22 = arith.constant 0 : index
    %c0_23 = arith.constant 0 : index
    %23 = vector.load %arg6[%c0_21, %c0_22, %c0_23] : memref<2x32x16xbf16, #tpu.memory_space<vmem>>, vector<1x32x16xbf16>
    %24 = vector.shape_cast %23 : vector<1x32x16xbf16> to vector<32x16xbf16>
    %cst_24 = arith.constant dense<0.000000e+00> : vector<8x16xf32>
    %25 = tpu.matmul %2, %24, %cst_24 {dimension_numbers = #tpu.dot_dimension_numbers<[1], [0], [0], [1], [0, 0, 1, 1], [], []>} : vector<8x32xbf16>, vector<32x16xbf16>, vector<8x16xf32> -> vector<8x16xf32>
    %c0_25 = arith.constant 0 : index
    %c0_26 = arith.constant 0 : index
    %c0_27 = arith.constant 0 : index
    %26 = vector.load %arg9[%c0_25, %c0_26, %c0_27] : memref<2x1x16xf32, #tpu.memory_space<vmem>>, vector<1x1x16xf32>
    %27 = vector.shape_cast %26 : vector<1x1x16xf32> to vector<1x16xf32>
    %28 = vector.broadcast %27 : vector<1x16xf32> to vector<8x16xf32>
    %29 = arith.addf %25, %28 : vector<8x16xf32>
    %30 = arith.truncf %29 : vector<8x16xf32> to vector<8x16xbf16>
    %31 = tpu.transpose %22, [1, 0] : vector<8x16xbf16> -> vector<16x8xbf16>
    %cst_28 = arith.constant dense<0.000000e+00> : vector<8x8xf32>
    %32 = tpu.matmul %14, %31, %cst_28 {dimension_numbers = #tpu.dot_dimension_numbers<[1], [0], [0], [1], [0, 0, 1, 1], [], []>} : vector<8x16xbf16>, vector<16x8xbf16>, vector<8x8xf32> -> vector<8x8xf32>
    %cst_29 = arith.constant 5.000000e-01 : f32
    %33 = vector.broadcast %cst_29 : f32 to vector<1x8xf32>
    %34 = arith.cmpf ogt, %4, %33 : vector<1x8xf32>
    %cst_30 = arith.constant -1.000000e+30 : f32
    %35 = vector.shape_cast %34 : vector<1x8xi1> to vector<1x8xi1>
    %36 = vector.broadcast %35 : vector<1x8xi1> to vector<8x8xi1>
    %37 = vector.broadcast %cst_30 : f32 to vector<8x8xf32>
    %38 = arith.select %36, %37, %32 : vector<8x8xi1>, vector<8x8xf32>
    %cst_31 = arith.constant dense<0xFF800000> : vector<8xf32>
    %39 = vector.multi_reduction <maximumf>, %38, %cst_31 [1] : vector<8x8xf32> to vector<8xf32>
    %40 = vector.shape_cast %39 : vector<8xf32> to vector<8x1xf32>
    %41 = vector.broadcast %40 : vector<8x1xf32> to vector<8x8xf32>
    %42 = arith.subf %38, %41 : vector<8x8xf32>
    %43 = math.exp %42 : vector<8x8xf32>
    %cst_32 = arith.constant dense<0.000000e+00> : vector<8xf32>
    %44 = vector.multi_reduction <add>, %43, %cst_32 [1] : vector<8x8xf32> to vector<8xf32>
    %45 = vector.shape_cast %44 : vector<8xf32> to vector<8x1xf32>
    %46 = tpu.reciprocal %45 {approx = true} : vector<8x1xf32> -> vector<8x1xf32>
    %47 = vector.broadcast %46 : vector<8x1xf32> to vector<8x8xf32>
    %48 = arith.mulf %43, %47 : vector<8x8xf32>
    %49 = arith.truncf %48 : vector<8x8xf32> to vector<8x8xbf16>
    %cst_33 = arith.constant dense<0.000000e+00> : vector<8x16xf32>
    %50 = tpu.matmul %49, %30, %cst_33 {dimension_numbers = #tpu.dot_dimension_numbers<[1], [0], [0], [1], [0, 0, 1, 1], [], []>} : vector<8x8xbf16>, vector<8x16xbf16>, vector<8x16xf32> -> vector<8x16xf32>
    %51 = arith.truncf %50 : vector<8x16xf32> to vector<8x16xbf16>
    %c0_34 = arith.constant 0 : index
    %c0_35 = arith.constant 0 : index
    %c0_36 = arith.constant 0 : index
    %52 = vector.load %arg10[%c0_34, %c0_35, %c0_36] : memref<2x16x32xbf16, #tpu.memory_space<vmem>>, vector<1x16x32xbf16>
    %53 = vector.shape_cast %52 : vector<1x16x32xbf16> to vector<16x32xbf16>
    %cst_37 = arith.constant dense<0.000000e+00> : vector<8x32xf32>
    %54 = tpu.matmul %51, %53, %cst_37 {dimension_numbers = #tpu.dot_dimension_numbers<[1], [0], [0], [1], [0, 0, 1, 1], [], []>} : vector<8x16xbf16>, vector<16x32xbf16>, vector<8x32xf32> -> vector<8x32xf32>
    %c1 = arith.constant 1 : index
    %c0_38 = arith.constant 0 : index
    %c0_39 = arith.constant 0 : index
    %55 = vector.load %arg4[%c1, %c0_38, %c0_39] : memref<2x32x16xbf16, #tpu.memory_space<vmem>>, vector<1x32x16xbf16>
    %56 = vector.shape_cast %55 : vector<1x32x16xbf16> to vector<32x16xbf16>
    %cst_40 = arith.constant dense<0.000000e+00> : vector<8x16xf32>
    %57 = tpu.matmul %2, %56, %cst_40 {dimension_numbers = #tpu.dot_dimension_numbers<[1], [0], [0], [1], [0, 0, 1, 1], [], []>} : vector<8x32xbf16>, vector<32x16xbf16>, vector<8x16xf32> -> vector<8x16xf32>
    %c1_41 = arith.constant 1 : index
    %c0_42 = arith.constant 0 : index
    %c0_43 = arith.constant 0 : index
    %58 = vector.load %arg7[%c1_41, %c0_42, %c0_43] : memref<2x1x16xf32, #tpu.memory_space<vmem>>, vector<1x1x16xf32>
    %59 = vector.shape_cast %58 : vector<1x1x16xf32> to vector<1x16xf32>
    %60 = vector.broadcast %59 : vector<1x16xf32> to vector<8x16xf32>
    %61 = arith.addf %57, %60 : vector<8x16xf32>
    %62 = arith.truncf %61 : vector<8x16xf32> to vector<8x16xbf16>
    %c1_44 = arith.constant 1 : index
    %c0_45 = arith.constant 0 : index
    %c0_46 = arith.constant 0 : index
    %63 = vector.load %arg5[%c1_44, %c0_45, %c0_46] : memref<2x32x16xbf16, #tpu.memory_space<vmem>>, vector<1x32x16xbf16>
    %64 = vector.shape_cast %63 : vector<1x32x16xbf16> to vector<32x16xbf16>
    %cst_47 = arith.constant dense<0.000000e+00> : vector<8x16xf32>
    %65 = tpu.matmul %2, %64, %cst_47 {dimension_numbers = #tpu.dot_dimension_numbers<[1], [0], [0], [1], [0, 0, 1, 1], [], []>} : vector<8x32xbf16>, vector<32x16xbf16>, vector<8x16xf32> -> vector<8x16xf32>
    %c1_48 = arith.constant 1 : index
    %c0_49 = arith.constant 0 : index
    %c0_50 = arith.constant 0 : index
    %66 = vector.load %arg8[%c1_48, %c0_49, %c0_50] : memref<2x1x16xf32, #tpu.memory_space<vmem>>, vector<1x1x16xf32>
    %67 = vector.shape_cast %66 : vector<1x1x16xf32> to vector<1x16xf32>
    %68 = vector.broadcast %67 : vector<1x16xf32> to vector<8x16xf32>
    %69 = arith.addf %65, %68 : vector<8x16xf32>
    %70 = arith.truncf %69 : vector<8x16xf32> to vector<8x16xbf16>
    %c1_51 = arith.constant 1 : index
    %c0_52 = arith.constant 0 : index
    %c0_53 = arith.constant 0 : index
    %71 = vector.load %arg6[%c1_51, %c0_52, %c0_53] : memref<2x32x16xbf16, #tpu.memory_space<vmem>>, vector<1x32x16xbf16>
    %72 = vector.shape_cast %71 : vector<1x32x16xbf16> to vector<32x16xbf16>
    %cst_54 = arith.constant dense<0.000000e+00> : vector<8x16xf32>
    %73 = tpu.matmul %2, %72, %cst_54 {dimension_numbers = #tpu.dot_dimension_numbers<[1], [0], [0], [1], [0, 0, 1, 1], [], []>} : vector<8x32xbf16>, vector<32x16xbf16>, vector<8x16xf32> -> vector<8x16xf32>
    %c1_55 = arith.constant 1 : index
    %c0_56 = arith.constant 0 : index
    %c0_57 = arith.constant 0 : index
    %74 = vector.load %arg9[%c1_55, %c0_56, %c0_57] : memref<2x1x16xf32, #tpu.memory_space<vmem>>, vector<1x1x16xf32>
    %75 = vector.shape_cast %74 : vector<1x1x16xf32> to vector<1x16xf32>
    %76 = vector.broadcast %75 : vector<1x16xf32> to vector<8x16xf32>
    %77 = arith.addf %73, %76 : vector<8x16xf32>
    %78 = arith.truncf %77 : vector<8x16xf32> to vector<8x16xbf16>
    %79 = tpu.transpose %70, [1, 0] : vector<8x16xbf16> -> vector<16x8xbf16>
    %cst_58 = arith.constant dense<0.000000e+00> : vector<8x8xf32>
    %80 = tpu.matmul %62, %79, %cst_58 {dimension_numbers = #tpu.dot_dimension_numbers<[1], [0], [0], [1], [0, 0, 1, 1], [], []>} : vector<8x16xbf16>, vector<16x8xbf16>, vector<8x8xf32> -> vector<8x8xf32>
    %cst_59 = arith.constant 5.000000e-01 : f32
    %81 = vector.broadcast %cst_59 : f32 to vector<1x8xf32>
    %82 = arith.cmpf ogt, %4, %81 : vector<1x8xf32>
    %cst_60 = arith.constant -1.000000e+30 : f32
    %83 = vector.shape_cast %82 : vector<1x8xi1> to vector<1x8xi1>
    %84 = vector.broadcast %83 : vector<1x8xi1> to vector<8x8xi1>
    %85 = vector.broadcast %cst_60 : f32 to vector<8x8xf32>
    %86 = arith.select %84, %85, %80 : vector<8x8xi1>, vector<8x8xf32>
    %cst_61 = arith.constant dense<0xFF800000> : vector<8xf32>
    %87 = vector.multi_reduction <maximumf>, %86, %cst_61 [1] : vector<8x8xf32> to vector<8xf32>
    %88 = vector.shape_cast %87 : vector<8xf32> to vector<8x1xf32>
    %89 = vector.broadcast %88 : vector<8x1xf32> to vector<8x8xf32>
    %90 = arith.subf %86, %89 : vector<8x8xf32>
    %91 = math.exp %90 : vector<8x8xf32>
    %cst_62 = arith.constant dense<0.000000e+00> : vector<8xf32>
    %92 = vector.multi_reduction <add>, %91, %cst_62 [1] : vector<8x8xf32> to vector<8xf32>
    %93 = vector.shape_cast %92 : vector<8xf32> to vector<8x1xf32>
    %94 = tpu.reciprocal %93 {approx = true} : vector<8x1xf32> -> vector<8x1xf32>
    %95 = vector.broadcast %94 : vector<8x1xf32> to vector<8x8xf32>
    %96 = arith.mulf %91, %95 : vector<8x8xf32>
    %97 = arith.truncf %96 : vector<8x8xf32> to vector<8x8xbf16>
    %cst_63 = arith.constant dense<0.000000e+00> : vector<8x16xf32>
    %98 = tpu.matmul %97, %78, %cst_63 {dimension_numbers = #tpu.dot_dimension_numbers<[1], [0], [0], [1], [0, 0, 1, 1], [], []>} : vector<8x8xbf16>, vector<8x16xbf16>, vector<8x16xf32> -> vector<8x16xf32>
    %99 = arith.truncf %98 : vector<8x16xf32> to vector<8x16xbf16>
    %c1_64 = arith.constant 1 : index
    %c0_65 = arith.constant 0 : index
    %c0_66 = arith.constant 0 : index
    %100 = vector.load %arg10[%c1_64, %c0_65, %c0_66] : memref<2x16x32xbf16, #tpu.memory_space<vmem>>, vector<1x16x32xbf16>
    %101 = vector.shape_cast %100 : vector<1x16x32xbf16> to vector<16x32xbf16>
    %cst_67 = arith.constant dense<0.000000e+00> : vector<8x32xf32>
    %102 = tpu.matmul %99, %101, %cst_67 {dimension_numbers = #tpu.dot_dimension_numbers<[1], [0], [0], [1], [0, 0, 1, 1], [], []>} : vector<8x16xbf16>, vector<16x32xbf16>, vector<8x32xf32> -> vector<8x32xf32>
    %103 = arith.addf %54, %102 : vector<8x32xf32>
    %c0_68 = arith.constant 0 : index
    %c0_69 = arith.constant 0 : index
    %104 = vector.load %arg11[%c0_68, %c0_69] : memref<1x32xf32, #tpu.memory_space<vmem>>, vector<1x32xf32>
    %105 = vector.broadcast %104 : vector<1x32xf32> to vector<8x32xf32>
    %106 = arith.addf %103, %105 : vector<8x32xf32>
    %107 = arith.addf %106, %1 : vector<8x32xf32>
    %c0_70 = arith.constant 0 : index
    %c0_71 = arith.constant 0 : index
    %108 = vector.load %arg12[%c0_70, %c0_71] : memref<1x32xf32, #tpu.memory_space<vmem>>, vector<1x32xf32>
    %c0_72 = arith.constant 0 : index
    %c0_73 = arith.constant 0 : index
    %109 = vector.load %arg13[%c0_72, %c0_73] : memref<1x32xf32, #tpu.memory_space<vmem>>, vector<1x32xf32>
    %cst_74 = arith.constant dense<0.000000e+00> : vector<8xf32>
    %110 = vector.multi_reduction <add>, %107, %cst_74 [1] : vector<8x32xf32> to vector<8xf32>
    %111 = vector.shape_cast %110 : vector<8xf32> to vector<8x1xf32>
    %cst_75 = arith.constant 3.200000e+01 : f32
    %112 = vector.broadcast %cst_75 : f32 to vector<8x1xf32>
    %113 = arith.divf %111, %112 : vector<8x1xf32>
    %114 = vector.broadcast %113 : vector<8x1xf32> to vector<8x32xf32>
    %115 = arith.subf %107, %114 : vector<8x32xf32>
    %116 = arith.mulf %115, %115 : vector<8x32xf32>
    %cst_76 = arith.constant dense<0.000000e+00> : vector<8xf32>
    %117 = vector.multi_reduction <add>, %116, %cst_76 [1] : vector<8x32xf32> to vector<8xf32>
    %118 = vector.shape_cast %117 : vector<8xf32> to vector<8x1xf32>
    %cst_77 = arith.constant 3.200000e+01 : f32
    %119 = vector.broadcast %cst_77 : f32 to vector<8x1xf32>
    %120 = arith.divf %118, %119 : vector<8x1xf32>
    %121 = vector.broadcast %113 : vector<8x1xf32> to vector<8x32xf32>
    %122 = arith.subf %107, %121 : vector<8x32xf32>
    %cst_78 = arith.constant 9.99999974E-6 : f32
    %123 = vector.broadcast %cst_78 : f32 to vector<8x1xf32>
    %124 = arith.addf %120, %123 : vector<8x1xf32>
    %125 = math.rsqrt %124 : vector<8x1xf32>
    %126 = vector.broadcast %125 : vector<8x1xf32> to vector<8x32xf32>
    %127 = arith.mulf %122, %126 : vector<8x32xf32>
    %128 = vector.broadcast %108 : vector<1x32xf32> to vector<8x32xf32>
    %129 = arith.mulf %127, %128 : vector<8x32xf32>
    %130 = vector.broadcast %109 : vector<1x32xf32> to vector<8x32xf32>
    %131 = arith.addf %129, %130 : vector<8x32xf32>
    %132 = vector.broadcast %6 : vector<8x1xf32> to vector<8x32xf32>
    %133 = arith.mulf %131, %132 : vector<8x32xf32>
    %134 = arith.truncf %133 : vector<8x32xf32> to vector<8x32xbf16>
    %c0_79 = arith.constant 0 : index
    %c0_80 = arith.constant 0 : index
    %135 = vector.load %arg14[%c0_79, %c0_80] : memref<96x64xbf16, #tpu.memory_space<vmem>>, vector<96x64xbf16>
    %c0_81 = arith.constant 0 : index
    %c0_82 = arith.constant 0 : index
    %136 = vector.load %arg15[%c0_81, %c0_82] : memref<1x64xf32, #tpu.memory_space<vmem>>, vector<1x64xf32>
    %cst_83 = arith.constant 0.000000e+00 : bf16
    %137 = vector.broadcast %cst_83 : bf16 to vector<1x32xbf16>
    %138 = tpu.concatenate %137, %134, %137 in 0 : vector<1x32xbf16>, vector<8x32xbf16>, vector<1x32xbf16> -> vector<10x32xbf16>
    %139 = vector.extract_strided_slice %138 {offsets = [0, 0], sizes = [8, 32], strides = [1, 1]} : vector<10x32xbf16> to vector<8x32xbf16>
    %140 = vector.extract_strided_slice %138 {offsets = [1, 0], sizes = [8, 32], strides = [1, 1]} : vector<10x32xbf16> to vector<8x32xbf16>
    %141 = vector.extract_strided_slice %138 {offsets = [2, 0], sizes = [8, 32], strides = [1, 1]} : vector<10x32xbf16> to vector<8x32xbf16>
    %142 = tpu.concatenate %139, %140, %141 in 1 : vector<8x32xbf16>, vector<8x32xbf16>, vector<8x32xbf16> -> vector<8x96xbf16>
    %cst_84 = arith.constant dense<0.000000e+00> : vector<8x64xf32>
    %143 = tpu.matmul %142, %135, %cst_84 {dimension_numbers = #tpu.dot_dimension_numbers<[1], [0], [0], [1], [0, 0, 1, 1], [], []>} : vector<8x96xbf16>, vector<96x64xbf16>, vector<8x64xf32> -> vector<8x64xf32>
    %144 = vector.broadcast %136 : vector<1x64xf32> to vector<8x64xf32>
    %145 = arith.addf %143, %144 : vector<8x64xf32>
    %cst_85 = arith.constant 0.000000e+00 : f32
    %146 = vector.broadcast %cst_85 : f32 to vector<8x64xf32>
    %147 = arith.maximumf %145, %146 : vector<8x64xf32>
    %148 = arith.truncf %147 : vector<8x64xf32> to vector<8x64xbf16>
    %c0_86 = arith.constant 0 : index
    %c0_87 = arith.constant 0 : index
    %149 = vector.load %arg16[%c0_86, %c0_87] : memref<64x32xbf16, #tpu.memory_space<vmem>>, vector<64x32xbf16>
    %c0_88 = arith.constant 0 : index
    %c0_89 = arith.constant 0 : index
    %150 = vector.load %arg17[%c0_88, %c0_89] : memref<1x32xf32, #tpu.memory_space<vmem>>, vector<1x32xf32>
    %cst_90 = arith.constant dense<0.000000e+00> : vector<8x32xf32>
    %151 = tpu.matmul %148, %149, %cst_90 {dimension_numbers = #tpu.dot_dimension_numbers<[1], [0], [0], [1], [0, 0, 1, 1], [], []>} : vector<8x64xbf16>, vector<64x32xbf16>, vector<8x32xf32> -> vector<8x32xf32>
    %152 = vector.broadcast %150 : vector<1x32xf32> to vector<8x32xf32>
    %153 = arith.addf %151, %152 : vector<8x32xf32>
    %154 = arith.addf %153, %133 : vector<8x32xf32>
    %c0_91 = arith.constant 0 : index
    %c0_92 = arith.constant 0 : index
    %155 = vector.load %arg18[%c0_91, %c0_92] : memref<1x32xf32, #tpu.memory_space<vmem>>, vector<1x32xf32>
    %c0_93 = arith.constant 0 : index
    %c0_94 = arith.constant 0 : index
    %156 = vector.load %arg19[%c0_93, %c0_94] : memref<1x32xf32, #tpu.memory_space<vmem>>, vector<1x32xf32>
    %cst_95 = arith.constant dense<0.000000e+00> : vector<8xf32>
    %157 = vector.multi_reduction <add>, %154, %cst_95 [1] : vector<8x32xf32> to vector<8xf32>
    %158 = vector.shape_cast %157 : vector<8xf32> to vector<8x1xf32>
    %cst_96 = arith.constant 3.200000e+01 : f32
    %159 = vector.broadcast %cst_96 : f32 to vector<8x1xf32>
    %160 = arith.divf %158, %159 : vector<8x1xf32>
    %161 = vector.broadcast %160 : vector<8x1xf32> to vector<8x32xf32>
    %162 = arith.subf %154, %161 : vector<8x32xf32>
    %163 = arith.mulf %162, %162 : vector<8x32xf32>
    %cst_97 = arith.constant dense<0.000000e+00> : vector<8xf32>
    %164 = vector.multi_reduction <add>, %163, %cst_97 [1] : vector<8x32xf32> to vector<8xf32>
    %165 = vector.shape_cast %164 : vector<8xf32> to vector<8x1xf32>
    %cst_98 = arith.constant 3.200000e+01 : f32
    %166 = vector.broadcast %cst_98 : f32 to vector<8x1xf32>
    %167 = arith.divf %165, %166 : vector<8x1xf32>
    %168 = vector.broadcast %160 : vector<8x1xf32> to vector<8x32xf32>
    %169 = arith.subf %154, %168 : vector<8x32xf32>
    %cst_99 = arith.constant 9.99999974E-6 : f32
    %170 = vector.broadcast %cst_99 : f32 to vector<8x1xf32>
    %171 = arith.addf %167, %170 : vector<8x1xf32>
    %172 = math.rsqrt %171 : vector<8x1xf32>
    %173 = vector.broadcast %172 : vector<8x1xf32> to vector<8x32xf32>
    %174 = arith.mulf %169, %173 : vector<8x32xf32>
    %175 = vector.broadcast %155 : vector<1x32xf32> to vector<8x32xf32>
    %176 = arith.mulf %174, %175 : vector<8x32xf32>
    %177 = vector.broadcast %156 : vector<1x32xf32> to vector<8x32xf32>
    %178 = arith.addf %176, %177 : vector<8x32xf32>
    %179 = vector.broadcast %6 : vector<8x1xf32> to vector<8x32xf32>
    %180 = arith.mulf %178, %179 : vector<8x32xf32>
    %c0_100 = arith.constant 0 : index
    %c0_101 = arith.constant 0 : index
    %c0_102 = arith.constant 0 : index
    %181 = vector.load %arg20[%c0_100, %c0_101, %c0_102] : memref<1x8x32xf32, #tpu.memory_space<vmem>>, vector<1x8x32xf32>
    %182 = vector.shape_cast %181 : vector<1x8x32xf32> to vector<8x32xf32>
    %183 = vector.shape_cast %180 : vector<8x32xf32> to vector<1x8x32xf32>
    tpu.vector_store %arg20[%c0_100, %c0_101, %c0_102], %183 {strides = array<i32>} : memref<1x8x32xf32, #tpu.memory_space<vmem>>, vector<1x8x32xf32>,
    return
  }
  func.func @transform_0(%arg0: i32) -> (i32, i32, i32) {
    %c0_i32 = arith.constant 0 : i32
    %c0_i32_0 = arith.constant 0 : i32
    %c0_i32_1 = arith.constant 0 : i32
    return %arg0, %c0_i32, %c0_i32_0 : i32, i32, i32
  }
  func.func @transform_1(%arg0: i32) -> (i32, i32, i32) {
    %c0_i32 = arith.constant 0 : i32
    %c0_i32_0 = arith.constant 0 : i32
    %c0_i32_1 = arith.constant 0 : i32
    return %arg0, %c0_i32, %c0_i32_0 : i32, i32, i32
  }
  func.func @transform_2(%arg0: i32) -> (i32, i32, i32) {
    %c0_i32 = arith.constant 0 : i32
    %c0_i32_0 = arith.constant 0 : i32
    %c0_i32_1 = arith.constant 0 : i32
    return %arg0, %c0_i32, %c0_i32_0 : i32, i32, i32
  }
  func.func @transform_3(%arg0: i32) -> (i32, i32, i32) {
    %c0_i32 = arith.constant 0 : i32
    %c0_i32_0 = arith.constant 0 : i32
    %c0_i32_1 = arith.constant 0 : i32
    %c0_i32_2 = arith.constant 0 : i32
    return %c0_i32, %c0_i32_0, %c0_i32_1 : i32, i32, i32
  }
  func.func @transform_4(%arg0: i32) -> (i32, i32, i32) {
    %c0_i32 = arith.constant 0 : i32
    %c0_i32_0 = arith.constant 0 : i32
    %c0_i32_1 = arith.constant 0 : i32
    %c0_i32_2 = arith.constant 0 : i32
    return %c0_i32, %c0_i32_0, %c0_i32_1 : i32, i32, i32
  }
  func.func @transform_5(%arg0: i32) -> (i32, i32, i32) {
    %c0_i32 = arith.constant 0 : i32
    %c0_i32_0 = arith.constant 0 : i32
    %c0_i32_1 = arith.constant 0 : i32
    %c0_i32_2 = arith.constant 0 : i32
    return %c0_i32, %c0_i32_0, %c0_i32_1 : i32, i32, i32
  }
  func.func @transform_6(%arg0: i32) -> (i32, i32, i32) {
    %c0_i32 = arith.constant 0 : i32
    %c0_i32_0 = arith.constant 0 : i32
    %c0_i32_1 = arith.constant 0 : i32
    %c0_i32_2 = arith.constant 0 : i32
    return %c0_i32, %c0_i32_0, %c0_i32_1 : i32, i32, i32
  }
  func.func @transform_7(%arg0: i32) -> (i32, i32, i32) {
    %c0_i32 = arith.constant 0 : i32
    %c0_i32_0 = arith.constant 0 : i32
    %c0_i32_1 = arith.constant 0 : i32
    %c0_i32_2 = arith.constant 0 : i32
    return %c0_i32, %c0_i32_0, %c0_i32_1 : i32, i32, i32
  }
  func.func @transform_8(%arg0: i32) -> (i32, i32, i32) {
    %c0_i32 = arith.constant 0 : i32
    %c0_i32_0 = arith.constant 0 : i32
    %c0_i32_1 = arith.constant 0 : i32
    %c0_i32_2 = arith.constant 0 : i32
    return %c0_i32, %c0_i32_0, %c0_i32_1 : i32, i32, i32
  }
  func.func @transform_9(%arg0: i32) -> (i32, i32, i32) {
    %c0_i32 = arith.constant 0 : i32
    %c0_i32_0 = arith.constant 0 : i32
    %c0_i32_1 = arith.constant 0 : i32
    %c0_i32_2 = arith.constant 0 : i32
    return %c0_i32, %c0_i32_0, %c0_i32_1 : i32, i32, i32
  }
  func.func @transform_10(%arg0: i32) -> (i32, i32) {
    %c0_i32 = arith.constant 0 : i32
    %c0_i32_0 = arith.constant 0 : i32
    %c0_i32_1 = arith.constant 0 : i32
    return %c0_i32, %c0_i32_0 : i32, i32
  }
  func.func @transform_11(%arg0: i32) -> (i32, i32) {
    %c0_i32 = arith.constant 0 : i32
    %c0_i32_0 = arith.constant 0 : i32
    %c0_i32_1 = arith.constant 0 : i32
    return %c0_i32, %c0_i32_0 : i32, i32
  }
  func.func @transform_12(%arg0: i32) -> (i32, i32) {
    %c0_i32 = arith.constant 0 : i32
    %c0_i32_0 = arith.constant 0 : i32
    %c0_i32_1 = arith.constant 0 : i32
    return %c0_i32, %c0_i32_0 : i32, i32
  }
  func.func @transform_13(%arg0: i32) -> (i32, i32) {
    %c0_i32 = arith.constant 0 : i32
    %c0_i32_0 = arith.constant 0 : i32
    %c0_i32_1 = arith.constant 0 : i32
    return %c0_i32, %c0_i32_0 : i32, i32
  }
  func.func @transform_14(%arg0: i32) -> (i32, i32) {
    %c0_i32 = arith.constant 0 : i32
    %c0_i32_0 = arith.constant 0 : i32
    %c0_i32_1 = arith.constant 0 : i32
    return %c0_i32, %c0_i32_0 : i32, i32
  }
  func.func @transform_15(%arg0: i32) -> (i32, i32) {
    %c0_i32 = arith.constant 0 : i32
    %c0_i32_0 = arith.constant 0 : i32
    %c0_i32_1 = arith.constant 0 : i32
    return %c0_i32, %c0_i32_0 : i32, i32
  }
  func.func @transform_16(%arg0: i32) -> (i32, i32) {
    %c0_i32 = arith.constant 0 : i32
    %c0_i32_0 = arith.constant 0 : i32
    %c0_i32_1 = arith.constant 0 : i32
    return %c0_i32, %c0_i32_0 : i32, i32
  }
  func.func @transform_17(%arg0: i32) -> (i32, i32) {
    %c0_i32 = arith.constant 0 : i32
    %c0_i32_0 = arith.constant 0 : i32
    %c0_i32_1 = arith.constant 0 : i32
    return %c0_i32, %c0_i32_0 : i32, i32
  }
  func.func @transform_18(%arg0: i32) -> (i32, i32) {
    %c0_i32 = arith.constant 0 : i32
    %c0_i32_0 = arith.constant 0 : i32
    %c0_i32_1 = arith.constant 0 : i32
    return %c0_i32, %c0_i32_0 : i32, i32
  }
  func.func @transform_19(%arg0: i32) -> (i32, i32, i32) {
    %c0_i32 = arith.constant 0 : i32
    %c0_i32_0 = arith.constant 0 : i32
    %c0_i32_1 = arith.constant 0 : i32
    return %arg0, %c0_i32, %c0_i32_0 : i32, i32, i32
  }
}

</mosaic_0001>

<llo_original>
// kernel: _lambda_.3
$region0: #{_lambda_.3}
  #allocation0 [shape = 'u32[]', space=smem, size = 0x4, offset = 0x4, fixed_abs, tag = 'smem constant byte address 0x4 - core index']
  #allocation1 [shape = 'u32[144,128]{1,0:T(1,128)}', space=vmem, size = 0x12000, scoped, tag = 'internal scratch']
  %s0 = inlined_call_operand.vmem [shape: f32[2,8,32], index: 0, kind: input, shape index: {}]
  %s1 = inlined_call_operand.vmem [shape: f32[2,1,8], index: 1, kind: input, shape index: {}]
  %s2 = inlined_call_operand.vmem [shape: f32[2,8,1], index: 2, kind: input, shape index: {}]
  %s3 = inlined_call_operand.vmem [shape: bf16[2,32,16], index: 3, kind: input, shape index: {}]
  %s4 = inlined_call_operand.vmem [shape: bf16[2,32,16], index: 4, kind: input, shape index: {}]
  %s5 = inlined_call_operand.vmem [shape: bf16[2,32,16], index: 5, kind: input, shape index: {}]
  %s6 = inlined_call_operand.vmem [shape: f32[2,1,16], index: 6, kind: input, shape index: {}]
  %s7 = inlined_call_operand.vmem [shape: f32[2,1,16], index: 7, kind: input, shape index: {}]
  %s8 = inlined_call_operand.vmem [shape: f32[2,1,16], index: 8, kind: input, shape index: {}]
  %s9 = inlined_call_operand.vmem [shape: bf16[2,16,32], index: 9, kind: input, shape index: {}]
  %s10 = inlined_call_operand.vmem [shape: f32[1,32], index: 10, kind: input, shape index: {}]
  %s11 = inlined_call_operand.vmem [shape: f32[1,32], index: 11, kind: input, shape index: {}]
  %s12 = inlined_call_operand.vmem [shape: f32[1,32], index: 12, kind: input, shape index: {}]
  %s13 = inlined_call_operand.vmem [shape: bf16[96,64], index: 13, kind: input, shape index: {}]
  %s14 = inlined_call_operand.vmem [shape: f32[1,64], index: 14, kind: input, shape index: {}]
  %s15 = inlined_call_operand.vmem [shape: bf16[64,32], index: 15, kind: input, shape index: {}]
  %s16 = inlined_call_operand.vmem [shape: f32[1,32], index: 16, kind: input, shape index: {}]
  %s17 = inlined_call_operand.vmem [shape: f32[1,32], index: 17, kind: input, shape index: {}]
  %s18 = inlined_call_operand.vmem [shape: f32[1,32], index: 18, kind: input, shape index: {}]
  %s19 = inlined_call_operand.hbm [shape: f32[2,8,32], index: 19, kind: output, shape index: {}]
  %s20 = sld [smem:[#allocation0]]
  $region109: #{_lambda_.3} parent=0
    _
  %s22 = ssub.s32 1, %s20
  %s23 = scalar_select 0, %s22, %s20
  $region1: #{_lambda_.3} parent=0
    #allocation2 [shape = 'u8[8192]{0}', space=vmem, size = 0x2000, scoped, tag = 'output window, operand 0']
    #allocation3 [shape = 's32[2]{0}', space=sflag, size = 0x8, scoped, tag = 'scoped memory for _lambda_.3']
    %24 = vsyncpa [#allocation3], 0
    %s25 = scalar_lea.sflag [#allocation3], 1
    %26 = vsyncpa %s25, 0
    loop: start=0, step=1, limit=4
    $region2: #{_lambda_.3} parent=1 // loop_pre_header
      _
    $region3: #{_lambda_.3} parent=1 // loop_header
      %s28 = sphi 0, %s32
      %p29 = scmp.ge.s32.totalorder %s28, 4
      %s38 = sphi 0, %s40
      %s41 = sphi 0, %s38
      %s42 = sphi 0, %s41
      %s58 = sphi 0, %s42
      %s64 = sphi 0, %s66
      %s67 = sphi 0, %s64
      %s68 = sphi 0, %s67
      %s84 = sphi 0, %s68
      %s90 = sphi 0, %s92
      %s93 = sphi 0, %s90
      %s94 = sphi 0, %s93
      %s110 = sphi 0, %s94
      %s114 = sphi 0, %s114
      %s116 = sphi 0, %s114
      %s117 = sphi 0, %s116
      %s131 = sphi 0, %s117
      %s135 = sphi 0, %s135
      %s137 = sphi 0, %s135
      %s138 = sphi 0, %s137
      %s152 = sphi 0, %s138
      %s156 = sphi 0, %s156
      %s158 = sphi 0, %s156
      %s159 = sphi 0, %s158
      %s173 = sphi 0, %s159
      %s177 = sphi 0, %s177
      %s179 = sphi 0, %s177
      %s180 = sphi 0, %s179
      %s194 = sphi 0, %s180
      %s198 = sphi 0, %s198
      %s200 = sphi 0, %s198
      %s201 = sphi 0, %s200
      %s215 = sphi 0, %s201
      %s219 = sphi 0, %s219
      %s221 = sphi 0, %s219
      %s222 = sphi 0, %s221
      %s236 = sphi 0, %s222
      %s240 = sphi 0, %s240
      %s242 = sphi 0, %s240
      %s243 = sphi 0, %s242
      %s257 = sphi 0, %s243
      %s261 = sphi 0, %s261
      %s263 = sphi 0, %s261
      %s264 = sphi 0, %s263
      %s278 = sphi 0, %s264
      %s282 = sphi 0, %s282
      %s284 = sphi 0, %s282
      %s285 = sphi 0, %s284
      %s299 = sphi 0, %s285
      %s303 = sphi 0, %s303
      %s305 = sphi 0, %s303
      %s306 = sphi 0, %s305
      %s320 = sphi 0, %s306
      %s324 = sphi 0, %s324
      %s326 = sphi 0, %s324
      %s327 = sphi 0, %s326
      %s341 = sphi 0, %s327
      %s345 = sphi 0, %s345
      %s347 = sphi 0, %s345
      %s348 = sphi 0, %s347
      %s362 = sphi 0, %s348
      %s366 = sphi 0, %s366
      %s368 = sphi 0, %s366
      %s369 = sphi 0, %s368
      %s383 = sphi 0, %s369
      %s387 = sphi 0, %s387
      %s389 = sphi 0, %s387
      %s390 = sphi 0, %s389
      %s404 = sphi 0, %s390
      %s408 = sphi 0, %s408
      %s410 = sphi 0, %s408
      %s411 = sphi 0, %s410
      %s425 = sphi 0, %s411
      %s429 = sphi 0, %s429
      %s431 = sphi 0, %s429
      %s432 = sphi 0, %s431
      %s446 = sphi 0, %s432
      %s452 = sphi 0, %s454
      %s455 = sphi 0, %s452
      %s456 = sphi 0, %s455
      %s472 = sphi 0, %s456
    $region4: #{_lambda_.3} parent=1 // loop_header_branch
      %31 = sbr.rel (%p29) target = $region8
    $region5: #{_lambda_.3} parent=1 // loop_body
      %s33 = ssub.s32 %s28, 1
      %s34 = ssub.s32 %s28, 2
      %s35 = sadd.s32 %s28, 1
      %s36 = ssub.s32 %s28, %s35
      %p37 = scmp.eq.s32.totalorder %s36, 0
      %s39 = sadd.s32 %s38, 1
      %s40 = scalar_select %p37, %s38, %s39
      %p43 = pneg %p37
      %p44 = scmp.eq.s32.totalorder %s28, 1
      %p45 = por %p43, %p44
      %p46 = scmp.ne.s32.totalorder %s38, %s41
      %p47 = scmp.eq.s32.totalorder %s28, 0
      %p48 = por %p46, %p47
      %p49 = scmp.ne.s32.totalorder %s38, %s41
      %p50 = scmp.eq.s32.totalorder %s33, 1
      %p51 = por %p49, %p50
      %p52 = scmp.ne.s32.totalorder %s41, %s42
      %p53 = scmp.eq.s32.totalorder %s33, 0
      %p54 = por %p52, %p53
      %p55 = scmp.ne.s32.totalorder %s41, %s42
      %p56 = scmp.eq.s32.totalorder %s34, 1
      %p57 = por %p55, %p56
      %p59 = scmp.ne.s32.totalorder %s42, %s58
      %p60 = scmp.eq.s32.totalorder %s34, 0
      %p61 = por %p59, %p60
      %s62 = ssub.s32 %s28, %s35
      %p63 = scmp.eq.s32.totalorder %s62, 0
      %s65 = sadd.s32 %s64, 1
      %s66 = scalar_select %p63, %s64, %s65
      %p69 = pneg %p63
      %p70 = scmp.eq.s32.totalorder %s28, 1
      %p71 = por %p69, %p70
      %p72 = scmp.ne.s32.totalorder %s64, %s67
      %p73 = scmp.eq.s32.totalorder %s28, 0
      %p74 = por %p72, %p73
      %p75 = scmp.ne.s32.totalorder %s64, %s67
      %p76 = scmp.eq.s32.totalorder %s33, 1
      %p77 = por %p75, %p76
      %p78 = scmp.ne.s32.totalorder %s67, %s68
      %p79 = scmp.eq.s32.totalorder %s33, 0
      %p80 = por %p78, %p79
      %p81 = scmp.ne.s32.totalorder %s67, %s68
      %p82 = scmp.eq.s32.totalorder %s34, 1
      %p83 = por %p81, %p82
      %p85 = scmp.ne.s32.totalorder %s68, %s84
      %p86 = scmp.eq.s32.totalorder %s34, 0
      %p87 = por %p85, %p86
      %s88 = ssub.s32 %s28, %s35
      %p89 = scmp.eq.s32.totalorder %s88, 0
      %s91 = sadd.s32 %s90, 1
      %s92 = scalar_select %p89, %s90, %s91
      %p95 = pneg %p89
      %p96 = scmp.eq.s32.totalorder %s28, 1
      %p97 = por %p95, %p96
      %p98 = scmp.ne.s32.totalorder %s90, %s93
      %p99 = scmp.eq.s32.totalorder %s28, 0
      %p100 = por %p98, %p99
      %p101 = scmp.ne.s32.totalorder %s90, %s93
      %p102 = scmp.eq.s32.totalorder %s33, 1
      %p103 = por %p101, %p102
      %p104 = scmp.ne.s32.totalorder %s93, %s94
      %p105 = scmp.eq.s32.totalorder %s33, 0
      %p106 = por %p104, %p105
      %p107 = scmp.ne.s32.totalorder %s93, %s94
      %p108 = scmp.eq.s32.totalorder %s34, 1
      %p109 = por %p107, %p108
      %p111 = scmp.ne.s32.totalorder %s94, %s110
      %p112 = scmp.eq.s32.totalorder %s34, 0
      %p113 = por %p111, %p112
      %s115 = sadd.s32 %s114, 1
      %p118 = scmp.eq.s32.totalorder %s28, 1
      %p119 = scmp.ne.s32.totalorder %s114, %s116
      %p120 = scmp.eq.s32.totalorder %s28, 0
      %p121 = por %p119, %p120
      %p122 = scmp.ne.s32.totalorder %s114, %s116
      %p123 = scmp.eq.s32.totalorder %s33, 1
      %p124 = por %p122, %p123
      %p125 = scmp.ne.s32.totalorder %s116, %s117
      %p126 = scmp.eq.s32.totalorder %s33, 0
      %p127 = por %p125, %p126
      %p128 = scmp.ne.s32.totalorder %s116, %s117
      %p129 = scmp.eq.s32.totalorder %s34, 1
      %p130 = por %p128, %p129
      %p132 = scmp.ne.s32.totalorder %s117, %s131
      %p133 = scmp.eq.s32.totalorder %s34, 0
      %p134 = por %p132, %p133
      %s136 = sadd.s32 %s135, 1
      %p139 = scmp.eq.s32.totalorder %s28, 1
      %p140 = scmp.ne.s32.totalorder %s135, %s137
      %p141 = scmp.eq.s32.totalorder %s28, 0
      %p142 = por %p140, %p141
      %p143 = scmp.ne.s32.totalorder %s135, %s137
      %p144 = scmp.eq.s32.totalorder %s33, 1
      %p145 = por %p143, %p144
      %p146 = scmp.ne.s32.totalorder %s137, %s138
      %p147 = scmp.eq.s32.totalorder %s33, 0
      %p148 = por %p146, %p147
      %p149 = scmp.ne.s32.totalorder %s137, %s138
      %p150 = scmp.eq.s32.totalorder %s34, 1
      %p151 = por %p149, %p150
      %p153 = scmp.ne.s32.totalorder %s138, %s152
      %p154 = scmp.eq.s32.totalorder %s34, 0
      %p155 = por %p153, %p154
      %s157 = sadd.s32 %s156, 1
      %p160 = scmp.eq.s32.totalorder %s28, 1
      %p161 = scmp.ne.s32.totalorder %s156, %s158
      %p162 = scmp.eq.s32.totalorder %s28, 0
      %p163 = por %p161, %p162
      %p164 = scmp.ne.s32.totalorder %s156, %s158
      %p165 = scmp.eq.s32.totalorder %s33, 1
      %p166 = por %p164, %p165
      %p167 = scmp.ne.s32.totalorder %s158, %s159
      %p168 = scmp.eq.s32.totalorder %s33, 0
      %p169 = por %p167, %p168
      %p170 = scmp.ne.s32.totalorder %s158, %s159
      %p171 = scmp.eq.s32.totalorder %s34, 1
      %p172 = por %p170, %p171
      %p174 = scmp.ne.s32.totalorder %s159, %s173
      %p175 = scmp.eq.s32.totalorder %s34, 0
      %p176 = por %p174, %p175
      %s178 = sadd.s32 %s177, 1
      %p181 = scmp.eq.s32.totalorder %s28, 1
      %p182 = scmp.ne.s32.totalorder %s177, %s179
      %p183 = scmp.eq.s32.totalorder %s28, 0
      %p184 = por %p182, %p183
      %p185 = scmp.ne.s32.totalorder %s177, %s179
      %p186 = scmp.eq.s32.totalorder %s33, 1
      %p187 = por %p185, %p186
      %p188 = scmp.ne.s32.totalorder %s179, %s180
      %p189 = scmp.eq.s32.totalorder %s33, 0
      %p190 = por %p188, %p189
      %p191 = scmp.ne.s32.totalorder %s179, %s180
      %p192 = scmp.eq.s32.totalorder %s34, 1
      %p193 = por %p191, %p192
      %p195 = scmp.ne.s32.totalorder %s180, %s194
      %p196 = scmp.eq.s32.totalorder %s34, 0
      %p197 = por %p195, %p196
      %s199 = sadd.s32 %s198, 1
      %p202 = scmp.eq.s32.totalorder %s28, 1
      %p203 = scmp.ne.s32.totalorder %s198, %s200
      %p204 = scmp.eq.s32.totalorder %s28, 0
      %p205 = por %p203, %p204
      %p206 = scmp.ne.s32.totalorder %s198, %s200
      %p207 = scmp.eq.s32.totalorder %s33, 1
      %p208 = por %p206, %p207
      %p209 = scmp.ne.s32.totalorder %s200, %s201
      %p210 = scmp.eq.s32.totalorder %s33, 0
      %p211 = por %p209, %p210
      %p212 = scmp.ne.s32.totalorder %s200, %s201
      %p213 = scmp.eq.s32.totalorder %s34, 1
      %p214 = por %p212, %p213
      %p216 = scmp.ne.s32.totalorder %s201, %s215
      %p217 = scmp.eq.s32.totalorder %s34, 0
      %p218 = por %p216, %p217
      %s220 = sadd.s32 %s219, 1
      %p223 = scmp.eq.s32.totalorder %s28, 1
      %p224 = scmp.ne.s32.totalorder %s219, %s221
      %p225 = scmp.eq.s32.totalorder %s28, 0
      %p226 = por %p224, %p225
      %p227 = scmp.ne.s32.totalorder %s219, %s221
      %p228 = scmp.eq.s32.totalorder %s33, 1
      %p229 = por %p227, %p228
      %p230 = scmp.ne.s32.totalorder %s221, %s222
      %p231 = scmp.eq.s32.totalorder %s33, 0
      %p232 = por %p230, %p231
      %p233 = scmp.ne.s32.totalorder %s221, %s222
      %p234 = scmp.eq.s32.totalorder %s34, 1
      %p235 = por %p233, %p234
      %p237 = scmp.ne.s32.totalorder %s222, %s236
      %p238 = scmp.eq.s32.totalorder %s34, 0
      %p239 = por %p237, %p238
      %s241 = sadd.s32 %s240, 1
      %p244 = scmp.eq.s32.totalorder %s28, 1
      %p245 = scmp.ne.s32.totalorder %s240, %s242
      %p246 = scmp.eq.s32.totalorder %s28, 0
      %p247 = por %p245, %p246
      %p248 = scmp.ne.s32.totalorder %s240, %s242
      %p249 = scmp.eq.s32.totalorder %s33, 1
      %p250 = por %p248, %p249
      %p251 = scmp.ne.s32.totalorder %s242, %s243
      %p252 = scmp.eq.s32.totalorder %s33, 0
      %p253 = por %p251, %p252
      %p254 = scmp.ne.s32.totalorder %s242, %s243
      %p255 = scmp.eq.s32.totalorder %s34, 1
      %p256 = por %p254, %p255
      %p258 = scmp.ne.s32.totalorder %s243, %s257
      %p259 = scmp.eq.s32.totalorder %s34, 0
      %p260 = por %p258, %p259
      %s262 = sadd.s32 %s261, 1
      %p265 = scmp.eq.s32.totalorder %s28, 1
      %p266 = scmp.ne.s32.totalorder %s261, %s263
      %p267 = scmp.eq.s32.totalorder %s28, 0
      %p268 = por %p266, %p267
      %p269 = scmp.ne.s32.totalorder %s261, %s263
      %p270 = scmp.eq.s32.totalorder %s33, 1
      %p271 = por %p269, %p270
      %p272 = scmp.ne.s32.totalorder %s263, %s264
      %p273 = scmp.eq.s32.totalorder %s33, 0
      %p274 = por %p272, %p273
      %p275 = scmp.ne.s32.totalorder %s263, %s264
      %p276 = scmp.eq.s32.totalorder %s34, 1
      %p277 = por %p275, %p276
      %p279 = scmp.ne.s32.totalorder %s264, %s278
      %p280 = scmp.eq.s32.totalorder %s34, 0
      %p281 = por %p279, %p280
      %s283 = sadd.s32 %s282, 1
      %p286 = scmp.eq.s32.totalorder %s28, 1
      %p287 = scmp.ne.s32.totalorder %s282, %s284
      %p288 = scmp.eq.s32.totalorder %s28, 0
      %p289 = por %p287, %p288
      %p290 = scmp.ne.s32.totalorder %s282, %s284
      %p291 = scmp.eq.s32.totalorder %s33, 1
      %p292 = por %p290, %p291
      %p293 = scmp.ne.s32.totalorder %s284, %s285
      %p294 = scmp.eq.s32.totalorder %s33, 0
      %p295 = por %p293, %p294
      %p296 = scmp.ne.s32.totalorder %s284, %s285
      %p297 = scmp.eq.s32.totalorder %s34, 1
      %p298 = por %p296, %p297
      %p300 = scmp.ne.s32.totalorder %s285, %s299
      %p301 = scmp.eq.s32.totalorder %s34, 0
      %p302 = por %p300, %p301
      %s304 = sadd.s32 %s303, 1
      %p307 = scmp.eq.s32.totalorder %s28, 1
      %p308 = scmp.ne.s32.totalorder %s303, %s305
      %p309 = scmp.eq.s32.totalorder %s28, 0
      %p310 = por %p308, %p309
      %p311 = scmp.ne.s32.totalorder %s303, %s305
      %p312 = scmp.eq.s32.totalorder %s33, 1
      %p313 = por %p311, %p312
      %p314 = scmp.ne.s32.totalorder %s305, %s306
      %p315 = scmp.eq.s32.totalorder %s33, 0
      %p316 = por %p314, %p315
      %p317 = scmp.ne.s32.totalorder %s305, %s306
      %p318 = scmp.eq.s32.totalorder %s34, 1
      %p319 = por %p317, %p318
      %p321 = scmp.ne.s32.totalorder %s306, %s320
      %p322 = scmp.eq.s32.totalorder %s34, 0
      %p323 = por %p321, %p322
      %s325 = sadd.s32 %s324, 1
      %p328 = scmp.eq.s32.totalorder %s28, 1
      %p329 = scmp.ne.s32.totalorder %s324, %s326
      %p330 = scmp.eq.s32.totalorder %s28, 0
      %p331 = por %p329, %p330
      %p332 = scmp.ne.s32.totalorder %s324, %s326
      %p333 = scmp.eq.s32.totalorder %s33, 1
      %p334 = por %p332, %p333
      %p335 = scmp.ne.s32.totalorder %s326, %s327
      %p336 = scmp.eq.s32.totalorder %s33, 0
      %p337 = por %p335, %p336
      %p338 = scmp.ne.s32.totalorder %s326, %s327
      %p339 = scmp.eq.s32.totalorder %s34, 1
      %p340 = por %p338, %p339
      %p342 = scmp.ne.s32.totalorder %s327, %s341
      %p343 = scmp.eq.s32.totalorder %s34, 0
      %p344 = por %p342, %p343
      %s346 = sadd.s32 %s345, 1
      %p349 = scmp.eq.s32.totalorder %s28, 1
      %p350 = scmp.ne.s32.totalorder %s345, %s347
      %p351 = scmp.eq.s32.totalorder %s28, 0
      %p352 = por %p350, %p351
      %p353 = scmp.ne.s32.totalorder %s345, %s347
      %p354 = scmp.eq.s32.totalorder %s33, 1
      %p355 = por %p353, %p354
      %p356 = scmp.ne.s32.totalorder %s347, %s348
      %p357 = scmp.eq.s32.totalorder %s33, 0
      %p358 = por %p356, %p357
      %p359 = scmp.ne.s32.totalorder %s347, %s348
      %p360 = scmp.eq.s32.totalorder %s34, 1
      %p361 = por %p359, %p360
      %p363 = scmp.ne.s32.totalorder %s348, %s362
      %p364 = scmp.eq.s32.totalorder %s34, 0
      %p365 = por %p363, %p364
      %s367 = sadd.s32 %s366, 1
      %p370 = scmp.eq.s32.totalorder %s28, 1
      %p371 = scmp.ne.s32.totalorder %s366, %s368
      %p372 = scmp.eq.s32.totalorder %s28, 0
      %p373 = por %p371, %p372
      %p374 = scmp.ne.s32.totalorder %s366, %s368
      %p375 = scmp.eq.s32.totalorder %s33, 1
      %p376 = por %p374, %p375
      %p377 = scmp.ne.s32.totalorder %s368, %s369
      %p378 = scmp.eq.s32.totalorder %s33, 0
      %p379 = por %p377, %p378
      %p380 = scmp.ne.s32.totalorder %s368, %s369
      %p381 = scmp.eq.s32.totalorder %s34, 1
      %p382 = por %p380, %p381
      %p384 = scmp.ne.s32.totalorder %s369, %s383
      %p385 = scmp.eq.s32.totalorder %s34, 0
      %p386 = por %p384, %p385
      %s388 = sadd.s32 %s387, 1
      %p391 = scmp.eq.s32.totalorder %s28, 1
      %p392 = scmp.ne.s32.totalorder %s387, %s389
      %p393 = scmp.eq.s32.totalorder %s28, 0
      %p394 = por %p392, %p393
      %p395 = scmp.ne.s32.totalorder %s387, %s389
      %p396 = scmp.eq.s32.totalorder %s33, 1
      %p397 = por %p395, %p396
      %p398 = scmp.ne.s32.totalorder %s389, %s390
      %p399 = scmp.eq.s32.totalorder %s33, 0
      %p400 = por %p398, %p399
      %p401 = scmp.ne.s32.totalorder %s389, %s390
      %p402 = scmp.eq.s32.totalorder %s34, 1
      %p403 = por %p401, %p402
      %p405 = scmp.ne.s32.totalorder %s390, %s404
      %p406 = scmp.eq.s32.totalorder %s34, 0
      %p407 = por %p405, %p406
      %s409 = sadd.s32 %s408, 1
      %p412 = scmp.eq.s32.totalorder %s28, 1
      %p413 = scmp.ne.s32.totalorder %s408, %s410
      %p414 = scmp.eq.s32.totalorder %s28, 0
      %p415 = por %p413, %p414
      %p416 = scmp.ne.s32.totalorder %s408, %s410
      %p417 = scmp.eq.s32.totalorder %s33, 1
      %p418 = por %p416, %p417
      %p419 = scmp.ne.s32.totalorder %s410, %s411
      %p420 = scmp.eq.s32.totalorder %s33, 0
      %p421 = por %p419, %p420
      %p422 = scmp.ne.s32.totalorder %s410, %s411
      %p423 = scmp.eq.s32.totalorder %s34, 1
      %p424 = por %p422, %p423
      %p426 = scmp.ne.s32.totalorder %s411, %s425
      %p427 = scmp.eq.s32.totalorder %s34, 0
      %p428 = por %p426, %p427
      %s430 = sadd.s32 %s429, 1
      %p433 = scmp.eq.s32.totalorder %s28, 1
      %p434 = scmp.ne.s32.totalorder %s429, %s431
      %p435 = scmp.eq.s32.totalorder %s28, 0
      %p436 = por %p434, %p435
      %p437 = scmp.ne.s32.totalorder %s429, %s431
      %p438 = scmp.eq.s32.totalorder %s33, 1
      %p439 = por %p437, %p438
      %p440 = scmp.ne.s32.totalorder %s431, %s432
      %p441 = scmp.eq.s32.totalorder %s33, 0
      %p442 = por %p440, %p441
      %p443 = scmp.ne.s32.totalorder %s431, %s432
      %p444 = scmp.eq.s32.totalorder %s34, 1
      %p445 = por %p443, %p444
      %p447 = scmp.ne.s32.totalorder %s432, %s446
      %p448 = scmp.eq.s32.totalorder %s34, 0
      %p449 = por %p447, %p448
      %s450 = ssub.s32 %s28, %s35
      %p451 = scmp.eq.s32.totalorder %s450, 0
      %s453 = sadd.s32 %s452, 1
      %s454 = scalar_select %p451, %s452, %s453
      %p457 = pneg %p451
      %p458 = scmp.eq.s32.totalorder %s28, 1
      %p459 = por %p457, %p458
      %p460 = scmp.ne.s32.totalorder %s452, %s455
      %p461 = scmp.eq.s32.totalorder %s28, 0
      %p462 = por %p460, %p461
      %p463 = scmp.ne.s32.totalorder %s452, %s455
      %p464 = scmp.eq.s32.totalorder %s33, 1
      %p465 = por %p463, %p464
      %p466 = scmp.ne.s32.totalorder %s455, %s456
      %p467 = scmp.eq.s32.totalorder %s33, 0
      %p468 = por %p466, %p467
      %p469 = scmp.ne.s32.totalorder %s455, %s456
      %p470 = scmp.eq.s32.totalorder %s34, 1
      %p471 = por %p469, %p470
      %p473 = scmp.ne.s32.totalorder %s456, %s472
      %p474 = scmp.eq.s32.totalorder %s34, 0
      %p475 = por %p473, %p474
      %p476 = scmp.le.s32.totalorder 1, %s28
      %p477 = scmp.lt.s32.totalorder %s28, 3
      %p478 = pnand %p476, %p477
      %p479 = pneg %p478
      // Predicated region
      $region9: #{_lambda_.3} parent=5 // pred_check
        _
      $region10: #{_lambda_.3} parent=5 // pred_check_branch
        %481 = sbr.rel (%p478) target = $region12
      $region11: #{_lambda_.3} parent=5 // pred_region
        %s482 = ssub.s32 %s28, 1
        // Predicated region
        $region13: #{_lambda_.3} parent=11 // pred_check
          %p483 = pneg %p127
        $region14: #{_lambda_.3} parent=11 // pred_check_branch
          %485 = sbr.rel (%p483) target = $region16
        $region15: #{_lambda_.3} parent=11 // pred_region
          _
        $region16: #{_lambda_.3} parent=11 // pred_fallthru
          _
        // Predicated region
        $region17: #{_lambda_.3} parent=11 // pred_check
          %p486 = pneg %p148
        $region18: #{_lambda_.3} parent=11 // pred_check_branch
          %488 = sbr.rel (%p486) target = $region20
        $region19: #{_lambda_.3} parent=11 // pred_region
          _
        $region20: #{_lambda_.3} parent=11 // pred_fallthru
          _
        // Predicated region
        $region21: #{_lambda_.3} parent=11 // pred_check
          %p489 = pneg %p169
        $region22: #{_lambda_.3} parent=11 // pred_check_branch
          %491 = sbr.rel (%p489) target = $region24
        $region23: #{_lambda_.3} parent=11 // pred_region
          _
        $region24: #{_lambda_.3} parent=11 // pred_fallthru
          _
        // Predicated region
        $region25: #{_lambda_.3} parent=11 // pred_check
          %p492 = pneg %p190
        $region26: #{_lambda_.3} parent=11 // pred_check_branch
          %494 = sbr.rel (%p492) target = $region28
        $region27: #{_lambda_.3} parent=11 // pred_region
          _
        $region28: #{_lambda_.3} parent=11 // pred_fallthru
          _
        // Predicated region
        $region29: #{_lambda_.3} parent=11 // pred_check
          %p495 = pneg %p211
        $region30: #{_lambda_.3} parent=11 // pred_check_branch
          %497 = sbr.rel (%p495) target = $region32
        $region31: #{_lambda_.3} parent=11 // pred_region
          _
        $region32: #{_lambda_.3} parent=11 // pred_fallthru
          _
        // Predicated region
        $region33: #{_lambda_.3} parent=11 // pred_check
          %p498 = pneg %p232
        $region34: #{_lambda_.3} parent=11 // pred_check_branch
          %500 = sbr.rel (%p498) target = $region36
        $region35: #{_lambda_.3} parent=11 // pred_region
          _
        $region36: #{_lambda_.3} parent=11 // pred_fallthru
          _
        // Predicated region
        $region37: #{_lambda_.3} parent=11 // pred_check
          %p501 = pneg %p253
        $region38: #{_lambda_.3} parent=11 // pred_check_branch
          %503 = sbr.rel (%p501) target = $region40
        $region39: #{_lambda_.3} parent=11 // pred_region
          _
        $region40: #{_lambda_.3} parent=11 // pred_fallthru
          _
        // Predicated region
        $region41: #{_lambda_.3} parent=11 // pred_check
          %p504 = pneg %p274
        $region42: #{_lambda_.3} parent=11 // pred_check_branch
          %506 = sbr.rel (%p504) target = $region44
        $region43: #{_lambda_.3} parent=11 // pred_region
          _
        $region44: #{_lambda_.3} parent=11 // pred_fallthru
          _
        // Predicated region
        $region45: #{_lambda_.3} parent=11 // pred_check
          %p507 = pneg %p295
        $region46: #{_lambda_.3} parent=11 // pred_check_branch
          %509 = sbr.rel (%p507) target = $region48
        $region47: #{_lambda_.3} parent=11 // pred_region
          _
        $region48: #{_lambda_.3} parent=11 // pred_fallthru
          _
        // Predicated region
        $region49: #{_lambda_.3} parent=11 // pred_check
          %p510 = pneg %p316
        $region50: #{_lambda_.3} parent=11 // pred_check_branch
          %512 = sbr.rel (%p510) target = $region52
        $region51: #{_lambda_.3} parent=11 // pred_region
          _
        $region52: #{_lambda_.3} parent=11 // pred_fallthru
          _
        // Predicated region
        $region53: #{_lambda_.3} parent=11 // pred_check
          %p513 = pneg %p337
        $region54: #{_lambda_.3} parent=11 // pred_check_branch
          %515 = sbr.rel (%p513) target = $region56
        $region55: #{_lambda_.3} parent=11 // pred_region
          _
        $region56: #{_lambda_.3} parent=11 // pred_fallthru
          _
        // Predicated region
        $region57: #{_lambda_.3} parent=11 // pred_check
          %p516 = pneg %p358
        $region58: #{_lambda_.3} parent=11 // pred_check_branch
          %518 = sbr.rel (%p516) target = $region60
        $region59: #{_lambda_.3} parent=11 // pred_region
          _
        $region60: #{_lambda_.3} parent=11 // pred_fallthru
          _
        // Predicated region
        $region61: #{_lambda_.3} parent=11 // pred_check
          %p519 = pneg %p379
        $region62: #{_lambda_.3} parent=11 // pred_check_branch
          %521 = sbr.rel (%p519) target = $region64
        $region63: #{_lambda_.3} parent=11 // pred_region
          _
        $region64: #{_lambda_.3} parent=11 // pred_fallthru
          _
        // Predicated region
        $region65: #{_lambda_.3} parent=11 // pred_check
          %p522 = pneg %p400
        $region66: #{_lambda_.3} parent=11 // pred_check_branch
          %524 = sbr.rel (%p522) target = $region68
        $region67: #{_lambda_.3} parent=11 // pred_region
          _
        $region68: #{_lambda_.3} parent=11 // pred_fallthru
          _
        // Predicated region
        $region69: #{_lambda_.3} parent=11 // pred_check
          %p525 = pneg %p421
        $region70: #{_lambda_.3} parent=11 // pred_check_branch
          %527 = sbr.rel (%p525) target = $region72
        $region71: #{_lambda_.3} parent=11 // pred_region
          _
        $region72: #{_lambda_.3} parent=11 // pred_fallthru
          _
        // Predicated region
        $region73: #{_lambda_.3} parent=11 // pred_check
          %p528 = pneg %p442
        $region74: #{_lambda_.3} parent=11 // pred_check_branch
          %530 = sbr.rel (%p528) target = $region76
        $region75: #{_lambda_.3} parent=11 // pred_region
          _
        $region76: #{_lambda_.3} parent=11 // pred_fallthru
          _
      $region12: #{_lambda_.3} parent=5 // pred_fallthru
        _
      %p531 = scmp.lt.s32.totalorder %s28, 2
      // Predicated region
      $region77: #{_lambda_.3} parent=5 // pred_check
        %p532 = pneg %p531
      $region78: #{_lambda_.3} parent=5 // pred_check_branch
        %534 = sbr.rel (%p532) target = $region80
      $region79: #{_lambda_.3} parent=5 // pred_region
        // Predicated region
        $region81: #{_lambda_.3} parent=79 // pred_check
          %p535 = pneg %p48
        $region82: #{_lambda_.3} parent=79 // pred_check_branch
          %537 = sbr.rel (%p535) target = $region84
        $region83: #{_lambda_.3} parent=79 // pred_region
          %p538 = scmp.lt.s32.totalorder %s28, 1
          %s539 = scalar_select %p538, %s28, 1
          %s540 = smul.addr %s539, 8
          %s541 = scalar_lea.vmem %s0, %s540
        $region84: #{_lambda_.3} parent=79 // pred_fallthru
          _
        // Predicated region
        $region85: #{_lambda_.3} parent=79 // pred_check
          %p542 = pneg %p74
        $region86: #{_lambda_.3} parent=79 // pred_check_branch
          %544 = sbr.rel (%p542) target = $region88
        $region87: #{_lambda_.3} parent=79 // pred_region
          %p545 = scmp.lt.s32.totalorder %s28, 1
          %s546 = scalar_select %p545, %s28, 1
          %s547 = scalar_lea.vmem %s1, %s546
        $region88: #{_lambda_.3} parent=79 // pred_fallthru
          _
        // Predicated region
        $region89: #{_lambda_.3} parent=79 // pred_check
          %p548 = pneg %p100
        $region90: #{_lambda_.3} parent=79 // pred_check_branch
          %550 = sbr.rel (%p548) target = $region92
        $region91: #{_lambda_.3} parent=79 // pred_region
          %p551 = scmp.lt.s32.totalorder %s28, 1
          %s552 = scalar_select %p551, %s28, 1
          %s553 = smul.addr %s552, 8
          %s554 = scalar_lea.vmem %s2, %s553
        $region92: #{_lambda_.3} parent=79 // pred_fallthru
          _
      $region80: #{_lambda_.3} parent=5 // pred_fallthru
        _
      %p555 = scmp.le.s32.totalorder 1, %s28
      %p556 = scmp.lt.s32.totalorder %s28, 3
      %p557 = pnand %p555, %p556
      %p558 = pneg %p557
      // Predicated region
      $region93: #{_lambda_.3} parent=5 // pred_check
        _
      $region94: #{_lambda_.3} parent=5 // pred_check_branch
        %560 = sbr.rel (%p557) target = $region96
      $region95: #{_lambda_.3} parent=5 // pred_region
        %s561 = ssub.s32 %s28, 1
        %p562 = scmp.lt.s32.totalorder %s33, 1
        %s563 = scalar_select %p562, %s33, 1
        %s564 = smul.addr %s563, 8
        %s565 = scalar_lea.vmem %s0, %s564
        %p566 = pneg %p54
        %p567 = pneg %p51
        %p568 = scmp.lt.s32.totalorder %s33, 1
        %s569 = scalar_select %p568, %s33, 1
        %s570 = scalar_lea.vmem %s1, %s569
        %p571 = pneg %p80
        %p572 = pneg %p77
        %p573 = scmp.lt.s32.totalorder %s33, 1
        %s574 = scalar_select %p573, %s33, 1
        %s575 = smul.addr %s574, 8
        %s576 = scalar_lea.vmem %s2, %s575
        %p577 = pneg %p106
        %p578 = pneg %p103
        %p579 = pneg %p127
        %p580 = pneg %p124
        %p581 = pneg %p148
        %p582 = pneg %p145
        %p583 = pneg %p169
        %p584 = pneg %p166
        %p585 = pneg %p190
        %p586 = pneg %p187
        %p587 = pneg %p211
        %p588 = pneg %p208
        %p589 = pneg %p232
        %p590 = pneg %p229
        %p591 = pneg %p253
        %p592 = pneg %p250
        %p593 = pneg %p274
        %p594 = pneg %p271
        %p595 = pneg %p295
        %p596 = pneg %p292
        %p597 = pneg %p316
        %p598 = pneg %p313
        %p599 = pneg %p337
        %p600 = pneg %p334
        %p601 = pneg %p358
        %p602 = pneg %p355
        %p603 = pneg %p379
        %p604 = pneg %p376
        %p605 = pneg %p400
        %p606 = pneg %p397
        %p607 = pneg %p421
        %p608 = pneg %p418
        %p609 = pneg %p442
        %p610 = pneg %p439
        %p611 = pneg %p468
        %p612 = pneg %p465
        %s613 = sand.u32 %s455, 1
        %s614 = scalar_lea.sflag [#allocation3], %s613
        %s615 = sand.u32 %s455, 1
        %s616 = smul.addr %s615, 8
        %s617 = scalar_lea.vmem [#allocation2], %s616
        %p618 = scmp.lt.s32.totalorder %s33, 1
        %s619 = scalar_select %p618, %s33, 1
        %s620 = smul.addr %s619, 8
        %s621 = scalar_lea.vmem %s0, %s620
        %p622 = scmp.lt.s32.totalorder %s33, 1
        %s623 = scalar_select %p622, %s33, 1
        %s624 = scalar_lea.vmem %s1, %s623
        %p625 = scmp.lt.s32.totalorder %s33, 1
        %s626 = scalar_select %p625, %s33, 1
        %s627 = smul.addr %s626, 8
        %s628 = scalar_lea.vmem %s2, %s627
        %v630 = vld [vmem:[%s621] sm:$0xff]
        %v631 = vpack.c.bf16 %v630, %v630
        %v632 = vld [vmem:[%s624] sm:$0x1]
        %v633 = vld [vmem:[%s628] sm:$0xff]
        %v634 = vld [vmem:[%s3] sm:$0xf]
        %v635 = vld [vmem:[%s3 + $0x4] sm:$0xf]
        %v636 = vld [vmem:[%s3 + $0x8] sm:$0xf]
        %v637 = vld [vmem:[%s3 + $0xc] sm:$0xf]
        %v638 = vld [vmem:[%s6] sm:$0x1]
        %v640 = vlaneseq
        %v641 = vshrl.u32 %v640, 7
        %v642 = vsub.s32 0, %v641
        %v643 = vrot.slane %v638, %v642
        %v649 = vunpack.c.l.b16 %v634
        %v650 = vunpack.c.l.b16 %v635
        %v651 = vunpack.c.l.b16 %v636
        %v652 = vunpack.c.l.b16 %v637
        %v653 = vpack.c.b16 %v650, %v649
        %v654 = vpack.c.b16 %v652, %v651
        %vm657 = vcmask 261120
        %v659 = vsel %vm657, %v631, 0
        %661 = vmatprep.subr.bf16.mxu0 0
        %662 = vmatpush1.bf16.msra.mxu0 %v653
        %663 = vmatprep.subr.bf16.mxu0 0
        %664 = vmatpush1.bf16.msra.mxu0 %v654
        %665 = vmatprep.subr.bf16.mxu0 0
        %666 = vmatpush1.bf16.msra.mxu0 0
        %667 = vmatprep.subr.bf16.mxu0 0
        %668 = vmatpush1.bf16.msra.mxu0 0
        %669 = vmatprep.subr.bf16.mxu0 0
        %670 = vmatpush1.bf16.msra.mxu0 0
        %671 = vmatprep.subr.bf16.mxu0 0
        %672 = vmatpush1.bf16.msra.mxu0 0
        %673 = vmatprep.subr.bf16.mxu0 0
        %674 = vmatpush1.bf16.msra.mxu0 0
        %675 = vmatprep.subr.bf16.mxu0 0
        %676 = vmatpush1.bf16.msra.mxu0 0
        %677 = vmatprep.subr.bf16.mxu0 0
        %678 = vmatpush1.bf16.msra.mxu0 0
        %679 = vmatprep.subr.bf16.mxu0 0
        %680 = vmatpush1.bf16.msra.mxu0 0
        %681 = vmatprep.subr.bf16.mxu0 0
        %682 = vmatpush1.bf16.msra.mxu0 0
        %683 = vmatprep.subr.bf16.mxu0 0
        %684 = vmatpush1.bf16.msra.mxu0 0
        %685 = vmatprep.subr.bf16.mxu0 0
        %686 = vmatpush1.bf16.msra.mxu0 0
        %687 = vmatprep.subr.bf16.mxu0 0
        %688 = vmatpush1.bf16.msra.mxu0 0
        %689 = vmatprep.subr.bf16.mxu0 0
        %690 = vmatpush1.bf16.msra.mxu0 0
        %691 = vmatprep.subr.bf16.mxu0 0
        %692 = vmatpush1.bf16.msra.mxu0 0
        %693 = vmatprep.mubr.bf16.mxu0 0
        %694 = vmatmul.mubr.bf16.gmra.mrb[0].mxu0 %v659
        %v695 = vpop.f32.mrb[0].mxu0
        %v696 = vadd.f32 %v643, %v695
        %v697 = vpop.f32.mrb[0].mxu0
        %v698 = vpop.f32.mrb[0].mxu0
        %v699 = vpop.f32.mrb[0].mxu0
        %700 = vdwg.mxu0
        %v701 = vpack.c.bf16 %v696, %v696
        %v702 = vld [vmem:[%s4] sm:$0xf]
        %v703 = vld [vmem:[%s4 + $0x4] sm:$0xf]
        %v704 = vld [vmem:[%s4 + $0x8] sm:$0xf]
        %v705 = vld [vmem:[%s4 + $0xc] sm:$0xf]
        %v706 = vld [vmem:[%s7] sm:$0x1]
        %v708 = vlaneseq
        %v709 = vshrl.u32 %v708, 7
        %v710 = vsub.s32 0, %v709
        %v711 = vrot.slane %v706, %v710
        %v717 = vunpack.c.l.b16 %v702
        %v718 = vunpack.c.l.b16 %v703
        %v719 = vunpack.c.l.b16 %v704
        %v720 = vunpack.c.l.b16 %v705
        %v721 = vpack.c.b16 %v718, %v717
        %v722 = vpack.c.b16 %v720, %v719
        %725 = vmatprep.subr.bf16.mxu0 0
        %726 = vmatpush1.bf16.msra.mxu0 %v721
        %727 = vmatprep.subr.bf16.mxu0 0
        %728 = vmatpush1.bf16.msra.mxu0 %v722
        %729 = vmatprep.subr.bf16.mxu0 0
        %730 = vmatpush1.bf16.msra.mxu0 0
        %731 = vmatprep.subr.bf16.mxu0 0
        %732 = vmatpush1.bf16.msra.mxu0 0
        %733 = vmatprep.subr.bf16.mxu0 0
        %734 = vmatpush1.bf16.msra.mxu0 0
        %735 = vmatprep.subr.bf16.mxu0 0
        %736 = vmatpush1.bf16.msra.mxu0 0
        %737 = vmatprep.subr.bf16.mxu0 0
        %738 = vmatpush1.bf16.msra.mxu0 0
        %739 = vmatprep.subr.bf16.mxu0 0
        %740 = vmatpush1.bf16.msra.mxu0 0
        %741 = vmatprep.subr.bf16.mxu0 0
        %742 = vmatpush1.bf16.msra.mxu0 0
        %743 = vmatprep.subr.bf16.mxu0 0
        %744 = vmatpush1.bf16.msra.mxu0 0
        %745 = vmatprep.subr.bf16.mxu0 0
        %746 = vmatpush1.bf16.msra.mxu0 0
        %747 = vmatprep.subr.bf16.mxu0 0
        %748 = vmatpush1.bf16.msra.mxu0 0
        %749 = vmatprep.subr.bf16.mxu0 0
        %750 = vmatpush1.bf16.msra.mxu0 0
        %751 = vmatprep.subr.bf16.mxu0 0
        %752 = vmatpush1.bf16.msra.mxu0 0
        %753 = vmatprep.subr.bf16.mxu0 0
        %754 = vmatpush1.bf16.msra.mxu0 0
        %755 = vmatprep.subr.bf16.mxu0 0
        %756 = vmatpush1.bf16.msra.mxu0 0
        %757 = vmatprep.mubr.bf16.mxu0 0
        %758 = vmatmul.mubr.bf16.gmra.mrb[0].mxu0 %v659
        %v759 = vpop.f32.mrb[0].mxu0
        %v760 = vadd.f32 %v711, %v759
        %v761 = vpop.f32.mrb[0].mxu0
        %v762 = vpop.f32.mrb[0].mxu0
        %v763 = vpop.f32.mrb[0].mxu0
        %764 = vdwg.mxu0
        %v765 = vpack.c.bf16 %v760, %v760
        %v766 = vld [vmem:[%s5] sm:$0xf]
        %v767 = vld [vmem:[%s5 + $0x4] sm:$0xf]
        %v768 = vld [vmem:[%s5 + $0x8] sm:$0xf]
        %v769 = vld [vmem:[%s5 + $0xc] sm:$0xf]
        %v770 = vld [vmem:[%s8] sm:$0x1]
        %v772 = vlaneseq
        %v773 = vshrl.u32 %v772, 7
        %v774 = vsub.s32 0, %v773
        %v775 = vrot.slane %v770, %v774
        %v781 = vunpack.c.l.b16 %v766
        %v782 = vunpack.c.l.b16 %v767
        %v783 = vunpack.c.l.b16 %v768
        %v784 = vunpack.c.l.b16 %v769
        %v785 = vpack.c.b16 %v782, %v781
        %v786 = vpack.c.b16 %v784, %v783
        %789 = vmatprep.subr.bf16.mxu0 0
        %790 = vmatpush1.bf16.msra.mxu0 %v785
        %791 = vmatprep.subr.bf16.mxu0 0
        %792 = vmatpush1.bf16.msra.mxu0 %v786
        %793 = vmatprep.subr.bf16.mxu0 0
        %794 = vmatpush1.bf16.msra.mxu0 0
        %795 = vmatprep.subr.bf16.mxu0 0
        %796 = vmatpush1.bf16.msra.mxu0 0
        %797 = vmatprep.subr.bf16.mxu0 0
        %798 = vmatpush1.bf16.msra.mxu0 0
        %799 = vmatprep.subr.bf16.mxu0 0
        %800 = vmatpush1.bf16.msra.mxu0 0
        %801 = vmatprep.subr.bf16.mxu0 0
        %802 = vmatpush1.bf16.msra.mxu0 0
        %803 = vmatprep.subr.bf16.mxu0 0
        %804 = vmatpush1.bf16.msra.mxu0 0
        %805 = vmatprep.subr.bf16.mxu0 0
        %806 = vmatpush1.bf16.msra.mxu0 0
        %807 = vmatprep.subr.bf16.mxu0 0
        %808 = vmatpush1.bf16.msra.mxu0 0
        %809 = vmatprep.subr.bf16.mxu0 0
        %810 = vmatpush1.bf16.msra.mxu0 0
        %811 = vmatprep.subr.bf16.mxu0 0
        %812 = vmatpush1.bf16.msra.mxu0 0
        %813 = vmatprep.subr.bf16.mxu0 0
        %814 = vmatpush1.bf16.msra.mxu0 0
        %815 = vmatprep.subr.bf16.mxu0 0
        %816 = vmatpush1.bf16.msra.mxu0 0
        %817 = vmatprep.subr.bf16.mxu0 0
        %818 = vmatpush1.bf16.msra.mxu0 0
        %819 = vmatprep.subr.bf16.mxu0 0
        %820 = vmatpush1.bf16.msra.mxu0 0
        %821 = vmatprep.mubr.bf16.mxu0 0
        %822 = vmatmul.mubr.bf16.gmra.mrb[0].mxu0 %v659
        %v823 = vpop.f32.mrb[0].mxu0
        %v824 = vadd.f32 %v775, %v823
        %v825 = vpop.f32.mrb[0].mxu0
        %v826 = vpop.f32.mrb[0].mxu0
        %v827 = vpop.f32.mrb[0].mxu0
        %828 = vdwg.mxu0
        %v829 = vpack.c.bf16 %v824, %v824
        %vm830 = vcmask 130048
        %v832 = vsel %vm830, %v701, 0
        %v835 = vsel %vm830, %v765, 0
        %837 = vmatprep.subr.bf16.mxu0 0
        %838 = vmatpush1.bf16.xpose.msra.mxu0 %v835
        %839 = vmatprep.subr.bf16.mxu0 0
        %840 = vmatpush1.bf16.xpose.msra.mxu0 0
        %841 = vmatprep.subr.bf16.mxu0 0
        %842 = vmatpush1.bf16.xpose.msra.mxu0 0
        %843 = vmatprep.subr.bf16.mxu0 0
        %844 = vmatpush1.bf16.xpose.msra.mxu0 0
        %845 = vmatprep.subr.bf16.mxu0 0
        %846 = vmatpush1.bf16.xpose.msra.mxu0 0
        %847 = vmatprep.subr.bf16.mxu0 0
        %848 = vmatpush1.bf16.xpose.msra.mxu0 0
        %849 = vmatprep.subr.bf16.mxu0 0
        %850 = vmatpush1.bf16.xpose.msra.mxu0 0
        %851 = vmatprep.subr.bf16.mxu0 0
        %852 = vmatpush1.bf16.xpose.msra.mxu0 0
        %853 = vmatprep.subr.bf16.mxu0 0
        %854 = vmatpush1.bf16.xpose.msra.mxu0 0
        %855 = vmatprep.subr.bf16.mxu0 0
        %856 = vmatpush1.bf16.xpose.msra.mxu0 0
        %857 = vmatprep.subr.bf16.mxu0 0
        %858 = vmatpush1.bf16.xpose.msra.mxu0 0
        %859 = vmatprep.subr.bf16.mxu0 0
        %860 = vmatpush1.bf16.xpose.msra.mxu0 0
        %861 = vmatprep.subr.bf16.mxu0 0
        %862 = vmatpush1.bf16.xpose.msra.mxu0 0
        %863 = vmatprep.subr.bf16.mxu0 0
        %864 = vmatpush1.bf16.xpose.msra.mxu0 0
        %865 = vmatprep.subr.bf16.mxu0 0
        %866 = vmatpush1.bf16.xpose.msra.mxu0 0
        %867 = vmatprep.subr.bf16.mxu0 0
        %868 = vmatpush1.bf16.xpose.msra.mxu0 0
        %869 = vmatprep.mubr.bf16.mxu0 0
        %870 = vmatmul.mubr.bf16.gmra.mrb[0].mxu0 %v832
        %v871 = vpop.f32.mrb[0].mxu0
        %v872 = vadd.f32 0.0, %v871
        %v873 = vpop.f32.mrb[0].mxu0
        %v874 = vpop.f32.mrb[0].mxu0
        %v875 = vpop.f32.mrb[0].mxu0
        %876 = vdwg.mxu0
        %vm877 = vcmp.gt.f32.partialorder %v632, 0.5
        %v878 = vsel %vm877, 1, 0
        %v879 = vlaneseq
        %v880 = vshrl.u32 %v879, 7
        %v881 = vsub.s32 0, %v880
        %v882 = vrot.slane %v878, %v881
        %vm883 = vcmp.eq.s32.totalorder %v882, 1
        %v884 = vsel %vm883, -1e+30, %v872
        %vm885 = vcmask 64512
        %v886 = vsel %vm885, %v884, -inf
        %887 = vmax.xlane.f32.xlu0 %v886
        %v888 = vpop.xlane.xlu0 %887
        %v889 = vsub.f32 %v884, %v888
        %v890 = vmul.f32 %v889, 1.442695
        %v891 = vpow.pop %v890
        %v892 = vsel %vm885, %v891, 0.0
        %893 = vadd.xlane.f32.xlu0 %v892
        %v894 = vpop.xlane.xlu0 %893
        %v895 = vrcp.pop %v894
        %v896 = vmul.f32 %v891, %v895
        %v897 = vpack.c.bf16 %v896, %v896
        %v899 = vsel %vm885, %v897, 0
        %vm901 = vcmask 1043456
        %v903 = vsel %vm901, %v829, 0
        %905 = vmatprep.subr.bf16.mxu0 0
        %906 = vmatpush1.bf16.msra.mxu0 %v903
        %907 = vmatprep.subr.bf16.mxu0 0
        %908 = vmatpush1.bf16.msra.mxu0 0
        %909 = vmatprep.subr.bf16.mxu0 0
        %910 = vmatpush1.bf16.msra.mxu0 0
        %911 = vmatprep.subr.bf16.mxu0 0
        %912 = vmatpush1.bf16.msra.mxu0 0
        %913 = vmatprep.subr.bf16.mxu0 0
        %914 = vmatpush1.bf16.msra.mxu0 0
        %915 = vmatprep.subr.bf16.mxu0 0
        %916 = vmatpush1.bf16.msra.mxu0 0
        %917 = vmatprep.subr.bf16.mxu0 0
        %918 = vmatpush1.bf16.msra.mxu0 0
        %919 = vmatprep.subr.bf16.mxu0 0
        %920 = vmatpush1.bf16.msra.mxu0 0
        %921 = vmatprep.subr.bf16.mxu0 0
        %922 = vmatpush1.bf16.msra.mxu0 0
        %923 = vmatprep.subr.bf16.mxu0 0
        %924 = vmatpush1.bf16.msra.mxu0 0
        %925 = vmatprep.subr.bf16.mxu0 0
        %926 = vmatpush1.bf16.msra.mxu0 0
        %927 = vmatprep.subr.bf16.mxu0 0
        %928 = vmatpush1.bf16.msra.mxu0 0
        %929 = vmatprep.subr.bf16.mxu0 0
        %930 = vmatpush1.bf16.msra.mxu0 0
        %931 = vmatprep.subr.bf16.mxu0 0
        %932 = vmatpush1.bf16.msra.mxu0 0
        %933 = vmatprep.subr.bf16.mxu0 0
        %934 = vmatpush1.bf16.msra.mxu0 0
        %935 = vmatprep.subr.bf16.mxu0 0
        %936 = vmatpush1.bf16.msra.mxu0 0
        %937 = vmatprep.mubr.bf16.mxu0 0
        %938 = vmatmul.mubr.bf16.gmra.mrb[0].mxu0 %v899
        %v939 = vpop.f32.mrb[0].mxu0
        %v940 = vadd.f32 0.0, %v939
        %v941 = vpop.f32.mrb[0].mxu0
        %v942 = vpop.f32.mrb[0].mxu0
        %v943 = vpop.f32.mrb[0].mxu0
        %944 = vdwg.mxu0
        %v945 = vpack.c.bf16 %v940, %v940
        %v946 = vld [vmem:[%s9] sm:$0xf]
        %v947 = vld [vmem:[%s9 + $0x4] sm:$0xf]
        %s948 = scalar_lea.vmem %s3, 16
        %v949 = vld [vmem:[%s948] sm:$0xf]
        %v950 = vld [vmem:[%s948 + $0x4] sm:$0xf]
        %v951 = vld [vmem:[%s948 + $0x8] sm:$0xf]
        %v952 = vld [vmem:[%s948 + $0xc] sm:$0xf]
        %s953 = scalar_lea.vmem %s6, 1
        %v954 = vld [vmem:[%s953] sm:$0x1]
        %v956 = vlaneseq
        %v957 = vshrl.u32 %v956, 7
        %v958 = vsub.s32 0, %v957
        %v959 = vrot.slane %v954, %v958
        %v965 = vunpack.c.l.b16 %v949
        %v966 = vunpack.c.l.b16 %v950
        %v967 = vunpack.c.l.b16 %v951
        %v968 = vunpack.c.l.b16 %v952
        %v969 = vpack.c.b16 %v966, %v965
        %v970 = vpack.c.b16 %v968, %v967
        %973 = vmatprep.subr.bf16.mxu0 0
        %974 = vmatpush1.bf16.msra.mxu0 %v969
        %975 = vmatprep.subr.bf16.mxu0 0
        %976 = vmatpush1.bf16.msra.mxu0 %v970
        %977 = vmatprep.subr.bf16.mxu0 0
        %978 = vmatpush1.bf16.msra.mxu0 0
        %979 = vmatprep.subr.bf16.mxu0 0
        %980 = vmatpush1.bf16.msra.mxu0 0
        %981 = vmatprep.subr.bf16.mxu0 0
        %982 = vmatpush1.bf16.msra.mxu0 0
        %983 = vmatprep.subr.bf16.mxu0 0
        %984 = vmatpush1.bf16.msra.mxu0 0
        %985 = vmatprep.subr.bf16.mxu0 0
        %986 = vmatpush1.bf16.msra.mxu0 0
        %987 = vmatprep.subr.bf16.mxu0 0
        %988 = vmatpush1.bf16.msra.mxu0 0
        %989 = vmatprep.subr.bf16.mxu0 0
        %990 = vmatpush1.bf16.msra.mxu0 0
        %991 = vmatprep.subr.bf16.mxu0 0
        %992 = vmatpush1.bf16.msra.mxu0 0
        %993 = vmatprep.subr.bf16.mxu0 0
        %994 = vmatpush1.bf16.msra.mxu0 0
        %995 = vmatprep.subr.bf16.mxu0 0
        %996 = vmatpush1.bf16.msra.mxu0 0
        %997 = vmatprep.subr.bf16.mxu0 0
        %998 = vmatpush1.bf16.msra.mxu0 0
        %999 = vmatprep.subr.bf16.mxu0 0
        %1000 = vmatpush1.bf16.msra.mxu0 0
        %1001 = vmatprep.subr.bf16.mxu0 0
        %1002 = vmatpush1.bf16.msra.mxu0 0
        %1003 = vmatprep.subr.bf16.mxu0 0
        %1004 = vmatpush1.bf16.msra.mxu0 0
        %1005 = vmatprep.mubr.bf16.mxu0 0
        %1006 = vmatmul.mubr.bf16.gmra.mrb[0].mxu0 %v659
        %v1007 = vpop.f32.mrb[0].mxu0
        %v1008 = vadd.f32 %v959, %v1007
        %v1009 = vpop.f32.mrb[0].mxu0
        %v1010 = vpop.f32.mrb[0].mxu0
        %v1011 = vpop.f32.mrb[0].mxu0
        %1012 = vdwg.mxu0
        %v1013 = vpack.c.bf16 %v1008, %v1008
        %s1014 = scalar_lea.vmem %s4, 16
        %v1015 = vld [vmem:[%s1014] sm:$0xf]
        %v1016 = vld [vmem:[%s1014 + $0x4] sm:$0xf]
        %v1017 = vld [vmem:[%s1014 + $0x8] sm:$0xf]
        %v1018 = vld [vmem:[%s1014 + $0xc] sm:$0xf]
        %s1019 = scalar_lea.vmem %s7, 1
        %v1020 = vld [vmem:[%s1019] sm:$0x1]
        %v1022 = vlaneseq
        %v1023 = vshrl.u32 %v1022, 7
        %v1024 = vsub.s32 0, %v1023
        %v1025 = vrot.slane %v1020, %v1024
        %v1031 = vunpack.c.l.b16 %v1015
        %v1032 = vunpack.c.l.b16 %v1016
        %v1033 = vunpack.c.l.b16 %v1017
        %v1034 = vunpack.c.l.b16 %v1018
        %v1035 = vpack.c.b16 %v1032, %v1031
        %v1036 = vpack.c.b16 %v1034, %v1033
        %1039 = vmatprep.subr.bf16.mxu0 0
        %1040 = vmatpush1.bf16.msra.mxu0 %v1035
        %1041 = vmatprep.subr.bf16.mxu0 0
        %1042 = vmatpush1.bf16.msra.mxu0 %v1036
        %1043 = vmatprep.subr.bf16.mxu0 0
        %1044 = vmatpush1.bf16.msra.mxu0 0
        %1045 = vmatprep.subr.bf16.mxu0 0
        %1046 = vmatpush1.bf16.msra.mxu0 0
        %1047 = vmatprep.subr.bf16.mxu0 0
        %1048 = vmatpush1.bf16.msra.mxu0 0
        %1049 = vmatprep.subr.bf16.mxu0 0
        %1050 = vmatpush1.bf16.msra.mxu0 0
        %1051 = vmatprep.subr.bf16.mxu0 0
        %1052 = vmatpush1.bf16.msra.mxu0 0
        %1053 = vmatprep.subr.bf16.mxu0 0
        %1054 = vmatpush1.bf16.msra.mxu0 0
        %1055 = vmatprep.subr.bf16.mxu0 0
        %1056 = vmatpush1.bf16.msra.mxu0 0
        %1057 = vmatprep.subr.bf16.mxu0 0
        %1058 = vmatpush1.bf16.msra.mxu0 0
        %1059 = vmatprep.subr.bf16.mxu0 0
        %1060 = vmatpush1.bf16.msra.mxu0 0
        %1061 = vmatprep.subr.bf16.mxu0 0
        %1062 = vmatpush1.bf16.msra.mxu0 0
        %1063 = vmatprep.subr.bf16.mxu0 0
        %1064 = vmatpush1.bf16.msra.mxu0 0
        %1065 = vmatprep.subr.bf16.mxu0 0
        %1066 = vmatpush1.bf16.msra.mxu0 0
        %1067 = vmatprep.subr.bf16.mxu0 0
        %1068 = vmatpush1.bf16.msra.mxu0 0
        %1069 = vmatprep.subr.bf16.mxu0 0
        %1070 = vmatpush1.bf16.msra.mxu0 0
        %1071 = vmatprep.mubr.bf16.mxu0 0
        %1072 = vmatmul.mubr.bf16.gmra.mrb[0].mxu0 %v659
        %v1073 = vpop.f32.mrb[0].mxu0
        %v1074 = vadd.f32 %v1025, %v1073
        %v1075 = vpop.f32.mrb[0].mxu0
        %v1076 = vpop.f32.mrb[0].mxu0
        %v1077 = vpop.f32.mrb[0].mxu0
        %1078 = vdwg.mxu0
        %v1079 = vpack.c.bf16 %v1074, %v1074
        %s1080 = scalar_lea.vmem %s5, 16
        %v1081 = vld [vmem:[%s1080] sm:$0xf]
        %v1082 = vld [vmem:[%s1080 + $0x4] sm:$0xf]
        %v1083 = vld [vmem:[%s1080 + $0x8] sm:$0xf]
        %v1084 = vld [vmem:[%s1080 + $0xc] sm:$0xf]
        %s1085 = scalar_lea.vmem %s8, 1
        %v1086 = vld [vmem:[%s1085] sm:$0x1]
        %v1088 = vlaneseq
        %v1089 = vshrl.u32 %v1088, 7
        %v1090 = vsub.s32 0, %v1089
        %v1091 = vrot.slane %v1086, %v1090
        %v1097 = vunpack.c.l.b16 %v1081
        %v1098 = vunpack.c.l.b16 %v1082
        %v1099 = vunpack.c.l.b16 %v1083
        %v1100 = vunpack.c.l.b16 %v1084
        %v1101 = vpack.c.b16 %v1098, %v1097
        %v1102 = vpack.c.b16 %v1100, %v1099
        %1105 = vmatprep.subr.bf16.mxu0 0
        %1106 = vmatpush1.bf16.msra.mxu0 %v1101
        %1107 = vmatprep.subr.bf16.mxu0 0
        %1108 = vmatpush1.bf16.msra.mxu0 %v1102
        %1109 = vmatprep.subr.bf16.mxu0 0
        %1110 = vmatpush1.bf16.msra.mxu0 0
        %1111 = vmatprep.subr.bf16.mxu0 0
        %1112 = vmatpush1.bf16.msra.mxu0 0
        %1113 = vmatprep.subr.bf16.mxu0 0
        %1114 = vmatpush1.bf16.msra.mxu0 0
        %1115 = vmatprep.subr.bf16.mxu0 0
        %1116 = vmatpush1.bf16.msra.mxu0 0
        %1117 = vmatprep.subr.bf16.mxu0 0
        %1118 = vmatpush1.bf16.msra.mxu0 0
        %1119 = vmatprep.subr.bf16.mxu0 0
        %1120 = vmatpush1.bf16.msra.mxu0 0
        %1121 = vmatprep.subr.bf16.mxu0 0
        %1122 = vmatpush1.bf16.msra.mxu0 0
        %1123 = vmatprep.subr.bf16.mxu0 0
        %1124 = vmatpush1.bf16.msra.mxu0 0
        %1125 = vmatprep.subr.bf16.mxu0 0
        %1126 = vmatpush1.bf16.msra.mxu0 0
        %1127 = vmatprep.subr.bf16.mxu0 0
        %1128 = vmatpush1.bf16.msra.mxu0 0
        %1129 = vmatprep.subr.bf16.mxu0 0
        %1130 = vmatpush1.bf16.msra.mxu0 0
        %1131 = vmatprep.subr.bf16.mxu0 0
        %1132 = vmatpush1.bf16.msra.mxu0 0
        %1133 = vmatprep.subr.bf16.mxu0 0
        %1134 = vmatpush1.bf16.msra.mxu0 0
        %1135 = vmatprep.subr.bf16.mxu0 0
        %1136 = vmatpush1.bf16.msra.mxu0 0
        %1137 = vmatprep.mubr.bf16.mxu0 0
        %1138 = vmatmul.mubr.bf16.gmra.mrb[0].mxu0 %v659
        %v1139 = vpop.f32.mrb[0].mxu0
        %v1140 = vadd.f32 %v1091, %v1139
        %v1141 = vpop.f32.mrb[0].mxu0
        %v1142 = vpop.f32.mrb[0].mxu0
        %v1143 = vpop.f32.mrb[0].mxu0
        %1144 = vdwg.mxu0
        %v1145 = vpack.c.bf16 %v1140, %v1140
        %v1147 = vsel %vm830, %v1013, 0
        %v1150 = vsel %vm830, %v1079, 0
        %1152 = vmatprep.subr.bf16.mxu0 0
        %1153 = vmatpush1.bf16.xpose.msra.mxu0 %v1150
        %1154 = vmatprep.subr.bf16.mxu0 0
        %1155 = vmatpush1.bf16.xpose.msra.mxu0 0
        %1156 = vmatprep.subr.bf16.mxu0 0
        %1157 = vmatpush1.bf16.xpose.msra.mxu0 0
        %1158 = vmatprep.subr.bf16.mxu0 0
        %1159 = vmatpush1.bf16.xpose.msra.mxu0 0
        %1160 = vmatprep.subr.bf16.mxu0 0
        %1161 = vmatpush1.bf16.xpose.msra.mxu0 0
        %1162 = vmatprep.subr.bf16.mxu0 0
        %1163 = vmatpush1.bf16.xpose.msra.mxu0 0
        %1164 = vmatprep.subr.bf16.mxu0 0
        %1165 = vmatpush1.bf16.xpose.msra.mxu0 0
        %1166 = vmatprep.subr.bf16.mxu0 0
        %1167 = vmatpush1.bf16.xpose.msra.mxu0 0
        %1168 = vmatprep.subr.bf16.mxu0 0
        %1169 = vmatpush1.bf16.xpose.msra.mxu0 0
        %1170 = vmatprep.subr.bf16.mxu0 0
        %1171 = vmatpush1.bf16.xpose.msra.mxu0 0
        %1172 = vmatprep.subr.bf16.mxu0 0
        %1173 = vmatpush1.bf16.xpose.msra.mxu0 0
        %1174 = vmatprep.subr.bf16.mxu0 0
        %1175 = vmatpush1.bf16.xpose.msra.mxu0 0
        %1176 = vmatprep.subr.bf16.mxu0 0
        %1177 = vmatpush1.bf16.xpose.msra.mxu0 0
        %1178 = vmatprep.subr.bf16.mxu0 0
        %1179 = vmatpush1.bf16.xpose.msra.mxu0 0
        %1180 = vmatprep.subr.bf16.mxu0 0
        %1181 = vmatpush1.bf16.xpose.msra.mxu0 0
        %1182 = vmatprep.subr.bf16.mxu0 0
        %1183 = vmatpush1.bf16.xpose.msra.mxu0 0
        %1184 = vmatprep.mubr.bf16.mxu0 0
        %1185 = vmatmul.mubr.bf16.gmra.mrb[0].mxu0 %v1147
        %v1186 = vpop.f32.mrb[0].mxu0
        %v1187 = vadd.f32 0.0, %v1186
        %v1188 = vpop.f32.mrb[0].mxu0
        %v1189 = vpop.f32.mrb[0].mxu0
        %v1190 = vpop.f32.mrb[0].mxu0
        %1191 = vdwg.mxu0
        %v1192 = vsel %vm883, -1e+30, %v1187
        %v1193 = vsel %vm885, %v1192, -inf
        %1194 = vmax.xlane.f32.xlu0 %v1193
        %v1195 = vpop.xlane.xlu0 %1194
        %v1196 = vsub.f32 %v1192, %v1195
        %v1197 = vmul.f32 %v1196, 1.442695
        %v1198 = vpow.pop %v1197
        %v1199 = vsel %vm885, %v1198, 0.0
        %1200 = vadd.xlane.f32.xlu0 %v1199
        %v1201 = vpop.xlane.xlu0 %1200
        %v1202 = vrcp.pop %v1201
        %v1203 = vmul.f32 %v1198, %v1202
        %v1204 = vpack.c.bf16 %v1203, %v1203
        %v1206 = vsel %vm885, %v1204, 0
        %v1209 = vsel %vm901, %v1145, 0
        %1211 = vmatprep.subr.bf16.mxu0 0
        %1212 = vmatpush1.bf16.msra.mxu0 %v1209
        %1213 = vmatprep.subr.bf16.mxu0 0
        %1214 = vmatpush1.bf16.msra.mxu0 0
        %1215 = vmatprep.subr.bf16.mxu0 0
        %1216 = vmatpush1.bf16.msra.mxu0 0
        %1217 = vmatprep.subr.bf16.mxu0 0
        %1218 = vmatpush1.bf16.msra.mxu0 0
        %1219 = vmatprep.subr.bf16.mxu0 0
        %1220 = vmatpush1.bf16.msra.mxu0 0
        %1221 = vmatprep.subr.bf16.mxu0 0
        %1222 = vmatpush1.bf16.msra.mxu0 0
        %1223 = vmatprep.subr.bf16.mxu0 0
        %1224 = vmatpush1.bf16.msra.mxu0 0
        %1225 = vmatprep.subr.bf16.mxu0 0
        %1226 = vmatpush1.bf16.msra.mxu0 0
        %1227 = vmatprep.subr.bf16.mxu0 0
        %1228 = vmatpush1.bf16.msra.mxu0 0
        %1229 = vmatprep.subr.bf16.mxu0 0
        %1230 = vmatpush1.bf16.msra.mxu0 0
        %1231 = vmatprep.subr.bf16.mxu0 0
        %1232 = vmatpush1.bf16.msra.mxu0 0
        %1233 = vmatprep.subr.bf16.mxu0 0
        %1234 = vmatpush1.bf16.msra.mxu0 0
        %1235 = vmatprep.subr.bf16.mxu0 0
        %1236 = vmatpush1.bf16.msra.mxu0 0
        %1237 = vmatprep.subr.bf16.mxu0 0
        %1238 = vmatpush1.bf16.msra.mxu0 0
        %1239 = vmatprep.subr.bf16.mxu0 0
        %1240 = vmatpush1.bf16.msra.mxu0 0
        %1241 = vmatprep.subr.bf16.mxu0 0
        %1242 = vmatpush1.bf16.msra.mxu0 0
        %1243 = vmatprep.mubr.bf16.mxu0 0
        %1244 = vmatmul.mubr.bf16.gmra.mrb[0].mxu0 %v1206
        %v1245 = vpop.f32.mrb[0].mxu0
        %v1246 = vadd.f32 0.0, %v1245
        %v1247 = vpop.f32.mrb[0].mxu0
        %v1248 = vpop.f32.mrb[0].mxu0
        %v1249 = vpop.f32.mrb[0].mxu0
        %1250 = vdwg.mxu0
        %v1251 = vpack.c.bf16 %v1246, %v1246
        %s1252 = scalar_lea.vmem %s9, 8
        %v1253 = vld [vmem:[%s1252] sm:$0xf]
        %v1254 = vld [vmem:[%s1252 + $0x4] sm:$0xf]
        %v1257 = vunpack.c.l.b16 %v1253
        %v1258 = vunpack.c.l.b16 %v1254
        %v1259 = vpack.c.b16 %v1258, %v1257
        %v1262 = vsel %vm830, %v1251, 0
        %1264 = vmatprep.subr.bf16.mxu0 0
        %1265 = vmatpush1.bf16.msra.mxu0 %v1259
        %1266 = vmatprep.subr.bf16.mxu0 0
        %1267 = vmatpush1.bf16.msra.mxu0 0
        %1268 = vmatprep.subr.bf16.mxu0 0
        %1269 = vmatpush1.bf16.msra.mxu0 0
        %1270 = vmatprep.subr.bf16.mxu0 0
        %1271 = vmatpush1.bf16.msra.mxu0 0
        %1272 = vmatprep.subr.bf16.mxu0 0
        %1273 = vmatpush1.bf16.msra.mxu0 0
        %1274 = vmatprep.subr.bf16.mxu0 0
        %1275 = vmatpush1.bf16.msra.mxu0 0
        %1276 = vmatprep.subr.bf16.mxu0 0
        %1277 = vmatpush1.bf16.msra.mxu0 0
        %1278 = vmatprep.subr.bf16.mxu0 0
        %1279 = vmatpush1.bf16.msra.mxu0 0
        %1280 = vmatprep.subr.bf16.mxu0 0
        %1281 = vmatpush1.bf16.msra.mxu0 0
        %1282 = vmatprep.subr.bf16.mxu0 0
        %1283 = vmatpush1.bf16.msra.mxu0 0
        %1284 = vmatprep.subr.bf16.mxu0 0
        %1285 = vmatpush1.bf16.msra.mxu0 0
        %1286 = vmatprep.subr.bf16.mxu0 0
        %1287 = vmatpush1.bf16.msra.mxu0 0
        %1288 = vmatprep.subr.bf16.mxu0 0
        %1289 = vmatpush1.bf16.msra.mxu0 0
        %1290 = vmatprep.subr.bf16.mxu0 0
        %1291 = vmatpush1.bf16.msra.mxu0 0
        %1292 = vmatprep.subr.bf16.mxu0 0
        %1293 = vmatpush1.bf16.msra.mxu0 0
        %1294 = vmatprep.subr.bf16.mxu0 0
        %1295 = vmatpush1.bf16.msra.mxu0 0
        %1296 = vmatprep.mubr.bf16.mxu0 0
        %1297 = vmatmul.mubr.bf16.gmra.mrb[0].mxu0 %v1262
        %v1298 = vpop.f32.mrb[0].mxu0
        %v1299 = vadd.f32 0.0, %v1298
        %v1300 = vpop.f32.mrb[0].mxu0
        %v1301 = vpop.f32.mrb[0].mxu0
        %v1302 = vpop.f32.mrb[0].mxu0
        %1303 = vdwg.mxu0
        %v1306 = vunpack.c.l.b16 %v946
        %v1307 = vunpack.c.l.b16 %v947
        %v1308 = vpack.c.b16 %v1307, %v1306
        %v1311 = vsel %vm830, %v945, 0
        %1313 = vmatprep.subr.bf16.mxu0 0
        %1314 = vmatpush1.bf16.msra.mxu0 %v1308
        %1315 = vmatprep.subr.bf16.mxu0 0
        %1316 = vmatpush1.bf16.msra.mxu0 0
        %1317 = vmatprep.subr.bf16.mxu0 0
        %1318 = vmatpush1.bf16.msra.mxu0 0
        %1319 = vmatprep.subr.bf16.mxu0 0
        %1320 = vmatpush1.bf16.msra.mxu0 0
        %1321 = vmatprep.subr.bf16.mxu0 0
        %1322 = vmatpush1.bf16.msra.mxu0 0
        %1323 = vmatprep.subr.bf16.mxu0 0
        %1324 = vmatpush1.bf16.msra.mxu0 0
        %1325 = vmatprep.subr.bf16.mxu0 0
        %1326 = vmatpush1.bf16.msra.mxu0 0
        %1327 = vmatprep.subr.bf16.mxu0 0
        %1328 = vmatpush1.bf16.msra.mxu0 0
        %1329 = vmatprep.subr.bf16.mxu0 0
        %1330 = vmatpush1.bf16.msra.mxu0 0
        %1331 = vmatprep.subr.bf16.mxu0 0
        %1332 = vmatpush1.bf16.msra.mxu0 0
        %1333 = vmatprep.subr.bf16.mxu0 0
        %1334 = vmatpush1.bf16.msra.mxu0 0
        %1335 = vmatprep.subr.bf16.mxu0 0
        %1336 = vmatpush1.bf16.msra.mxu0 0
        %1337 = vmatprep.subr.bf16.mxu0 0
        %1338 = vmatpush1.bf16.msra.mxu0 0
        %1339 = vmatprep.subr.bf16.mxu0 0
        %1340 = vmatpush1.bf16.msra.mxu0 0
        %1341 = vmatprep.subr.bf16.mxu0 0
        %1342 = vmatpush1.bf16.msra.mxu0 0
        %1343 = vmatprep.subr.bf16.mxu0 0
        %1344 = vmatpush1.bf16.msra.mxu0 0
        %1345 = vmatprep.mubr.bf16.mxu0 0
        %1346 = vmatmul.mubr.bf16.gmra.mrb[0].mxu0 %v1311
        %v1347 = vpop.f32.mrb[0].mxu0
        %v1348 = vadd.f32 %v1299, %v1347
        %v1349 = vpop.f32.mrb[0].mxu0
        %v1350 = vpop.f32.mrb[0].mxu0
        %v1351 = vpop.f32.mrb[0].mxu0
        %1352 = vdwg.mxu0
        %v1353 = vld [vmem:[%s10] sm:$0x1]
        %v1355 = vlaneseq
        %v1356 = vshrl.u32 %v1355, 7
        %v1357 = vsub.s32 0, %v1356
        %v1358 = vrot.slane %v1353, %v1357
        %v1360 = vadd.f32 %v1348, %v1358
        %v1361 = vadd.f32 %v1360, %v630
        %v1362 = vld [vmem:[%s11] sm:$0x1]
        %v1363 = vld [vmem:[%s12] sm:$0x1]
        %v1364 = vsel %vm657, %v1361, 0.0
        %1365 = vadd.xlane.f32.xlu0 %v1364
        %v1366 = vpop.xlane.xlu0 %1365
        %v1367 = vrcp.pop 32.0
        %v1368 = vmul.f32 %v1366, %v1367
        %v1369 = vsub.f32 %v1361, %v1368
        %v1370 = vmul.f32 %v1369, %v1369
        %v1371 = vsel %vm657, %v1370, 0.0
        %1372 = vadd.xlane.f32.xlu0 %v1371
        %v1373 = vpop.xlane.xlu0 %1372
        %v1374 = vmul.f32 %v1373, %v1367
        %v1375 = vadd.f32 %v1374, 1e-05
        %v1376 = vrsqrt.pop %v1375
        %v1377 = vmul.f32 %v1369, %v1376
        %v1379 = vlaneseq
        %v1380 = vshrl.u32 %v1379, 7
        %v1381 = vsub.s32 0, %v1380
        %v1382 = vrot.slane %v1362, %v1381
        %v1384 = vmul.f32 %v1377, %v1382
        %v1386 = vlaneseq
        %v1387 = vshrl.u32 %v1386, 7
        %v1388 = vsub.s32 0, %v1387
        %v1389 = vrot.slane %v1363, %v1388
        %v1391 = vadd.f32 %v1384, %v1389
        %1393 = vset.pattern.permute.xlu0 0
        %1394 = vperm.xlu0 %1393, %v633
        %v1395 = vpop.permute.xlu0 %1394
        %v1397 = vmul.f32 %v1391, %v1395
        %v1398 = vpack.c.bf16 %v1397, %v1397
        %v1399 = vld [vmem:[%s13] sm:$0xf]
        %v1400 = vld [vmem:[%s13 + $0x4] sm:$0xf]
        %v1401 = vld [vmem:[%s13 + $0x8] sm:$0xf]
        %v1402 = vld [vmem:[%s13 + $0xc] sm:$0xf]
        %v1403 = vld [vmem:[%s13 + $0x10] sm:$0xf]
        %v1404 = vld [vmem:[%s13 + $0x14] sm:$0xf]
        %v1405 = vld [vmem:[%s13 + $0x18] sm:$0xf]
        %v1406 = vld [vmem:[%s13 + $0x1c] sm:$0xf]
        %v1407 = vld [vmem:[%s13 + $0x20] sm:$0xf]
        %v1408 = vld [vmem:[%s13 + $0x24] sm:$0xf]
        %v1409 = vld [vmem:[%s13 + $0x28] sm:$0xf]
        %v1410 = vld [vmem:[%s13 + $0x2c] sm:$0xf]
        %v1411 = vld [vmem:[%s14] sm:$0x1]
        %v1413 = vshrl.u32 %v1398, 16
        %v1415 = vrot.slane %v1413, 7
        %v1416 = vshll.u32 %v1398, 16
        %v1418 = vor.u32 %v1415, %v1416
        %vm1420 = vcmask 1040384
        %vm1421 = vsmask.f32 256
        %vm1422 = vmand %vm1420, %vm1421
        %v1423 = vsel %vm1422, 0, %v1418
        %vm1424 = vcmask 1044480
        %vm1425 = vsmask.f32 4352
        %vm1426 = vmand %vm1424, %vm1425
        %v1427 = vsel %vm1426, %v1423, 0
        %v1429 = vshrl.u32 %v1427, 16
        %v1431 = vshll.u32 %v1427, 16
        %v1433 = vrot.slane %v1431, 1
        %v1434 = vor.u32 %v1429, %v1433
        %1435 = vrot.lane.b32.xlu0 %v1434, 32
        %v1436 = vpop.permute.xlu0 %1435
        %v1438 = vrot.slane %v1427, 1
        %1439 = vrot.lane.b32.xlu0 %v1438, 64
        %v1440 = vpop.permute.xlu0 %1439
        %v1442 = vsel %vm657, %v1427, %v1436
        %vm1443 = vcmask 523264
        %v1445 = vsel %vm1443, %v1442, %v1440
        %v1447 = vlaneseq
        %v1448 = vshrl.u32 %v1447, 7
        %v1449 = vsub.s32 0, %v1448
        %v1450 = vrot.slane %v1411, %v1449
        %v1464 = vunpack.c.l.b16 %v1399
        %v1465 = vunpack.c.l.b16 %v1400
        %v1466 = vunpack.c.l.b16 %v1401
        %v1467 = vunpack.c.l.b16 %v1402
        %v1468 = vunpack.c.l.b16 %v1403
        %v1469 = vunpack.c.l.b16 %v1404
        %v1470 = vunpack.c.l.b16 %v1405
        %v1471 = vunpack.c.l.b16 %v1406
        %v1472 = vunpack.c.l.b16 %v1407
        %v1473 = vunpack.c.l.b16 %v1408
        %v1474 = vunpack.c.l.b16 %v1409
        %v1475 = vunpack.c.l.b16 %v1410
        %v1476 = vpack.c.b16 %v1465, %v1464
        %v1477 = vpack.c.b16 %v1467, %v1466
        %v1478 = vpack.c.b16 %v1469, %v1468
        %v1479 = vpack.c.b16 %v1471, %v1470
        %v1480 = vpack.c.b16 %v1473, %v1472
        %v1481 = vpack.c.b16 %v1475, %v1474
        %vm1488 = vcmask 785408
        %v1489 = vsel %vm1488, %v1445, 0
        %1491 = vmatprep.subr.bf16.mxu0 0
        %1492 = vmatpush1.bf16.msra.mxu0 %v1476
        %1493 = vmatprep.subr.bf16.mxu0 0
        %1494 = vmatpush1.bf16.msra.mxu0 %v1477
        %1495 = vmatprep.subr.bf16.mxu0 0
        %1496 = vmatpush1.bf16.msra.mxu0 %v1478
        %1497 = vmatprep.subr.bf16.mxu0 0
        %1498 = vmatpush1.bf16.msra.mxu0 %v1479
        %1499 = vmatprep.subr.bf16.mxu0 0
        %1500 = vmatpush1.bf16.msra.mxu0 %v1480
        %1501 = vmatprep.subr.bf16.mxu0 0
        %1502 = vmatpush1.bf16.msra.mxu0 %v1481
        %1503 = vmatprep.subr.bf16.mxu0 0
        %1504 = vmatpush1.bf16.msra.mxu0 0
        %1505 = vmatprep.subr.bf16.mxu0 0
        %1506 = vmatpush1.bf16.msra.mxu0 0
        %1507 = vmatprep.subr.bf16.mxu0 0
        %1508 = vmatpush1.bf16.msra.mxu0 0
        %1509 = vmatprep.subr.bf16.mxu0 0
        %1510 = vmatpush1.bf16.msra.mxu0 0
        %1511 = vmatprep.subr.bf16.mxu0 0
        %1512 = vmatpush1.bf16.msra.mxu0 0
        %1513 = vmatprep.subr.bf16.mxu0 0
        %1514 = vmatpush1.bf16.msra.mxu0 0
        %1515 = vmatprep.subr.bf16.mxu0 0
        %1516 = vmatpush1.bf16.msra.mxu0 0
        %1517 = vmatprep.subr.bf16.mxu0 0
        %1518 = vmatpush1.bf16.msra.mxu0 0
        %1519 = vmatprep.subr.bf16.mxu0 0
        %1520 = vmatpush1.bf16.msra.mxu0 0
        %1521 = vmatprep.subr.bf16.mxu0 0
        %1522 = vmatpush1.bf16.msra.mxu0 0
        %1523 = vmatprep.mubr.bf16.mxu0 0
        %1524 = vmatmul.mubr.bf16.gmra.mrb[0].mxu0 %v1489
        %v1525 = vpop.f32.mrb[0].mxu0
        %v1526 = vadd.f32 %v1450, %v1525
        %v1527 = vpop.f32.mrb[0].mxu0
        %v1528 = vpop.f32.mrb[0].mxu0
        %v1529 = vpop.f32.mrb[0].mxu0
        %1530 = vdwg.mxu0
        %v1531 = vmax.f32 %v1526, 0.0
        %v1532 = vpack.c.bf16 %v1531, %v1531
        %v1533 = vld [vmem:[%s15] sm:$0xf]
        %v1534 = vld [vmem:[%s15 + $0x4] sm:$0xf]
        %v1535 = vld [vmem:[%s15 + $0x8] sm:$0xf]
        %v1536 = vld [vmem:[%s15 + $0xc] sm:$0xf]
        %v1537 = vld [vmem:[%s15 + $0x10] sm:$0xf]
        %v1538 = vld [vmem:[%s15 + $0x14] sm:$0xf]
        %v1539 = vld [vmem:[%s15 + $0x18] sm:$0xf]
        %v1540 = vld [vmem:[%s15 + $0x1c] sm:$0xf]
        %v1541 = vld [vmem:[%s16] sm:$0x1]
        %v1543 = vlaneseq
        %v1544 = vshrl.u32 %v1543, 7
        %v1545 = vsub.s32 0, %v1544
        %v1546 = vrot.slane %v1541, %v1545
        %v1556 = vunpack.c.l.b16 %v1533
        %v1557 = vunpack.c.l.b16 %v1534
        %v1558 = vunpack.c.l.b16 %v1535
        %v1559 = vunpack.c.l.b16 %v1536
        %v1560 = vunpack.c.l.b16 %v1537
        %v1561 = vunpack.c.l.b16 %v1538
        %v1562 = vunpack.c.l.b16 %v1539
        %v1563 = vunpack.c.l.b16 %v1540
        %v1564 = vpack.c.b16 %v1557, %v1556
        %v1565 = vpack.c.b16 %v1559, %v1558
        %v1566 = vpack.c.b16 %v1561, %v1560
        %v1567 = vpack.c.b16 %v1563, %v1562
        %v1573 = vsel %vm1443, %v1532, 0
        %1575 = vmatprep.subr.bf16.mxu0 0
        %1576 = vmatpush1.bf16.msra.mxu0 %v1564
        %1577 = vmatprep.subr.bf16.mxu0 0
        %1578 = vmatpush1.bf16.msra.mxu0 %v1565
        %1579 = vmatprep.subr.bf16.mxu0 0
        %1580 = vmatpush1.bf16.msra.mxu0 %v1566
        %1581 = vmatprep.subr.bf16.mxu0 0
        %1582 = vmatpush1.bf16.msra.mxu0 %v1567
        %1583 = vmatprep.subr.bf16.mxu0 0
        %1584 = vmatpush1.bf16.msra.mxu0 0
        %1585 = vmatprep.subr.bf16.mxu0 0
        %1586 = vmatpush1.bf16.msra.mxu0 0
        %1587 = vmatprep.subr.bf16.mxu0 0
        %1588 = vmatpush1.bf16.msra.mxu0 0
        %1589 = vmatprep.subr.bf16.mxu0 0
        %1590 = vmatpush1.bf16.msra.mxu0 0
        %1591 = vmatprep.subr.bf16.mxu0 0
        %1592 = vmatpush1.bf16.msra.mxu0 0
        %1593 = vmatprep.subr.bf16.mxu0 0
        %1594 = vmatpush1.bf16.msra.mxu0 0
        %1595 = vmatprep.subr.bf16.mxu0 0
        %1596 = vmatpush1.bf16.msra.mxu0 0
        %1597 = vmatprep.subr.bf16.mxu0 0
        %1598 = vmatpush1.bf16.msra.mxu0 0
        %1599 = vmatprep.subr.bf16.mxu0 0
        %1600 = vmatpush1.bf16.msra.mxu0 0
        %1601 = vmatprep.subr.bf16.mxu0 0
        %1602 = vmatpush1.bf16.msra.mxu0 0
        %1603 = vmatprep.subr.bf16.mxu0 0
        %1604 = vmatpush1.bf16.msra.mxu0 0
        %1605 = vmatprep.subr.bf16.mxu0 0
        %1606 = vmatpush1.bf16.msra.mxu0 0
        %1607 = vmatprep.mubr.bf16.mxu0 0
        %1608 = vmatmul.mubr.bf16.gmra.mrb[0].mxu0 %v1573
        %v1609 = vpop.f32.mrb[0].mxu0
        %v1610 = vadd.f32 %v1546, %v1609
        %v1611 = vpop.f32.mrb[0].mxu0
        %v1612 = vpop.f32.mrb[0].mxu0
        %v1613 = vpop.f32.mrb[0].mxu0
        %1614 = vdwg.mxu0
        %v1615 = vadd.f32 %v1610, %v1397
        %v1616 = vld [vmem:[%s17] sm:$0x1]
        %v1617 = vld [vmem:[%s18] sm:$0x1]
        %v1618 = vsel %vm657, %v1615, 0.0
        %1619 = vadd.xlane.f32.xlu0 %v1618
        %v1620 = vpop.xlane.xlu0 %1619
        %v1621 = vmul.f32 %v1620, %v1367
        %v1622 = vsub.f32 %v1615, %v1621
        %v1623 = vmul.f32 %v1622, %v1622
        %v1624 = vsel %vm657, %v1623, 0.0
        %1625 = vadd.xlane.f32.xlu0 %v1624
        %v1626 = vpop.xlane.xlu0 %1625
        %v1627 = vmul.f32 %v1626, %v1367
        %v1628 = vadd.f32 %v1627, 1e-05
        %v1629 = vrsqrt.pop %v1628
        %v1630 = vmul.f32 %v1622, %v1629
        %v1632 = vlaneseq
        %v1633 = vshrl.u32 %v1632, 7
        %v1634 = vsub.s32 0, %v1633
        %v1635 = vrot.slane %v1616, %v1634
        %v1637 = vmul.f32 %v1630, %v1635
        %v1639 = vlaneseq
        %v1640 = vshrl.u32 %v1639, 7
        %v1641 = vsub.s32 0, %v1640
        %v1642 = vrot.slane %v1617, %v1641
        %v1644 = vadd.f32 %v1637, %v1642
        %v1645 = vmul.f32 %v1644, %v1395
        %1646 = vst.msk [vmem:[%s617] sm:$0xff] %vm657, %v1645
        %s1647 = sand.u32 %s455, 1
        %s1648 = scalar_lea.sflag [#allocation3], %s1647
        %s1649 = sand.u32 %s455, 1
        %s1650 = smul.addr %s1649, 8
        %s1651 = scalar_lea.vmem [#allocation2], %s1650
        // Predicated region
        $region97: #{_lambda_.3} parent=95 // pred_check
          %p1652 = pneg %p465
        $region98: #{_lambda_.3} parent=95 // pred_check_branch
          %1654 = sbr.rel (%p1652) target = $region100
        $region99: #{_lambda_.3} parent=95 // pred_region
          %s1656 = ssub.s32 128, 128
          %1657 = vsyncadd %s1648, %s1656
          %s1658 = smul.addr %s33, 128
          %s1659 = scalar_lea.hbm %s19, %s1658
          %s1661 = sshll.u32 %s1651, 4
          %s1662 = int_to_ptr.vmem [resolvable:$true] %s1661
          %1664 = dma.vmem_to_hbm [thread:$0]  %s1662, 128, %s1659, %s1648
        $region100: #{_lambda_.3} parent=95 // pred_fallthru
          _
      $region96: #{_lambda_.3} parent=5 // pred_fallthru
        _
      %p1665 = scmp.le.s32.totalorder 2, %s28
      // Predicated region
      $region101: #{_lambda_.3} parent=5 // pred_check
        %p1666 = pneg %p1665
      $region102: #{_lambda_.3} parent=5 // pred_check_branch
        %1668 = sbr.rel (%p1666) target = $region104
      $region103: #{_lambda_.3} parent=5 // pred_region
        %s1669 = ssub.s32 %s28, 2
        // Predicated region
        $region105: #{_lambda_.3} parent=103 // pred_check
          %p1670 = pneg %p471
        $region106: #{_lambda_.3} parent=103 // pred_check_branch
          %1672 = sbr.rel (%p1670) target = $region108
        $region107: #{_lambda_.3} parent=103 // pred_region
          %s1673 = sand.u32 %s456, 1
          %s1674 = scalar_lea.sflag [#allocation3], %s1673
          %s1675 = sand.u32 %s456, 1
          %s1676 = smul.addr %s1675, 8
          %s1677 = scalar_lea.vmem [#allocation2], %s1676
          %1678 = dma.done %s1674, 128
        $region108: #{_lambda_.3} parent=103 // pred_fallthru
          _
      $region104: #{_lambda_.3} parent=5 // pred_fallthru
        _
    $region6: #{_lambda_.3} parent=1 // loop_footer
      %s32 = sadd.s32 1, %s28
    $region7: #{_lambda_.3} parent=1 // loop_footer_branch
      %27 = sbr.rel target = $region3
    $region8: #{_lambda_.3} parent=1 // loop_exit
      _
    %1679 = vsyncpa [#allocation3], 1
    %s1680 = scalar_lea.sflag [#allocation3], 1
    %1681 = vsyncpa %s1680, 1

// kernel: _lambda_.2
$region0: #{_lambda_.2}
  #allocation0 [shape = 'u32[]', space=smem, size = 0x4, offset = 0x4, fixed_abs, tag = 'smem constant byte address 0x4 - core index']
  #allocation1 [shape = 'u32[144,128]{1,0:T(1,128)}', space=vmem, size = 0x12000, scoped, tag = 'internal scratch']
  %s0 = inlined_call_operand.vmem [shape: f32[2,8,32], index: 0, kind: input, shape index: {}]
  %s1 = inlined_call_operand.vmem [shape: f32[2,1,8], index: 1, kind: input, shape index: {}]
  %s2 = inlined_call_operand.vmem [shape: f32[2,8,1], index: 2, kind: input, shape index: {}]
  %s3 = inlined_call_operand.vmem [shape: bf16[2,32,16], index: 3, kind: input, shape index: {}]
  %s4 = inlined_call_operand.vmem [shape: bf16[2,32,16], index: 4, kind: input, shape index: {}]
  %s5 = inlined_call_operand.vmem [shape: bf16[2,32,16], index: 5, kind: input, shape index: {}]
  %s6 = inlined_call_operand.vmem [shape: f32[2,1,16], index: 6, kind: input, shape index: {}]
  %s7 = inlined_call_operand.vmem [shape: f32[2,1,16], index: 7, kind: input, shape index: {}]
  %s8 = inlined_call_operand.vmem [shape: f32[2,1,16], index: 8, kind: input, shape index: {}]
  %s9 = inlined_call_operand.vmem [shape: bf16[2,16,32], index: 9, kind: input, shape index: {}]
  %s10 = inlined_call_operand.vmem [shape: f32[1,32], index: 10, kind: input, shape index: {}]
  %s11 = inlined_call_operand.vmem [shape: f32[1,32], index: 11, kind: input, shape index: {}]
  %s12 = inlined_call_operand.vmem [shape: f32[1,32], index: 12, kind: input, shape index: {}]
  %s13 = inlined_call_operand.vmem [shape: bf16[96,64], index: 13, kind: input, shape index: {}]
  %s14 = inlined_call_operand.vmem [shape: f32[1,64], index: 14, kind: input, shape index: {}]
  %s15 = inlined_call_operand.vmem [shape: bf16[64,32], index: 15, kind: input, shape index: {}]
  %s16 = inlined_call_operand.vmem [shape: f32[1,32], index: 16, kind: input, shape index: {}]
  %s17 = inlined_call_operand.vmem [shape: f32[1,32], index: 17, kind: input, shape index: {}]
  %s18 = inlined_call_operand.vmem [shape: f32[1,32], index: 18, kind: input, shape index: {}]
  %s19 = inlined_call_operand.vmem [shape: f32[2,8,32], index: 19, kind: output, shape index: {}]
  %s20 = sld [smem:[#allocation0]]
  $region109: #{_lambda_.2} parent=0
    _
  %s22 = ssub.s32 1, %s20
  %s23 = scalar_select 0, %s22, %s20
  loop: start=0, step=1, limit=4
  $region2: #{_lambda_.2} parent=0 // loop_pre_header
    _
  $region3: #{_lambda_.2} parent=0 // loop_header
    %s25 = sphi 0, %s29
    %p26 = scmp.ge.s32.totalorder %s25, 4
    %s35 = sphi 0, %s37
    %s38 = sphi 0, %s35
    %s39 = sphi 0, %s38
    %s55 = sphi 0, %s39
    %s61 = sphi 0, %s63
    %s64 = sphi 0, %s61
    %s65 = sphi 0, %s64
    %s81 = sphi 0, %s65
    %s87 = sphi 0, %s89
    %s90 = sphi 0, %s87
    %s91 = sphi 0, %s90
    %s107 = sphi 0, %s91
    %s111 = sphi 0, %s111
    %s113 = sphi 0, %s111
    %s114 = sphi 0, %s113
    %s128 = sphi 0, %s114
    %s132 = sphi 0, %s132
    %s134 = sphi 0, %s132
    %s135 = sphi 0, %s134
    %s149 = sphi 0, %s135
    %s153 = sphi 0, %s153
    %s155 = sphi 0, %s153
    %s156 = sphi 0, %s155
    %s170 = sphi 0, %s156
    %s174 = sphi 0, %s174
    %s176 = sphi 0, %s174
    %s177 = sphi 0, %s176
    %s191 = sphi 0, %s177
    %s195 = sphi 0, %s195
    %s197 = sphi 0, %s195
    %s198 = sphi 0, %s197
    %s212 = sphi 0, %s198
    %s216 = sphi 0, %s216
    %s218 = sphi 0, %s216
    %s219 = sphi 0, %s218
    %s233 = sphi 0, %s219
    %s237 = sphi 0, %s237
    %s239 = sphi 0, %s237
    %s240 = sphi 0, %s239
    %s254 = sphi 0, %s240
    %s258 = sphi 0, %s258
    %s260 = sphi 0, %s258
    %s261 = sphi 0, %s260
    %s275 = sphi 0, %s261
    %s279 = sphi 0, %s279
    %s281 = sphi 0, %s279
    %s282 = sphi 0, %s281
    %s296 = sphi 0, %s282
    %s300 = sphi 0, %s300
    %s302 = sphi 0, %s300
    %s303 = sphi 0, %s302
    %s317 = sphi 0, %s303
    %s321 = sphi 0, %s321
    %s323 = sphi 0, %s321
    %s324 = sphi 0, %s323
    %s338 = sphi 0, %s324
    %s342 = sphi 0, %s342
    %s344 = sphi 0, %s342
    %s345 = sphi 0, %s344
    %s359 = sphi 0, %s345
    %s363 = sphi 0, %s363
    %s365 = sphi 0, %s363
    %s366 = sphi 0, %s365
    %s380 = sphi 0, %s366
    %s384 = sphi 0, %s384
    %s386 = sphi 0, %s384
    %s387 = sphi 0, %s386
    %s401 = sphi 0, %s387
    %s405 = sphi 0, %s405
    %s407 = sphi 0, %s405
    %s408 = sphi 0, %s407
    %s422 = sphi 0, %s408
    %s426 = sphi 0, %s426
    %s428 = sphi 0, %s426
    %s429 = sphi 0, %s428
    %s443 = sphi 0, %s429
    %s449 = sphi 0, %s451
    %s452 = sphi 0, %s449
    %s453 = sphi 0, %s452
    %s469 = sphi 0, %s453
  $region4: #{_lambda_.2} parent=0 // loop_header_branch
    %28 = sbr.rel (%p26) target = $region8
  $region5: #{_lambda_.2} parent=0 // loop_body
    %s30 = ssub.s32 %s25, 1
    %s31 = ssub.s32 %s25, 2
    %s32 = sadd.s32 %s25, 1
    %s33 = ssub.s32 %s25, %s32
    %p34 = scmp.eq.s32.totalorder %s33, 0
    %s36 = sadd.s32 %s35, 1
    %s37 = scalar_select %p34, %s35, %s36
    %p40 = pneg %p34
    %p41 = scmp.eq.s32.totalorder %s25, 1
    %p42 = por %p40, %p41
    %p43 = scmp.ne.s32.totalorder %s35, %s38
    %p44 = scmp.eq.s32.totalorder %s25, 0
    %p45 = por %p43, %p44
    %p46 = scmp.ne.s32.totalorder %s35, %s38
    %p47 = scmp.eq.s32.totalorder %s30, 1
    %p48 = por %p46, %p47
    %p49 = scmp.ne.s32.totalorder %s38, %s39
    %p50 = scmp.eq.s32.totalorder %s30, 0
    %p51 = por %p49, %p50
    %p52 = scmp.ne.s32.totalorder %s38, %s39
    %p53 = scmp.eq.s32.totalorder %s31, 1
    %p54 = por %p52, %p53
    %p56 = scmp.ne.s32.totalorder %s39, %s55
    %p57 = scmp.eq.s32.totalorder %s31, 0
    %p58 = por %p56, %p57
    %s59 = ssub.s32 %s25, %s32
    %p60 = scmp.eq.s32.totalorder %s59, 0
    %s62 = sadd.s32 %s61, 1
    %s63 = scalar_select %p60, %s61, %s62
    %p66 = pneg %p60
    %p67 = scmp.eq.s32.totalorder %s25, 1
    %p68 = por %p66, %p67
    %p69 = scmp.ne.s32.totalorder %s61, %s64
    %p70 = scmp.eq.s32.totalorder %s25, 0
    %p71 = por %p69, %p70
    %p72 = scmp.ne.s32.totalorder %s61, %s64
    %p73 = scmp.eq.s32.totalorder %s30, 1
    %p74 = por %p72, %p73
    %p75 = scmp.ne.s32.totalorder %s64, %s65
    %p76 = scmp.eq.s32.totalorder %s30, 0
    %p77 = por %p75, %p76
    %p78 = scmp.ne.s32.totalorder %s64, %s65
    %p79 = scmp.eq.s32.totalorder %s31, 1
    %p80 = por %p78, %p79
    %p82 = scmp.ne.s32.totalorder %s65, %s81
    %p83 = scmp.eq.s32.totalorder %s31, 0
    %p84 = por %p82, %p83
    %s85 = ssub.s32 %s25, %s32
    %p86 = scmp.eq.s32.totalorder %s85, 0
    %s88 = sadd.s32 %s87, 1
    %s89 = scalar_select %p86, %s87, %s88
    %p92 = pneg %p86
    %p93 = scmp.eq.s32.totalorder %s25, 1
    %p94 = por %p92, %p93
    %p95 = scmp.ne.s32.totalorder %s87, %s90
    %p96 = scmp.eq.s32.totalorder %s25, 0
    %p97 = por %p95, %p96
    %p98 = scmp.ne.s32.totalorder %s87, %s90
    %p99 = scmp.eq.s32.totalorder %s30, 1
    %p100 = por %p98, %p99
    %p101 = scmp.ne.s32.totalorder %s90, %s91
    %p102 = scmp.eq.s32.totalorder %s30, 0
    %p103 = por %p101, %p102
    %p104 = scmp.ne.s32.totalorder %s90, %s91
    %p105 = scmp.eq.s32.totalorder %s31, 1
    %p106 = por %p104, %p105
    %p108 = scmp.ne.s32.totalorder %s91, %s107
    %p109 = scmp.eq.s32.totalorder %s31, 0
    %p110 = por %p108, %p109
    %s112 = sadd.s32 %s111, 1
    %p115 = scmp.eq.s32.totalorder %s25, 1
    %p116 = scmp.ne.s32.totalorder %s111, %s113
    %p117 = scmp.eq.s32.totalorder %s25, 0
    %p118 = por %p116, %p117
    %p119 = scmp.ne.s32.totalorder %s111, %s113
    %p120 = scmp.eq.s32.totalorder %s30, 1
    %p121 = por %p119, %p120
    %p122 = scmp.ne.s32.totalorder %s113, %s114
    %p123 = scmp.eq.s32.totalorder %s30, 0
    %p124 = por %p122, %p123
    %p125 = scmp.ne.s32.totalorder %s113, %s114
    %p126 = scmp.eq.s32.totalorder %s31, 1
    %p127 = por %p125, %p126
    %p129 = scmp.ne.s32.totalorder %s114, %s128
    %p130 = scmp.eq.s32.totalorder %s31, 0
    %p131 = por %p129, %p130
    %s133 = sadd.s32 %s132, 1
    %p136 = scmp.eq.s32.totalorder %s25, 1
    %p137 = scmp.ne.s32.totalorder %s132, %s134
    %p138 = scmp.eq.s32.totalorder %s25, 0
    %p139 = por %p137, %p138
    %p140 = scmp.ne.s32.totalorder %s132, %s134
    %p141 = scmp.eq.s32.totalorder %s30, 1
    %p142 = por %p140, %p141
    %p143 = scmp.ne.s32.totalorder %s134, %s135
    %p144 = scmp.eq.s32.totalorder %s30, 0
    %p145 = por %p143, %p144
    %p146 = scmp.ne.s32.totalorder %s134, %s135
    %p147 = scmp.eq.s32.totalorder %s31, 1
    %p148 = por %p146, %p147
    %p150 = scmp.ne.s32.totalorder %s135, %s149
    %p151 = scmp.eq.s32.totalorder %s31, 0
    %p152 = por %p150, %p151
    %s154 = sadd.s32 %s153, 1
    %p157 = scmp.eq.s32.totalorder %s25, 1
    %p158 = scmp.ne.s32.totalorder %s153, %s155
    %p159 = scmp.eq.s32.totalorder %s25, 0
    %p160 = por %p158, %p159
    %p161 = scmp.ne.s32.totalorder %s153, %s155
    %p162 = scmp.eq.s32.totalorder %s30, 1
    %p163 = por %p161, %p162
    %p164 = scmp.ne.s32.totalorder %s155, %s156
    %p165 = scmp.eq.s32.totalorder %s30, 0
    %p166 = por %p164, %p165
    %p167 = scmp.ne.s32.totalorder %s155, %s156
    %p168 = scmp.eq.s32.totalorder %s31, 1
    %p169 = por %p167, %p168
    %p171 = scmp.ne.s32.totalorder %s156, %s170
    %p172 = scmp.eq.s32.totalorder %s31, 0
    %p173 = por %p171, %p172
    %s175 = sadd.s32 %s174, 1
    %p178 = scmp.eq.s32.totalorder %s25, 1
    %p179 = scmp.ne.s32.totalorder %s174, %s176
    %p180 = scmp.eq.s32.totalorder %s25, 0
    %p181 = por %p179, %p180
    %p182 = scmp.ne.s32.totalorder %s174, %s176
    %p183 = scmp.eq.s32.totalorder %s30, 1
    %p184 = por %p182, %p183
    %p185 = scmp.ne.s32.totalorder %s176, %s177
    %p186 = scmp.eq.s32.totalorder %s30, 0
    %p187 = por %p185, %p186
    %p188 = scmp.ne.s32.totalorder %s176, %s177
    %p189 = scmp.eq.s32.totalorder %s31, 1
    %p190 = por %p188, %p189
    %p192 = scmp.ne.s32.totalorder %s177, %s191
    %p193 = scmp.eq.s32.totalorder %s31, 0
    %p194 = por %p192, %p193
    %s196 = sadd.s32 %s195, 1
    %p199 = scmp.eq.s32.totalorder %s25, 1
    %p200 = scmp.ne.s32.totalorder %s195, %s197
    %p201 = scmp.eq.s32.totalorder %s25, 0
    %p202 = por %p200, %p201
    %p203 = scmp.ne.s32.totalorder %s195, %s197
    %p204 = scmp.eq.s32.totalorder %s30, 1
    %p205 = por %p203, %p204
    %p206 = scmp.ne.s32.totalorder %s197, %s198
    %p207 = scmp.eq.s32.totalorder %s30, 0
    %p208 = por %p206, %p207
    %p209 = scmp.ne.s32.totalorder %s197, %s198
    %p210 = scmp.eq.s32.totalorder %s31, 1
    %p211 = por %p209, %p210
    %p213 = scmp.ne.s32.totalorder %s198, %s212
    %p214 = scmp.eq.s32.totalorder %s31, 0
    %p215 = por %p213, %p214
    %s217 = sadd.s32 %s216, 1
    %p220 = scmp.eq.s32.totalorder %s25, 1
    %p221 = scmp.ne.s32.totalorder %s216, %s218
    %p222 = scmp.eq.s32.totalorder %s25, 0
    %p223 = por %p221, %p222
    %p224 = scmp.ne.s32.totalorder %s216, %s218
    %p225 = scmp.eq.s32.totalorder %s30, 1
    %p226 = por %p224, %p225
    %p227 = scmp.ne.s32.totalorder %s218, %s219
    %p228 = scmp.eq.s32.totalorder %s30, 0
    %p229 = por %p227, %p228
    %p230 = scmp.ne.s32.totalorder %s218, %s219
    %p231 = scmp.eq.s32.totalorder %s31, 1
    %p232 = por %p230, %p231
    %p234 = scmp.ne.s32.totalorder %s219, %s233
    %p235 = scmp.eq.s32.totalorder %s31, 0
    %p236 = por %p234, %p235
    %s238 = sadd.s32 %s237, 1
    %p241 = scmp.eq.s32.totalorder %s25, 1
    %p242 = scmp.ne.s32.totalorder %s237, %s239
    %p243 = scmp.eq.s32.totalorder %s25, 0
    %p244 = por %p242, %p243
    %p245 = scmp.ne.s32.totalorder %s237, %s239
    %p246 = scmp.eq.s32.totalorder %s30, 1
    %p247 = por %p245, %p246
    %p248 = scmp.ne.s32.totalorder %s239, %s240
    %p249 = scmp.eq.s32.totalorder %s30, 0
    %p250 = por %p248, %p249
    %p251 = scmp.ne.s32.totalorder %s239, %s240
    %p252 = scmp.eq.s32.totalorder %s31, 1
    %p253 = por %p251, %p252
    %p255 = scmp.ne.s32.totalorder %s240, %s254
    %p256 = scmp.eq.s32.totalorder %s31, 0
    %p257 = por %p255, %p256
    %s259 = sadd.s32 %s258, 1
    %p262 = scmp.eq.s32.totalorder %s25, 1
    %p263 = scmp.ne.s32.totalorder %s258, %s260
    %p264 = scmp.eq.s32.totalorder %s25, 0
    %p265 = por %p263, %p264
    %p266 = scmp.ne.s32.totalorder %s258, %s260
    %p267 = scmp.eq.s32.totalorder %s30, 1
    %p268 = por %p266, %p267
    %p269 = scmp.ne.s32.totalorder %s260, %s261
    %p270 = scmp.eq.s32.totalorder %s30, 0
    %p271 = por %p269, %p270
    %p272 = scmp.ne.s32.totalorder %s260, %s261
    %p273 = scmp.eq.s32.totalorder %s31, 1
    %p274 = por %p272, %p273
    %p276 = scmp.ne.s32.totalorder %s261, %s275
    %p277 = scmp.eq.s32.totalorder %s31, 0
    %p278 = por %p276, %p277
    %s280 = sadd.s32 %s279, 1
    %p283 = scmp.eq.s32.totalorder %s25, 1
    %p284 = scmp.ne.s32.totalorder %s279, %s281
    %p285 = scmp.eq.s32.totalorder %s25, 0
    %p286 = por %p284, %p285
    %p287 = scmp.ne.s32.totalorder %s279, %s281
    %p288 = scmp.eq.s32.totalorder %s30, 1
    %p289 = por %p287, %p288
    %p290 = scmp.ne.s32.totalorder %s281, %s282
    %p291 = scmp.eq.s32.totalorder %s30, 0
    %p292 = por %p290, %p291
    %p293 = scmp.ne.s32.totalorder %s281, %s282
    %p294 = scmp.eq.s32.totalorder %s31, 1
    %p295 = por %p293, %p294
    %p297 = scmp.ne.s32.totalorder %s282, %s296
    %p298 = scmp.eq.s32.totalorder %s31, 0
    %p299 = por %p297, %p298
    %s301 = sadd.s32 %s300, 1
    %p304 = scmp.eq.s32.totalorder %s25, 1
    %p305 = scmp.ne.s32.totalorder %s300, %s302
    %p306 = scmp.eq.s32.totalorder %s25, 0
    %p307 = por %p305, %p306
    %p308 = scmp.ne.s32.totalorder %s300, %s302
    %p309 = scmp.eq.s32.totalorder %s30, 1
    %p310 = por %p308, %p309
    %p311 = scmp.ne.s32.totalorder %s302, %s303
    %p312 = scmp.eq.s32.totalorder %s30, 0
    %p313 = por %p311, %p312
    %p314 = scmp.ne.s32.totalorder %s302, %s303
    %p315 = scmp.eq.s32.totalorder %s31, 1
    %p316 = por %p314, %p315
    %p318 = scmp.ne.s32.totalorder %s303, %s317
    %p319 = scmp.eq.s32.totalorder %s31, 0
    %p320 = por %p318, %p319
    %s322 = sadd.s32 %s321, 1
    %p325 = scmp.eq.s32.totalorder %s25, 1
    %p326 = scmp.ne.s32.totalorder %s321, %s323
    %p327 = scmp.eq.s32.totalorder %s25, 0
    %p328 = por %p326, %p327
    %p329 = scmp.ne.s32.totalorder %s321, %s323
    %p330 = scmp.eq.s32.totalorder %s30, 1
    %p331 = por %p329, %p330
    %p332 = scmp.ne.s32.totalorder %s323, %s324
    %p333 = scmp.eq.s32.totalorder %s30, 0
    %p334 = por %p332, %p333
    %p335 = scmp.ne.s32.totalorder %s323, %s324
    %p336 = scmp.eq.s32.totalorder %s31, 1
    %p337 = por %p335, %p336
    %p339 = scmp.ne.s32.totalorder %s324, %s338
    %p340 = scmp.eq.s32.totalorder %s31, 0
    %p341 = por %p339, %p340
    %s343 = sadd.s32 %s342, 1
    %p346 = scmp.eq.s32.totalorder %s25, 1
    %p347 = scmp.ne.s32.totalorder %s342, %s344
    %p348 = scmp.eq.s32.totalorder %s25, 0
    %p349 = por %p347, %p348
    %p350 = scmp.ne.s32.totalorder %s342, %s344
    %p351 = scmp.eq.s32.totalorder %s30, 1
    %p352 = por %p350, %p351
    %p353 = scmp.ne.s32.totalorder %s344, %s345
    %p354 = scmp.eq.s32.totalorder %s30, 0
    %p355 = por %p353, %p354
    %p356 = scmp.ne.s32.totalorder %s344, %s345
    %p357 = scmp.eq.s32.totalorder %s31, 1
    %p358 = por %p356, %p357
    %p360 = scmp.ne.s32.totalorder %s345, %s359
    %p361 = scmp.eq.s32.totalorder %s31, 0
    %p362 = por %p360, %p361
    %s364 = sadd.s32 %s363, 1
    %p367 = scmp.eq.s32.totalorder %s25, 1
    %p368 = scmp.ne.s32.totalorder %s363, %s365
    %p369 = scmp.eq.s32.totalorder %s25, 0
    %p370 = por %p368, %p369
    %p371 = scmp.ne.s32.totalorder %s363, %s365
    %p372 = scmp.eq.s32.totalorder %s30, 1
    %p373 = por %p371, %p372
    %p374 = scmp.ne.s32.totalorder %s365, %s366
    %p375 = scmp.eq.s32.totalorder %s30, 0
    %p376 = por %p374, %p375
    %p377 = scmp.ne.s32.totalorder %s365, %s366
    %p378 = scmp.eq.s32.totalorder %s31, 1
    %p379 = por %p377, %p378
    %p381 = scmp.ne.s32.totalorder %s366, %s380
    %p382 = scmp.eq.s32.totalorder %s31, 0
    %p383 = por %p381, %p382
    %s385 = sadd.s32 %s384, 1
    %p388 = scmp.eq.s32.totalorder %s25, 1
    %p389 = scmp.ne.s32.totalorder %s384, %s386
    %p390 = scmp.eq.s32.totalorder %s25, 0
    %p391 = por %p389, %p390
    %p392 = scmp.ne.s32.totalorder %s384, %s386
    %p393 = scmp.eq.s32.totalorder %s30, 1
    %p394 = por %p392, %p393
    %p395 = scmp.ne.s32.totalorder %s386, %s387
    %p396 = scmp.eq.s32.totalorder %s30, 0
    %p397 = por %p395, %p396
    %p398 = scmp.ne.s32.totalorder %s386, %s387
    %p399 = scmp.eq.s32.totalorder %s31, 1
    %p400 = por %p398, %p399
    %p402 = scmp.ne.s32.totalorder %s387, %s401
    %p403 = scmp.eq.s32.totalorder %s31, 0
    %p404 = por %p402, %p403
    %s406 = sadd.s32 %s405, 1
    %p409 = scmp.eq.s32.totalorder %s25, 1
    %p410 = scmp.ne.s32.totalorder %s405, %s407
    %p411 = scmp.eq.s32.totalorder %s25, 0
    %p412 = por %p410, %p411
    %p413 = scmp.ne.s32.totalorder %s405, %s407
    %p414 = scmp.eq.s32.totalorder %s30, 1
    %p415 = por %p413, %p414
    %p416 = scmp.ne.s32.totalorder %s407, %s408
    %p417 = scmp.eq.s32.totalorder %s30, 0
    %p418 = por %p416, %p417
    %p419 = scmp.ne.s32.totalorder %s407, %s408
    %p420 = scmp.eq.s32.totalorder %s31, 1
    %p421 = por %p419, %p420
    %p423 = scmp.ne.s32.totalorder %s408, %s422
    %p424 = scmp.eq.s32.totalorder %s31, 0
    %p425 = por %p423, %p424
    %s427 = sadd.s32 %s426, 1
    %p430 = scmp.eq.s32.totalorder %s25, 1
    %p431 = scmp.ne.s32.totalorder %s426, %s428
    %p432 = scmp.eq.s32.totalorder %s25, 0
    %p433 = por %p431, %p432
    %p434 = scmp.ne.s32.totalorder %s426, %s428
    %p435 = scmp.eq.s32.totalorder %s30, 1
    %p436 = por %p434, %p435
    %p437 = scmp.ne.s32.totalorder %s428, %s429
    %p438 = scmp.eq.s32.totalorder %s30, 0
    %p439 = por %p437, %p438
    %p440 = scmp.ne.s32.totalorder %s428, %s429
    %p441 = scmp.eq.s32.totalorder %s31, 1
    %p442 = por %p440, %p441
    %p444 = scmp.ne.s32.totalorder %s429, %s443
    %p445 = scmp.eq.s32.totalorder %s31, 0
    %p446 = por %p444, %p445
    %s447 = ssub.s32 %s25, %s32
    %p448 = scmp.eq.s32.totalorder %s447, 0
    %s450 = sadd.s32 %s449, 1
    %s451 = scalar_select %p448, %s449, %s450
    %p454 = pneg %p448
    %p455 = scmp.eq.s32.totalorder %s25, 1
    %p456 = por %p454, %p455
    %p457 = scmp.ne.s32.totalorder %s449, %s452
    %p458 = scmp.eq.s32.totalorder %s25, 0
    %p459 = por %p457, %p458
    %p460 = scmp.ne.s32.totalorder %s449, %s452
    %p461 = scmp.eq.s32.totalorder %s30, 1
    %p462 = por %p460, %p461
    %p463 = scmp.ne.s32.totalorder %s452, %s453
    %p464 = scmp.eq.s32.totalorder %s30, 0
    %p465 = por %p463, %p464
    %p466 = scmp.ne.s32.totalorder %s452, %s453
    %p467 = scmp.eq.s32.totalorder %s31, 1
    %p468 = por %p466, %p467
    %p470 = scmp.ne.s32.totalorder %s453, %s469
    %p471 = scmp.eq.s32.totalorder %s31, 0
    %p472 = por %p470, %p471
    %p473 = scmp.le.s32.totalorder 1, %s25
    %p474 = scmp.lt.s32.totalorder %s25, 3
    %p475 = pnand %p473, %p474
    %p476 = pneg %p475
    // Predicated region
    $region9: #{_lambda_.2} parent=5 // pred_check
      _
    $region10: #{_lambda_.2} parent=5 // pred_check_branch
      %478 = sbr.rel (%p475) target = $region12
    $region11: #{_lambda_.2} parent=5 // pred_region
      %s479 = ssub.s32 %s25, 1
      // Predicated region
      $region13: #{_lambda_.2} parent=11 // pred_check
        %p480 = pneg %p124
      $region14: #{_lambda_.2} parent=11 // pred_check_branch
        %482 = sbr.rel (%p480) target = $region16
      $region15: #{_lambda_.2} parent=11 // pred_region
        _
      $region16: #{_lambda_.2} parent=11 // pred_fallthru
        _
      // Predicated region
      $region17: #{_lambda_.2} parent=11 // pred_check
        %p483 = pneg %p145
      $region18: #{_lambda_.2} parent=11 // pred_check_branch
        %485 = sbr.rel (%p483) target = $region20
      $region19: #{_lambda_.2} parent=11 // pred_region
        _
      $region20: #{_lambda_.2} parent=11 // pred_fallthru
        _
      // Predicated region
      $region21: #{_lambda_.2} parent=11 // pred_check
        %p486 = pneg %p166
      $region22: #{_lambda_.2} parent=11 // pred_check_branch
        %488 = sbr.rel (%p486) target = $region24
      $region23: #{_lambda_.2} parent=11 // pred_region
        _
      $region24: #{_lambda_.2} parent=11 // pred_fallthru
        _
      // Predicated region
      $region25: #{_lambda_.2} parent=11 // pred_check
        %p489 = pneg %p187
      $region26: #{_lambda_.2} parent=11 // pred_check_branch
        %491 = sbr.rel (%p489) target = $region28
      $region27: #{_lambda_.2} parent=11 // pred_region
        _
      $region28: #{_lambda_.2} parent=11 // pred_fallthru
        _
      // Predicated region
      $region29: #{_lambda_.2} parent=11 // pred_check
        %p492 = pneg %p208
      $region30: #{_lambda_.2} parent=11 // pred_check_branch
        %494 = sbr.rel (%p492) target = $region32
      $region31: #{_lambda_.2} parent=11 // pred_region
        _
      $region32: #{_lambda_.2} parent=11 // pred_fallthru
        _
      // Predicated region
      $region33: #{_lambda_.2} parent=11 // pred_check
        %p495 = pneg %p229
      $region34: #{_lambda_.2} parent=11 // pred_check_branch
        %497 = sbr.rel (%p495) target = $region36
      $region35: #{_lambda_.2} parent=11 // pred_region
        _
      $region36: #{_lambda_.2} parent=11 // pred_fallthru
        _
      // Predicated region
      $region37: #{_lambda_.2} parent=11 // pred_check
        %p498 = pneg %p250
      $region38: #{_lambda_.2} parent=11 // pred_check_branch
        %500 = sbr.rel (%p498) target = $region40
      $region39: #{_lambda_.2} parent=11 // pred_region
        _
      $region40: #{_lambda_.2} parent=11 // pred_fallthru
        _
      // Predicated region
      $region41: #{_lambda_.2} parent=11 // pred_check
        %p501 = pneg %p271
      $region42: #{_lambda_.2} parent=11 // pred_check_branch
        %503 = sbr.rel (%p501) target = $region44
      $region43: #{_lambda_.2} parent=11 // pred_region
        _
      $region44: #{_lambda_.2} parent=11 // pred_fallthru
        _
      // Predicated region
      $region45: #{_lambda_.2} parent=11 // pred_check
        %p504 = pneg %p292
      $region46: #{_lambda_.2} parent=11 // pred_check_branch
        %506 = sbr.rel (%p504) target = $region48
      $region47: #{_lambda_.2} parent=11 // pred_region
        _
      $region48: #{_lambda_.2} parent=11 // pred_fallthru
        _
      // Predicated region
      $region49: #{_lambda_.2} parent=11 // pred_check
        %p507 = pneg %p313
      $region50: #{_lambda_.2} parent=11 // pred_check_branch
        %509 = sbr.rel (%p507) target = $region52
      $region51: #{_lambda_.2} parent=11 // pred_region
        _
      $region52: #{_lambda_.2} parent=11 // pred_fallthru
        _
      // Predicated region
      $region53: #{_lambda_.2} parent=11 // pred_check
        %p510 = pneg %p334
      $region54: #{_lambda_.2} parent=11 // pred_check_branch
        %512 = sbr.rel (%p510) target = $region56
      $region55: #{_lambda_.2} parent=11 // pred_region
        _
      $region56: #{_lambda_.2} parent=11 // pred_fallthru
        _
      // Predicated region
      $region57: #{_lambda_.2} parent=11 // pred_check
        %p513 = pneg %p355
      $region58: #{_lambda_.2} parent=11 // pred_check_branch
        %515 = sbr.rel (%p513) target = $region60
      $region59: #{_lambda_.2} parent=11 // pred_region
        _
      $region60: #{_lambda_.2} parent=11 // pred_fallthru
        _
      // Predicated region
      $region61: #{_lambda_.2} parent=11 // pred_check
        %p516 = pneg %p376
      $region62: #{_lambda_.2} parent=11 // pred_check_branch
        %518 = sbr.rel (%p516) target = $region64
      $region63: #{_lambda_.2} parent=11 // pred_region
        _
      $region64: #{_lambda_.2} parent=11 // pred_fallthru
        _
      // Predicated region
      $region65: #{_lambda_.2} parent=11 // pred_check
        %p519 = pneg %p397
      $region66: #{_lambda_.2} parent=11 // pred_check_branch
        %521 = sbr.rel (%p519) target = $region68
      $region67: #{_lambda_.2} parent=11 // pred_region
        _
      $region68: #{_lambda_.2} parent=11 // pred_fallthru
        _
      // Predicated region
      $region69: #{_lambda_.2} parent=11 // pred_check
        %p522 = pneg %p418
      $region70: #{_lambda_.2} parent=11 // pred_check_branch
        %524 = sbr.rel (%p522) target = $region72
      $region71: #{_lambda_.2} parent=11 // pred_region
        _
      $region72: #{_lambda_.2} parent=11 // pred_fallthru
        _
      // Predicated region
      $region73: #{_lambda_.2} parent=11 // pred_check
        %p525 = pneg %p439
      $region74: #{_lambda_.2} parent=11 // pred_check_branch
        %527 = sbr.rel (%p525) target = $region76
      $region75: #{_lambda_.2} parent=11 // pred_region
        _
      $region76: #{_lambda_.2} parent=11 // pred_fallthru
        _
    $region12: #{_lambda_.2} parent=5 // pred_fallthru
      _
    %p528 = scmp.lt.s32.totalorder %s25, 2
    // Predicated region
    $region77: #{_lambda_.2} parent=5 // pred_check
      %p529 = pneg %p528
    $region78: #{_lambda_.2} parent=5 // pred_check_branch
      %531 = sbr.rel (%p529) target = $region80
    $region79: #{_lambda_.2} parent=5 // pred_region
      // Predicated region
      $region81: #{_lambda_.2} parent=79 // pred_check
        %p532 = pneg %p45
      $region82: #{_lambda_.2} parent=79 // pred_check_branch
        %534 = sbr.rel (%p532) target = $region84
      $region83: #{_lambda_.2} parent=79 // pred_region
        %p535 = scmp.lt.s32.totalorder %s25, 1
        %s536 = scalar_select %p535, %s25, 1
        %s537 = smul.addr %s536, 8
        %s538 = scalar_lea.vmem %s0, %s537
      $region84: #{_lambda_.2} parent=79 // pred_fallthru
        _
      // Predicated region
      $region85: #{_lambda_.2} parent=79 // pred_check
        %p539 = pneg %p71
      $region86: #{_lambda_.2} parent=79 // pred_check_branch
        %541 = sbr.rel (%p539) target = $region88
      $region87: #{_lambda_.2} parent=79 // pred_region
        %p542 = scmp.lt.s32.totalorder %s25, 1
        %s543 = scalar_select %p542, %s25, 1
        %s544 = scalar_lea.vmem %s1, %s543
      $region88: #{_lambda_.2} parent=79 // pred_fallthru
        _
      // Predicated region
      $region89: #{_lambda_.2} parent=79 // pred_check
        %p545 = pneg %p97
      $region90: #{_lambda_.2} parent=79 // pred_check_branch
        %547 = sbr.rel (%p545) target = $region92
      $region91: #{_lambda_.2} parent=79 // pred_region
        %p548 = scmp.lt.s32.totalorder %s25, 1
        %s549 = scalar_select %p548, %s25, 1
        %s550 = smul.addr %s549, 8
        %s551 = scalar_lea.vmem %s2, %s550
      $region92: #{_lambda_.2} parent=79 // pred_fallthru
        _
    $region80: #{_lambda_.2} parent=5 // pred_fallthru
      _
    %p552 = scmp.le.s32.totalorder 1, %s25
    %p553 = scmp.lt.s32.totalorder %s25, 3
    %p554 = pnand %p552, %p553
    %p555 = pneg %p554
    // Predicated region
    $region93: #{_lambda_.2} parent=5 // pred_check
      _
    $region94: #{_lambda_.2} parent=5 // pred_check_branch
      %557 = sbr.rel (%p554) target = $region96
    $region95: #{_lambda_.2} parent=5 // pred_region
      %s558 = ssub.s32 %s25, 1
      %p559 = scmp.lt.s32.totalorder %s30, 1
      %s560 = scalar_select %p559, %s30, 1
      %s561 = smul.addr %s560, 8
      %s562 = scalar_lea.vmem %s0, %s561
      %p563 = pneg %p51
      %p564 = pneg %p48
      %p565 = scmp.lt.s32.totalorder %s30, 1
      %s566 = scalar_select %p565, %s30, 1
      %s567 = scalar_lea.vmem %s1, %s566
      %p568 = pneg %p77
      %p569 = pneg %p74
      %p570 = scmp.lt.s32.totalorder %s30, 1
      %s571 = scalar_select %p570, %s30, 1
      %s572 = smul.addr %s571, 8
      %s573 = scalar_lea.vmem %s2, %s572
      %p574 = pneg %p103
      %p575 = pneg %p100
      %p576 = pneg %p124
      %p577 = pneg %p121
      %p578 = pneg %p145
      %p579 = pneg %p142
      %p580 = pneg %p166
      %p581 = pneg %p163
      %p582 = pneg %p187
      %p583 = pneg %p184
      %p584 = pneg %p208
      %p585 = pneg %p205
      %p586 = pneg %p229
      %p587 = pneg %p226
      %p588 = pneg %p250
      %p589 = pneg %p247
      %p590 = pneg %p271
      %p591 = pneg %p268
      %p592 = pneg %p292
      %p593 = pneg %p289
      %p594 = pneg %p313
      %p595 = pneg %p310
      %p596 = pneg %p334
      %p597 = pneg %p331
      %p598 = pneg %p355
      %p599 = pneg %p352
      %p600 = pneg %p376
      %p601 = pneg %p373
      %p602 = pneg %p397
      %p603 = pneg %p394
      %p604 = pneg %p418
      %p605 = pneg %p415
      %p606 = pneg %p439
      %p607 = pneg %p436
      %p608 = pneg %p465
      %p609 = pneg %p462
      %p610 = scmp.lt.s32.totalorder %s30, 1
      %s611 = scalar_select %p610, %s30, 1
      %s612 = smul.addr %s611, 8
      %s613 = scalar_lea.vmem %s19, %s612
      %p614 = scmp.lt.s32.totalorder %s30, 1
      %s615 = scalar_select %p614, %s30, 1
      %s616 = smul.addr %s615, 8
      %s617 = scalar_lea.vmem %s0, %s616
      %p618 = scmp.lt.s32.totalorder %s30, 1
      %s619 = scalar_select %p618, %s30, 1
      %s620 = scalar_lea.vmem %s1, %s619
      %p621 = scmp.lt.s32.totalorder %s30, 1
      %s622 = scalar_select %p621, %s30, 1
      %s623 = smul.addr %s622, 8
      %s624 = scalar_lea.vmem %s2, %s623
      %p625 = scmp.lt.s32.totalorder %s30, 1
      %s626 = scalar_select %p625, %s30, 1
      %s627 = smul.addr %s626, 8
      %s628 = scalar_lea.vmem %s19, %s627
      %v630 = vld [vmem:[%s617] sm:$0xff]
      %v631 = vpack.c.bf16 %v630, %v630
      %v632 = vld [vmem:[%s620] sm:$0x1]
      %v633 = vld [vmem:[%s624] sm:$0xff]
      %v634 = vld [vmem:[%s3] sm:$0xf]
      %v635 = vld [vmem:[%s3 + $0x4] sm:$0xf]
      %v636 = vld [vmem:[%s3 + $0x8] sm:$0xf]
      %v637 = vld [vmem:[%s3 + $0xc] sm:$0xf]
      %v638 = vld [vmem:[%s6] sm:$0x1]
      %v640 = vlaneseq
      %v641 = vshrl.u32 %v640, 7
      %v642 = vsub.s32 0, %v641
      %v643 = vrot.slane %v638, %v642
      %v649 = vunpack.c.l.b16 %v634
      %v650 = vunpack.c.l.b16 %v635
      %v651 = vunpack.c.l.b16 %v636
      %v652 = vunpack.c.l.b16 %v637
      %v653 = vpack.c.b16 %v650, %v649
      %v654 = vpack.c.b16 %v652, %v651
      %vm657 = vcmask 261120
      %v659 = vsel %vm657, %v631, 0
      %661 = vmatprep.subr.bf16.mxu0 0
      %662 = vmatpush1.bf16.msra.mxu0 %v653
      %663 = vmatprep.subr.bf16.mxu0 0
      %664 = vmatpush1.bf16.msra.mxu0 %v654
      %665 = vmatprep.subr.bf16.mxu0 0
      %666 = vmatpush1.bf16.msra.mxu0 0
      %667 = vmatprep.subr.bf16.mxu0 0
      %668 = vmatpush1.bf16.msra.mxu0 0
      %669 = vmatprep.subr.bf16.mxu0 0
      %670 = vmatpush1.bf16.msra.mxu0 0
      %671 = vmatprep.subr.bf16.mxu0 0
      %672 = vmatpush1.bf16.msra.mxu0 0
      %673 = vmatprep.subr.bf16.mxu0 0
      %674 = vmatpush1.bf16.msra.mxu0 0
      %675 = vmatprep.subr.bf16.mxu0 0
      %676 = vmatpush1.bf16.msra.mxu0 0
      %677 = vmatprep.subr.bf16.mxu0 0
      %678 = vmatpush1.bf16.msra.mxu0 0
      %679 = vmatprep.subr.bf16.mxu0 0
      %680 = vmatpush1.bf16.msra.mxu0 0
      %681 = vmatprep.subr.bf16.mxu0 0
      %682 = vmatpush1.bf16.msra.mxu0 0
      %683 = vmatprep.subr.bf16.mxu0 0
      %684 = vmatpush1.bf16.msra.mxu0 0
      %685 = vmatprep.subr.bf16.mxu0 0
      %686 = vmatpush1.bf16.msra.mxu0 0
      %687 = vmatprep.subr.bf16.mxu0 0
      %688 = vmatpush1.bf16.msra.mxu0 0
      %689 = vmatprep.subr.bf16.mxu0 0
      %690 = vmatpush1.bf16.msra.mxu0 0
      %691 = vmatprep.subr.bf16.mxu0 0
      %692 = vmatpush1.bf16.msra.mxu0 0
      %693 = vmatprep.mubr.bf16.mxu0 0
      %694 = vmatmul.mubr.bf16.gmra.mrb[0].mxu0 %v659
      %v695 = vpop.f32.mrb[0].mxu0
      %v696 = vadd.f32 %v643, %v695
      %v697 = vpop.f32.mrb[0].mxu0
      %v698 = vpop.f32.mrb[0].mxu0
      %v699 = vpop.f32.mrb[0].mxu0
      %700 = vdwg.mxu0
      %v701 = vpack.c.bf16 %v696, %v696
      %v702 = vld [vmem:[%s4] sm:$0xf]
      %v703 = vld [vmem:[%s4 + $0x4] sm:$0xf]
      %v704 = vld [vmem:[%s4 + $0x8] sm:$0xf]
      %v705 = vld [vmem:[%s4 + $0xc] sm:$0xf]
      %v706 = vld [vmem:[%s7] sm:$0x1]
      %v708 = vlaneseq
      %v709 = vshrl.u32 %v708, 7
      %v710 = vsub.s32 0, %v709
      %v711 = vrot.slane %v706, %v710
      %v717 = vunpack.c.l.b16 %v702
      %v718 = vunpack.c.l.b16 %v703
      %v719 = vunpack.c.l.b16 %v704
      %v720 = vunpack.c.l.b16 %v705
      %v721 = vpack.c.b16 %v718, %v717
      %v722 = vpack.c.b16 %v720, %v719
      %725 = vmatprep.subr.bf16.mxu0 0
      %726 = vmatpush1.bf16.msra.mxu0 %v721
      %727 = vmatprep.subr.bf16.mxu0 0
      %728 = vmatpush1.bf16.msra.mxu0 %v722
      %729 = vmatprep.subr.bf16.mxu0 0
      %730 = vmatpush1.bf16.msra.mxu0 0
      %731 = vmatprep.subr.bf16.mxu0 0
      %732 = vmatpush1.bf16.msra.mxu0 0
      %733 = vmatprep.subr.bf16.mxu0 0
      %734 = vmatpush1.bf16.msra.mxu0 0
      %735 = vmatprep.subr.bf16.mxu0 0
      %736 = vmatpush1.bf16.msra.mxu0 0
      %737 = vmatprep.subr.bf16.mxu0 0
      %738 = vmatpush1.bf16.msra.mxu0 0
      %739 = vmatprep.subr.bf16.mxu0 0
      %740 = vmatpush1.bf16.msra.mxu0 0
      %741 = vmatprep.subr.bf16.mxu0 0
      %742 = vmatpush1.bf16.msra.mxu0 0
      %743 = vmatprep.subr.bf16.mxu0 0
      %744 = vmatpush1.bf16.msra.mxu0 0
      %745 = vmatprep.subr.bf16.mxu0 0
      %746 = vmatpush1.bf16.msra.mxu0 0
      %747 = vmatprep.subr.bf16.mxu0 0
      %748 = vmatpush1.bf16.msra.mxu0 0
      %749 = vmatprep.subr.bf16.mxu0 0
      %750 = vmatpush1.bf16.msra.mxu0 0
      %751 = vmatprep.subr.bf16.mxu0 0
      %752 = vmatpush1.bf16.msra.mxu0 0
      %753 = vmatprep.subr.bf16.mxu0 0
      %754 = vmatpush1.bf16.msra.mxu0 0
      %755 = vmatprep.subr.bf16.mxu0 0
      %756 = vmatpush1.bf16.msra.mxu0 0
      %757 = vmatprep.mubr.bf16.mxu0 0
      %758 = vmatmul.mubr.bf16.gmra.mrb[0].mxu0 %v659
      %v759 = vpop.f32.mrb[0].mxu0
      %v760 = vadd.f32 %v711, %v759
      %v761 = vpop.f32.mrb[0].mxu0
      %v762 = vpop.f32.mrb[0].mxu0
      %v763 = vpop.f32.mrb[0].mxu0
      %764 = vdwg.mxu0
      %v765 = vpack.c.bf16 %v760, %v760
      %v766 = vld [vmem:[%s5] sm:$0xf]
      %v767 = vld [vmem:[%s5 + $0x4] sm:$0xf]
      %v768 = vld [vmem:[%s5 + $0x8] sm:$0xf]
      %v769 = vld [vmem:[%s5 + $0xc] sm:$0xf]
      %v770 = vld [vmem:[%s8] sm:$0x1]
      %v772 = vlaneseq
      %v773 = vshrl.u32 %v772, 7
      %v774 = vsub.s32 0, %v773
      %v775 = vrot.slane %v770, %v774
      %v781 = vunpack.c.l.b16 %v766
      %v782 = vunpack.c.l.b16 %v767
      %v783 = vunpack.c.l.b16 %v768
      %v784 = vunpack.c.l.b16 %v769
      %v785 = vpack.c.b16 %v782, %v781
      %v786 = vpack.c.b16 %v784, %v783
      %789 = vmatprep.subr.bf16.mxu0 0
      %790 = vmatpush1.bf16.msra.mxu0 %v785
      %791 = vmatprep.subr.bf16.mxu0 0
      %792 = vmatpush1.bf16.msra.mxu0 %v786
      %793 = vmatprep.subr.bf16.mxu0 0
      %794 = vmatpush1.bf16.msra.mxu0 0
      %795 = vmatprep.subr.bf16.mxu0 0
      %796 = vmatpush1.bf16.msra.mxu0 0
      %797 = vmatprep.subr.bf16.mxu0 0
      %798 = vmatpush1.bf16.msra.mxu0 0
      %799 = vmatprep.subr.bf16.mxu0 0
      %800 = vmatpush1.bf16.msra.mxu0 0
      %801 = vmatprep.subr.bf16.mxu0 0
      %802 = vmatpush1.bf16.msra.mxu0 0
      %803 = vmatprep.subr.bf16.mxu0 0
      %804 = vmatpush1.bf16.msra.mxu0 0
      %805 = vmatprep.subr.bf16.mxu0 0
      %806 = vmatpush1.bf16.msra.mxu0 0
      %807 = vmatprep.subr.bf16.mxu0 0
      %808 = vmatpush1.bf16.msra.mxu0 0
      %809 = vmatprep.subr.bf16.mxu0 0
      %810 = vmatpush1.bf16.msra.mxu0 0
      %811 = vmatprep.subr.bf16.mxu0 0
      %812 = vmatpush1.bf16.msra.mxu0 0
      %813 = vmatprep.subr.bf16.mxu0 0
      %814 = vmatpush1.bf16.msra.mxu0 0
      %815 = vmatprep.subr.bf16.mxu0 0
      %816 = vmatpush1.bf16.msra.mxu0 0
      %817 = vmatprep.subr.bf16.mxu0 0
      %818 = vmatpush1.bf16.msra.mxu0 0
      %819 = vmatprep.subr.bf16.mxu0 0
      %820 = vmatpush1.bf16.msra.mxu0 0
      %821 = vmatprep.mubr.bf16.mxu0 0
      %822 = vmatmul.mubr.bf16.gmra.mrb[0].mxu0 %v659
      %v823 = vpop.f32.mrb[0].mxu0
      %v824 = vadd.f32 %v775, %v823
      %v825 = vpop.f32.mrb[0].mxu0
      %v826 = vpop.f32.mrb[0].mxu0
      %v827 = vpop.f32.mrb[0].mxu0
      %828 = vdwg.mxu0
      %v829 = vpack.c.bf16 %v824, %v824
      %vm830 = vcmask 130048
      %v832 = vsel %vm830, %v701, 0
      %v835 = vsel %vm830, %v765, 0
      %837 = vmatprep.subr.bf16.mxu0 0
      %838 = vmatpush1.bf16.xpose.msra.mxu0 %v835
      %839 = vmatprep.subr.bf16.mxu0 0
      %840 = vmatpush1.bf16.xpose.msra.mxu0 0
      %841 = vmatprep.subr.bf16.mxu0 0
      %842 = vmatpush1.bf16.xpose.msra.mxu0 0
      %843 = vmatprep.subr.bf16.mxu0 0
      %844 = vmatpush1.bf16.xpose.msra.mxu0 0
      %845 = vmatprep.subr.bf16.mxu0 0
      %846 = vmatpush1.bf16.xpose.msra.mxu0 0
      %847 = vmatprep.subr.bf16.mxu0 0
      %848 = vmatpush1.bf16.xpose.msra.mxu0 0
      %849 = vmatprep.subr.bf16.mxu0 0
      %850 = vmatpush1.bf16.xpose.msra.mxu0 0
      %851 = vmatprep.subr.bf16.mxu0 0
      %852 = vmatpush1.bf16.xpose.msra.mxu0 0
      %853 = vmatprep.subr.bf16.mxu0 0
      %854 = vmatpush1.bf16.xpose.msra.mxu0 0
      %855 = vmatprep.subr.bf16.mxu0 0
      %856 = vmatpush1.bf16.xpose.msra.mxu0 0
      %857 = vmatprep.subr.bf16.mxu0 0
      %858 = vmatpush1.bf16.xpose.msra.mxu0 0
      %859 = vmatprep.subr.bf16.mxu0 0
      %860 = vmatpush1.bf16.xpose.msra.mxu0 0
      %861 = vmatprep.subr.bf16.mxu0 0
      %862 = vmatpush1.bf16.xpose.msra.mxu0 0
      %863 = vmatprep.subr.bf16.mxu0 0
      %864 = vmatpush1.bf16.xpose.msra.mxu0 0
      %865 = vmatprep.subr.bf16.mxu0 0
      %866 = vmatpush1.bf16.xpose.msra.mxu0 0
      %867 = vmatprep.subr.bf16.mxu0 0
      %868 = vmatpush1.bf16.xpose.msra.mxu0 0
      %869 = vmatprep.mubr.bf16.mxu0 0
      %870 = vmatmul.mubr.bf16.gmra.mrb[0].mxu0 %v832
      %v871 = vpop.f32.mrb[0].mxu0
      %v872 = vadd.f32 0.0, %v871
      %v873 = vpop.f32.mrb[0].mxu0
      %v874 = vpop.f32.mrb[0].mxu0
      %v875 = vpop.f32.mrb[0].mxu0
      %876 = vdwg.mxu0
      %vm877 = vcmp.gt.f32.partialorder %v632, 0.5
      %v878 = vsel %vm877, 1, 0
      %v879 = vlaneseq
      %v880 = vshrl.u32 %v879, 7
      %v881 = vsub.s32 0, %v880
      %v882 = vrot.slane %v878, %v881
      %vm883 = vcmp.eq.s32.totalorder %v882, 1
      %v884 = vsel %vm883, -1e+30, %v872
      %vm885 = vcmask 64512
      %v886 = vsel %vm885, %v884, -inf
      %887 = vmax.xlane.f32.xlu0 %v886
      %v888 = vpop.xlane.xlu0 %887
      %v889 = vsub.f32 %v884, %v888
      %v890 = vmul.f32 %v889, 1.442695
      %v891 = vpow.pop %v890
      %v892 = vsel %vm885, %v891, 0.0
      %893 = vadd.xlane.f32.xlu0 %v892
      %v894 = vpop.xlane.xlu0 %893
      %v895 = vrcp.pop %v894
      %v896 = vmul.f32 %v891, %v895
      %v897 = vpack.c.bf16 %v896, %v896
      %v899 = vsel %vm885, %v897, 0
      %vm901 = vcmask 1043456
      %v903 = vsel %vm901, %v829, 0
      %905 = vmatprep.subr.bf16.mxu0 0
      %906 = vmatpush1.bf16.msra.mxu0 %v903
      %907 = vmatprep.subr.bf16.mxu0 0
      %908 = vmatpush1.bf16.msra.mxu0 0
      %909 = vmatprep.subr.bf16.mxu0 0
      %910 = vmatpush1.bf16.msra.mxu0 0
      %911 = vmatprep.subr.bf16.mxu0 0
      %912 = vmatpush1.bf16.msra.mxu0 0
      %913 = vmatprep.subr.bf16.mxu0 0
      %914 = vmatpush1.bf16.msra.mxu0 0
      %915 = vmatprep.subr.bf16.mxu0 0
      %916 = vmatpush1.bf16.msra.mxu0 0
      %917 = vmatprep.subr.bf16.mxu0 0
      %918 = vmatpush1.bf16.msra.mxu0 0
      %919 = vmatprep.subr.bf16.mxu0 0
      %920 = vmatpush1.bf16.msra.mxu0 0
      %921 = vmatprep.subr.bf16.mxu0 0
      %922 = vmatpush1.bf16.msra.mxu0 0
      %923 = vmatprep.subr.bf16.mxu0 0
      %924 = vmatpush1.bf16.msra.mxu0 0
      %925 = vmatprep.subr.bf16.mxu0 0
      %926 = vmatpush1.bf16.msra.mxu0 0
      %927 = vmatprep.subr.bf16.mxu0 0
      %928 = vmatpush1.bf16.msra.mxu0 0
      %929 = vmatprep.subr.bf16.mxu0 0
      %930 = vmatpush1.bf16.msra.mxu0 0
      %931 = vmatprep.subr.bf16.mxu0 0
      %932 = vmatpush1.bf16.msra.mxu0 0
      %933 = vmatprep.subr.bf16.mxu0 0
      %934 = vmatpush1.bf16.msra.mxu0 0
      %935 = vmatprep.subr.bf16.mxu0 0
      %936 = vmatpush1.bf16.msra.mxu0 0
      %937 = vmatprep.mubr.bf16.mxu0 0
      %938 = vmatmul.mubr.bf16.gmra.mrb[0].mxu0 %v899
      %v939 = vpop.f32.mrb[0].mxu0
      %v940 = vadd.f32 0.0, %v939
      %v941 = vpop.f32.mrb[0].mxu0
      %v942 = vpop.f32.mrb[0].mxu0
      %v943 = vpop.f32.mrb[0].mxu0
      %944 = vdwg.mxu0
      %v945 = vpack.c.bf16 %v940, %v940
      %v946 = vld [vmem:[%s9] sm:$0xf]
      %v947 = vld [vmem:[%s9 + $0x4] sm:$0xf]
      %s948 = scalar_lea.vmem %s3, 16
      %v949 = vld [vmem:[%s948] sm:$0xf]
      %v950 = vld [vmem:[%s948 + $0x4] sm:$0xf]
      %v951 = vld [vmem:[%s948 + $0x8] sm:$0xf]
      %v952 = vld [vmem:[%s948 + $0xc] sm:$0xf]
      %s953 = scalar_lea.vmem %s6, 1
      %v954 = vld [vmem:[%s953] sm:$0x1]
      %v956 = vlaneseq
      %v957 = vshrl.u32 %v956, 7
      %v958 = vsub.s32 0, %v957
      %v959 = vrot.slane %v954, %v958
      %v965 = vunpack.c.l.b16 %v949
      %v966 = vunpack.c.l.b16 %v950
      %v967 = vunpack.c.l.b16 %v951
      %v968 = vunpack.c.l.b16 %v952
      %v969 = vpack.c.b16 %v966, %v965
      %v970 = vpack.c.b16 %v968, %v967
      %973 = vmatprep.subr.bf16.mxu0 0
      %974 = vmatpush1.bf16.msra.mxu0 %v969
      %975 = vmatprep.subr.bf16.mxu0 0
      %976 = vmatpush1.bf16.msra.mxu0 %v970
      %977 = vmatprep.subr.bf16.mxu0 0
      %978 = vmatpush1.bf16.msra.mxu0 0
      %979 = vmatprep.subr.bf16.mxu0 0
      %980 = vmatpush1.bf16.msra.mxu0 0
      %981 = vmatprep.subr.bf16.mxu0 0
      %982 = vmatpush1.bf16.msra.mxu0 0
      %983 = vmatprep.subr.bf16.mxu0 0
      %984 = vmatpush1.bf16.msra.mxu0 0
      %985 = vmatprep.subr.bf16.mxu0 0
      %986 = vmatpush1.bf16.msra.mxu0 0
      %987 = vmatprep.subr.bf16.mxu0 0
      %988 = vmatpush1.bf16.msra.mxu0 0
      %989 = vmatprep.subr.bf16.mxu0 0
      %990 = vmatpush1.bf16.msra.mxu0 0
      %991 = vmatprep.subr.bf16.mxu0 0
      %992 = vmatpush1.bf16.msra.mxu0 0
      %993 = vmatprep.subr.bf16.mxu0 0
      %994 = vmatpush1.bf16.msra.mxu0 0
      %995 = vmatprep.subr.bf16.mxu0 0
      %996 = vmatpush1.bf16.msra.mxu0 0
      %997 = vmatprep.subr.bf16.mxu0 0
      %998 = vmatpush1.bf16.msra.mxu0 0
      %999 = vmatprep.subr.bf16.mxu0 0
      %1000 = vmatpush1.bf16.msra.mxu0 0
      %1001 = vmatprep.subr.bf16.mxu0 0
      %1002 = vmatpush1.bf16.msra.mxu0 0
      %1003 = vmatprep.subr.bf16.mxu0 0
      %1004 = vmatpush1.bf16.msra.mxu0 0
      %1005 = vmatprep.mubr.bf16.mxu0 0
      %1006 = vmatmul.mubr.bf16.gmra.mrb[0].mxu0 %v659
      %v1007 = vpop.f32.mrb[0].mxu0
      %v1008 = vadd.f32 %v959, %v1007
      %v1009 = vpop.f32.mrb[0].mxu0
      %v1010 = vpop.f32.mrb[0].mxu0
      %v1011 = vpop.f32.mrb[0].mxu0
      %1012 = vdwg.mxu0
      %v1013 = vpack.c.bf16 %v1008, %v1008
      %s1014 = scalar_lea.vmem %s4, 16
      %v1015 = vld [vmem:[%s1014] sm:$0xf]
      %v1016 = vld [vmem:[%s1014 + $0x4] sm:$0xf]
      %v1017 = vld [vmem:[%s1014 + $0x8] sm:$0xf]
      %v1018 = vld [vmem:[%s1014 + $0xc] sm:$0xf]
      %s1019 = scalar_lea.vmem %s7, 1
      %v1020 = vld [vmem:[%s1019] sm:$0x1]
      %v1022 = vlaneseq
      %v1023 = vshrl.u32 %v1022, 7
      %v1024 = vsub.s32 0, %v1023
      %v1025 = vrot.slane %v1020, %v1024
      %v1031 = vunpack.c.l.b16 %v1015
      %v1032 = vunpack.c.l.b16 %v1016
      %v1033 = vunpack.c.l.b16 %v1017
      %v1034 = vunpack.c.l.b16 %v1018
      %v1035 = vpack.c.b16 %v1032, %v1031
      %v1036 = vpack.c.b16 %v1034, %v1033
      %1039 = vmatprep.subr.bf16.mxu0 0
      %1040 = vmatpush1.bf16.msra.mxu0 %v1035
      %1041 = vmatprep.subr.bf16.mxu0 0
      %1042 = vmatpush1.bf16.msra.mxu0 %v1036
      %1043 = vmatprep.subr.bf16.mxu0 0
      %1044 = vmatpush1.bf16.msra.mxu0 0
      %1045 = vmatprep.subr.bf16.mxu0 0
      %1046 = vmatpush1.bf16.msra.mxu0 0
      %1047 = vmatprep.subr.bf16.mxu0 0
      %1048 = vmatpush1.bf16.msra.mxu0 0
      %1049 = vmatprep.subr.bf16.mxu0 0
      %1050 = vmatpush1.bf16.msra.mxu0 0
      %1051 = vmatprep.subr.bf16.mxu0 0
      %1052 = vmatpush1.bf16.msra.mxu0 0
      %1053 = vmatprep.subr.bf16.mxu0 0
      %1054 = vmatpush1.bf16.msra.mxu0 0
      %1055 = vmatprep.subr.bf16.mxu0 0
      %1056 = vmatpush1.bf16.msra.mxu0 0
      %1057 = vmatprep.subr.bf16.mxu0 0
      %1058 = vmatpush1.bf16.msra.mxu0 0
      %1059 = vmatprep.subr.bf16.mxu0 0
      %1060 = vmatpush1.bf16.msra.mxu0 0
      %1061 = vmatprep.subr.bf16.mxu0 0
      %1062 = vmatpush1.bf16.msra.mxu0 0
      %1063 = vmatprep.subr.bf16.mxu0 0
      %1064 = vmatpush1.bf16.msra.mxu0 0
      %1065 = vmatprep.subr.bf16.mxu0 0
      %1066 = vmatpush1.bf16.msra.mxu0 0
      %1067 = vmatprep.subr.bf16.mxu0 0
      %1068 = vmatpush1.bf16.msra.mxu0 0
      %1069 = vmatprep.subr.bf16.mxu0 0
      %1070 = vmatpush1.bf16.msra.mxu0 0
      %1071 = vmatprep.mubr.bf16.mxu0 0
      %1072 = vmatmul.mubr.bf16.gmra.mrb[0].mxu0 %v659
      %v1073 = vpop.f32.mrb[0].mxu0
      %v1074 = vadd.f32 %v1025, %v1073
      %v1075 = vpop.f32.mrb[0].mxu0
      %v1076 = vpop.f32.mrb[0].mxu0
      %v1077 = vpop.f32.mrb[0].mxu0
      %1078 = vdwg.mxu0
      %v1079 = vpack.c.bf16 %v1074, %v1074
      %s1080 = scalar_lea.vmem %s5, 16
      %v1081 = vld [vmem:[%s1080] sm:$0xf]
      %v1082 = vld [vmem:[%s1080 + $0x4] sm:$0xf]
      %v1083 = vld [vmem:[%s1080 + $0x8] sm:$0xf]
      %v1084 = vld [vmem:[%s1080 + $0xc] sm:$0xf]
      %s1085 = scalar_lea.vmem %s8, 1
      %v1086 = vld [vmem:[%s1085] sm:$0x1]
      %v1088 = vlaneseq
      %v1089 = vshrl.u32 %v1088, 7
      %v1090 = vsub.s32 0, %v1089
      %v1091 = vrot.slane %v1086, %v1090
      %v1097 = vunpack.c.l.b16 %v1081
      %v1098 = vunpack.c.l.b16 %v1082
      %v1099 = vunpack.c.l.b16 %v1083
      %v1100 = vunpack.c.l.b16 %v1084
      %v1101 = vpack.c.b16 %v1098, %v1097
      %v1102 = vpack.c.b16 %v1100, %v1099
      %1105 = vmatprep.subr.bf16.mxu0 0
      %1106 = vmatpush1.bf16.msra.mxu0 %v1101
      %1107 = vmatprep.subr.bf16.mxu0 0
      %1108 = vmatpush1.bf16.msra.mxu0 %v1102
      %1109 = vmatprep.subr.bf16.mxu0 0
      %1110 = vmatpush1.bf16.msra.mxu0 0
      %1111 = vmatprep.subr.bf16.mxu0 0
      %1112 = vmatpush1.bf16.msra.mxu0 0
      %1113 = vmatprep.subr.bf16.mxu0 0
      %1114 = vmatpush1.bf16.msra.mxu0 0
      %1115 = vmatprep.subr.bf16.mxu0 0
      %1116 = vmatpush1.bf16.msra.mxu0 0
      %1117 = vmatprep.subr.bf16.mxu0 0
      %1118 = vmatpush1.bf16.msra.mxu0 0
      %1119 = vmatprep.subr.bf16.mxu0 0
      %1120 = vmatpush1.bf16.msra.mxu0 0
      %1121 = vmatprep.subr.bf16.mxu0 0
      %1122 = vmatpush1.bf16.msra.mxu0 0
      %1123 = vmatprep.subr.bf16.mxu0 0
      %1124 = vmatpush1.bf16.msra.mxu0 0
      %1125 = vmatprep.subr.bf16.mxu0 0
      %1126 = vmatpush1.bf16.msra.mxu0 0
      %1127 = vmatprep.subr.bf16.mxu0 0
      %1128 = vmatpush1.bf16.msra.mxu0 0
      %1129 = vmatprep.subr.bf16.mxu0 0
      %1130 = vmatpush1.bf16.msra.mxu0 0
      %1131 = vmatprep.subr.bf16.mxu0 0
      %1132 = vmatpush1.bf16.msra.mxu0 0
      %1133 = vmatprep.subr.bf16.mxu0 0
      %1134 = vmatpush1.bf16.msra.mxu0 0
      %1135 = vmatprep.subr.bf16.mxu0 0
      %1136 = vmatpush1.bf16.msra.mxu0 0
      %1137 = vmatprep.mubr.bf16.mxu0 0
      %1138 = vmatmul.mubr.bf16.gmra.mrb[0].mxu0 %v659
      %v1139 = vpop.f32.mrb[0].mxu0
      %v1140 = vadd.f32 %v1091, %v1139
      %v1141 = vpop.f32.mrb[0].mxu0
      %v1142 = vpop.f32.mrb[0].mxu0
      %v1143 = vpop.f32.mrb[0].mxu0
      %1144 = vdwg.mxu0
      %v1145 = vpack.c.bf16 %v1140, %v1140
      %v1147 = vsel %vm830, %v1013, 0
      %v1150 = vsel %vm830, %v1079, 0
      %1152 = vmatprep.subr.bf16.mxu0 0
      %1153 = vmatpush1.bf16.xpose.msra.mxu0 %v1150
      %1154 = vmatprep.subr.bf16.mxu0 0
      %1155 = vmatpush1.bf16.xpose.msra.mxu0 0
      %1156 = vmatprep.subr.bf16.mxu0 0
      %1157 = vmatpush1.bf16.xpose.msra.mxu0 0
      %1158 = vmatprep.subr.bf16.mxu0 0
      %1159 = vmatpush1.bf16.xpose.msra.mxu0 0
      %1160 = vmatprep.subr.bf16.mxu0 0
      %1161 = vmatpush1.bf16.xpose.msra.mxu0 0
      %1162 = vmatprep.subr.bf16.mxu0 0
      %1163 = vmatpush1.bf16.xpose.msra.mxu0 0
      %1164 = vmatprep.subr.bf16.mxu0 0
      %1165 = vmatpush1.bf16.xpose.msra.mxu0 0
      %1166 = vmatprep.subr.bf16.mxu0 0
      %1167 = vmatpush1.bf16.xpose.msra.mxu0 0
      %1168 = vmatprep.subr.bf16.mxu0 0
      %1169 = vmatpush1.bf16.xpose.msra.mxu0 0
      %1170 = vmatprep.subr.bf16.mxu0 0
      %1171 = vmatpush1.bf16.xpose.msra.mxu0 0
      %1172 = vmatprep.subr.bf16.mxu0 0
      %1173 = vmatpush1.bf16.xpose.msra.mxu0 0
      %1174 = vmatprep.subr.bf16.mxu0 0
      %1175 = vmatpush1.bf16.xpose.msra.mxu0 0
      %1176 = vmatprep.subr.bf16.mxu0 0
      %1177 = vmatpush1.bf16.xpose.msra.mxu0 0
      %1178 = vmatprep.subr.bf16.mxu0 0
      %1179 = vmatpush1.bf16.xpose.msra.mxu0 0
      %1180 = vmatprep.subr.bf16.mxu0 0
      %1181 = vmatpush1.bf16.xpose.msra.mxu0 0
      %1182 = vmatprep.subr.bf16.mxu0 0
      %1183 = vmatpush1.bf16.xpose.msra.mxu0 0
      %1184 = vmatprep.mubr.bf16.mxu0 0
      %1185 = vmatmul.mubr.bf16.gmra.mrb[0].mxu0 %v1147
      %v1186 = vpop.f32.mrb[0].mxu0
      %v1187 = vadd.f32 0.0, %v1186
      %v1188 = vpop.f32.mrb[0].mxu0
      %v1189 = vpop.f32.mrb[0].mxu0
      %v1190 = vpop.f32.mrb[0].mxu0
      %1191 = vdwg.mxu0
      %v1192 = vsel %vm883, -1e+30, %v1187
      %v1193 = vsel %vm885, %v1192, -inf
      %1194 = vmax.xlane.f32.xlu0 %v1193
      %v1195 = vpop.xlane.xlu0 %1194
      %v1196 = vsub.f32 %v1192, %v1195
      %v1197 = vmul.f32 %v1196, 1.442695
      %v1198 = vpow.pop %v1197
      %v1199 = vsel %vm885, %v1198, 0.0
      %1200 = vadd.xlane.f32.xlu0 %v1199
      %v1201 = vpop.xlane.xlu0 %1200
      %v1202 = vrcp.pop %v1201
      %v1203 = vmul.f32 %v1198, %v1202
      %v1204 = vpack.c.bf16 %v1203, %v1203
      %v1206 = vsel %vm885, %v1204, 0
      %v1209 = vsel %vm901, %v1145, 0
      %1211 = vmatprep.subr.bf16.mxu0 0
      %1212 = vmatpush1.bf16.msra.mxu0 %v1209
      %1213 = vmatprep.subr.bf16.mxu0 0
      %1214 = vmatpush1.bf16.msra.mxu0 0
      %1215 = vmatprep.subr.bf16.mxu0 0
      %1216 = vmatpush1.bf16.msra.mxu0 0
      %1217 = vmatprep.subr.bf16.mxu0 0
      %1218 = vmatpush1.bf16.msra.mxu0 0
      %1219 = vmatprep.subr.bf16.mxu0 0
      %1220 = vmatpush1.bf16.msra.mxu0 0
      %1221 = vmatprep.subr.bf16.mxu0 0
      %1222 = vmatpush1.bf16.msra.mxu0 0
      %1223 = vmatprep.subr.bf16.mxu0 0
      %1224 = vmatpush1.bf16.msra.mxu0 0
      %1225 = vmatprep.subr.bf16.mxu0 0
      %1226 = vmatpush1.bf16.msra.mxu0 0
      %1227 = vmatprep.subr.bf16.mxu0 0
      %1228 = vmatpush1.bf16.msra.mxu0 0
      %1229 = vmatprep.subr.bf16.mxu0 0
      %1230 = vmatpush1.bf16.msra.mxu0 0
      %1231 = vmatprep.subr.bf16.mxu0 0
      %1232 = vmatpush1.bf16.msra.mxu0 0
      %1233 = vmatprep.subr.bf16.mxu0 0
      %1234 = vmatpush1.bf16.msra.mxu0 0
      %1235 = vmatprep.subr.bf16.mxu0 0
      %1236 = vmatpush1.bf16.msra.mxu0 0
      %1237 = vmatprep.subr.bf16.mxu0 0
      %1238 = vmatpush1.bf16.msra.mxu0 0
      %1239 = vmatprep.subr.bf16.mxu0 0
      %1240 = vmatpush1.bf16.msra.mxu0 0
      %1241 = vmatprep.subr.bf16.mxu0 0
      %1242 = vmatpush1.bf16.msra.mxu0 0
      %1243 = vmatprep.mubr.bf16.mxu0 0
      %1244 = vmatmul.mubr.bf16.gmra.mrb[0].mxu0 %v1206
      %v1245 = vpop.f32.mrb[0].mxu0
      %v1246 = vadd.f32 0.0, %v1245
      %v1247 = vpop.f32.mrb[0].mxu0
      %v1248 = vpop.f32.mrb[0].mxu0
      %v1249 = vpop.f32.mrb[0].mxu0
      %1250 = vdwg.mxu0
      %v1251 = vpack.c.bf16 %v1246, %v1246
      %s1252 = scalar_lea.vmem %s9, 8
      %v1253 = vld [vmem:[%s1252] sm:$0xf]
      %v1254 = vld [vmem:[%s1252 + $0x4] sm:$0xf]
      %v1257 = vunpack.c.l.b16 %v1253
      %v1258 = vunpack.c.l.b16 %v1254
      %v1259 = vpack.c.b16 %v1258, %v1257
      %v1262 = vsel %vm830, %v1251, 0
      %1264 = vmatprep.subr.bf16.mxu0 0
      %1265 = vmatpush1.bf16.msra.mxu0 %v1259
      %1266 = vmatprep.subr.bf16.mxu0 0
      %1267 = vmatpush1.bf16.msra.mxu0 0
      %1268 = vmatprep.subr.bf16.mxu0 0
      %1269 = vmatpush1.bf16.msra.mxu0 0
      %1270 = vmatprep.subr.bf16.mxu0 0
      %1271 = vmatpush1.bf16.msra.mxu0 0
      %1272 = vmatprep.subr.bf16.mxu0 0
      %1273 = vmatpush1.bf16.msra.mxu0 0
      %1274 = vmatprep.subr.bf16.mxu0 0
      %1275 = vmatpush1.bf16.msra.mxu0 0
      %1276 = vmatprep.subr.bf16.mxu0 0
      %1277 = vmatpush1.bf16.msra.mxu0 0
      %1278 = vmatprep.subr.bf16.mxu0 0
      %1279 = vmatpush1.bf16.msra.mxu0 0
      %1280 = vmatprep.subr.bf16.mxu0 0
      %1281 = vmatpush1.bf16.msra.mxu0 0
      %1282 = vmatprep.subr.bf16.mxu0 0
      %1283 = vmatpush1.bf16.msra.mxu0 0
      %1284 = vmatprep.subr.bf16.mxu0 0
      %1285 = vmatpush1.bf16.msra.mxu0 0
      %1286 = vmatprep.subr.bf16.mxu0 0
      %1287 = vmatpush1.bf16.msra.mxu0 0
      %1288 = vmatprep.subr.bf16.mxu0 0
      %1289 = vmatpush1.bf16.msra.mxu0 0
      %1290 = vmatprep.subr.bf16.mxu0 0
      %1291 = vmatpush1.bf16.msra.mxu0 0
      %1292 = vmatprep.subr.bf16.mxu0 0
      %1293 = vmatpush1.bf16.msra.mxu0 0
      %1294 = vmatprep.subr.bf16.mxu0 0
      %1295 = vmatpush1.bf16.msra.mxu0 0
      %1296 = vmatprep.mubr.bf16.mxu0 0
      %1297 = vmatmul.mubr.bf16.gmra.mrb[0].mxu0 %v1262
      %v1298 = vpop.f32.mrb[0].mxu0
      %v1299 = vadd.f32 0.0, %v1298
      %v1300 = vpop.f32.mrb[0].mxu0
      %v1301 = vpop.f32.mrb[0].mxu0
      %v1302 = vpop.f32.mrb[0].mxu0
      %1303 = vdwg.mxu0
      %v1306 = vunpack.c.l.b16 %v946
      %v1307 = vunpack.c.l.b16 %v947
      %v1308 = vpack.c.b16 %v1307, %v1306
      %v1311 = vsel %vm830, %v945, 0
      %1313 = vmatprep.subr.bf16.mxu0 0
      %1314 = vmatpush1.bf16.msra.mxu0 %v1308
      %1315 = vmatprep.subr.bf16.mxu0 0
      %1316 = vmatpush1.bf16.msra.mxu0 0
      %1317 = vmatprep.subr.bf16.mxu0 0
      %1318 = vmatpush1.bf16.msra.mxu0 0
      %1319 = vmatprep.subr.bf16.mxu0 0
      %1320 = vmatpush1.bf16.msra.mxu0 0
      %1321 = vmatprep.subr.bf16.mxu0 0
      %1322 = vmatpush1.bf16.msra.mxu0 0
      %1323 = vmatprep.subr.bf16.mxu0 0
      %1324 = vmatpush1.bf16.msra.mxu0 0
      %1325 = vmatprep.subr.bf16.mxu0 0
      %1326 = vmatpush1.bf16.msra.mxu0 0
      %1327 = vmatprep.subr.bf16.mxu0 0
      %1328 = vmatpush1.bf16.msra.mxu0 0
      %1329 = vmatprep.subr.bf16.mxu0 0
      %1330 = vmatpush1.bf16.msra.mxu0 0
      %1331 = vmatprep.subr.bf16.mxu0 0
      %1332 = vmatpush1.bf16.msra.mxu0 0
      %1333 = vmatprep.subr.bf16.mxu0 0
      %1334 = vmatpush1.bf16.msra.mxu0 0
      %1335 = vmatprep.subr.bf16.mxu0 0
      %1336 = vmatpush1.bf16.msra.mxu0 0
      %1337 = vmatprep.subr.bf16.mxu0 0
      %1338 = vmatpush1.bf16.msra.mxu0 0
      %1339 = vmatprep.subr.bf16.mxu0 0
      %1340 = vmatpush1.bf16.msra.mxu0 0
      %1341 = vmatprep.subr.bf16.mxu0 0
      %1342 = vmatpush1.bf16.msra.mxu0 0
      %1343 = vmatprep.subr.bf16.mxu0 0
      %1344 = vmatpush1.bf16.msra.mxu0 0
      %1345 = vmatprep.mubr.bf16.mxu0 0
      %1346 = vmatmul.mubr.bf16.gmra.mrb[0].mxu0 %v1311
      %v1347 = vpop.f32.mrb[0].mxu0
      %v1348 = vadd.f32 %v1299, %v1347
      %v1349 = vpop.f32.mrb[0].mxu0
      %v1350 = vpop.f32.mrb[0].mxu0
      %v1351 = vpop.f32.mrb[0].mxu0
      %1352 = vdwg.mxu0
      %v1353 = vld [vmem:[%s10] sm:$0x1]
      %v1355 = vlaneseq
      %v1356 = vshrl.u32 %v1355, 7
      %v1357 = vsub.s32 0, %v1356
      %v1358 = vrot.slane %v1353, %v1357
      %v1360 = vadd.f32 %v1348, %v1358
      %v1361 = vadd.f32 %v1360, %v630
      %v1362 = vld [vmem:[%s11] sm:$0x1]
      %v1363 = vld [vmem:[%s12] sm:$0x1]
      %v1364 = vsel %vm657, %v1361, 0.0
      %1365 = vadd.xlane.f32.xlu0 %v1364
      %v1366 = vpop.xlane.xlu0 %1365
      %v1367 = vrcp.pop 32.0
      %v1368 = vmul.f32 %v1366, %v1367
      %v1369 = vsub.f32 %v1361, %v1368
      %v1370 = vmul.f32 %v1369, %v1369
      %v1371 = vsel %vm657, %v1370, 0.0
      %1372 = vadd.xlane.f32.xlu0 %v1371
      %v1373 = vpop.xlane.xlu0 %1372
      %v1374 = vmul.f32 %v1373, %v1367
      %v1375 = vadd.f32 %v1374, 1e-05
      %v1376 = vrsqrt.pop %v1375
      %v1377 = vmul.f32 %v1369, %v1376
      %v1379 = vlaneseq
      %v1380 = vshrl.u32 %v1379, 7
      %v1381 = vsub.s32 0, %v1380
      %v1382 = vrot.slane %v1362, %v1381
      %v1384 = vmul.f32 %v1377, %v1382
      %v1386 = vlaneseq
      %v1387 = vshrl.u32 %v1386, 7
      %v1388 = vsub.s32 0, %v1387
      %v1389 = vrot.slane %v1363, %v1388
      %v1391 = vadd.f32 %v1384, %v1389
      %1393 = vset.pattern.permute.xlu0 0
      %1394 = vperm.xlu0 %1393, %v633
      %v1395 = vpop.permute.xlu0 %1394
      %v1397 = vmul.f32 %v1391, %v1395
      %v1398 = vpack.c.bf16 %v1397, %v1397
      %v1399 = vld [vmem:[%s13] sm:$0xf]
      %v1400 = vld [vmem:[%s13 + $0x4] sm:$0xf]
      %v1401 = vld [vmem:[%s13 + $0x8] sm:$0xf]
      %v1402 = vld [vmem:[%s13 + $0xc] sm:$0xf]
      %v1403 = vld [vmem:[%s13 + $0x10] sm:$0xf]
      %v1404 = vld [vmem:[%s13 + $0x14] sm:$0xf]
      %v1405 = vld [vmem:[%s13 + $0x18] sm:$0xf]
      %v1406 = vld [vmem:[%s13 + $0x1c] sm:$0xf]
      %v1407 = vld [vmem:[%s13 + $0x20] sm:$0xf]
      %v1408 = vld [vmem:[%s13 + $0x24] sm:$0xf]
      %v1409 = vld [vmem:[%s13 + $0x28] sm:$0xf]
      %v1410 = vld [vmem:[%s13 + $0x2c] sm:$0xf]
      %v1411 = vld [vmem:[%s14] sm:$0x1]
      %v1413 = vshrl.u32 %v1398, 16
      %v1415 = vrot.slane %v1413, 7
      %v1416 = vshll.u32 %v1398, 16
      %v1418 = vor.u32 %v1415, %v1416
      %vm1420 = vcmask 1040384
      %vm1421 = vsmask.f32 256
      %vm1422 = vmand %vm1420, %vm1421
      %v1423 = vsel %vm1422, 0, %v1418
      %vm1424 = vcmask 1044480
      %vm1425 = vsmask.f32 4352
      %vm1426 = vmand %vm1424, %vm1425
      %v1427 = vsel %vm1426, %v1423, 0
      %v1429 = vshrl.u32 %v1427, 16
      %v1431 = vshll.u32 %v1427, 16
      %v1433 = vrot.slane %v1431, 1
      %v1434 = vor.u32 %v1429, %v1433
      %1435 = vrot.lane.b32.xlu0 %v1434, 32
      %v1436 = vpop.permute.xlu0 %1435
      %v1438 = vrot.slane %v1427, 1
      %1439 = vrot.lane.b32.xlu0 %v1438, 64
      %v1440 = vpop.permute.xlu0 %1439
      %v1442 = vsel %vm657, %v1427, %v1436
      %vm1443 = vcmask 523264
      %v1445 = vsel %vm1443, %v1442, %v1440
      %v1447 = vlaneseq
      %v1448 = vshrl.u32 %v1447, 7
      %v1449 = vsub.s32 0, %v1448
      %v1450 = vrot.slane %v1411, %v1449
      %v1464 = vunpack.c.l.b16 %v1399
      %v1465 = vunpack.c.l.b16 %v1400
      %v1466 = vunpack.c.l.b16 %v1401
      %v1467 = vunpack.c.l.b16 %v1402
      %v1468 = vunpack.c.l.b16 %v1403
      %v1469 = vunpack.c.l.b16 %v1404
      %v1470 = vunpack.c.l.b16 %v1405
      %v1471 = vunpack.c.l.b16 %v1406
      %v1472 = vunpack.c.l.b16 %v1407
      %v1473 = vunpack.c.l.b16 %v1408
      %v1474 = vunpack.c.l.b16 %v1409
      %v1475 = vunpack.c.l.b16 %v1410
      %v1476 = vpack.c.b16 %v1465, %v1464
      %v1477 = vpack.c.b16 %v1467, %v1466
      %v1478 = vpack.c.b16 %v1469, %v1468
      %v1479 = vpack.c.b16 %v1471, %v1470
      %v1480 = vpack.c.b16 %v1473, %v1472
      %v1481 = vpack.c.b16 %v1475, %v1474
      %vm1488 = vcmask 785408
      %v1489 = vsel %vm1488, %v1445, 0
      %1491 = vmatprep.subr.bf16.mxu0 0
      %1492 = vmatpush1.bf16.msra.mxu0 %v1476
      %1493 = vmatprep.subr.bf16.mxu0 0
      %1494 = vmatpush1.bf16.msra.mxu0 %v1477
      %1495 = vmatprep.subr.bf16.mxu0 0
      %1496 = vmatpush1.bf16.msra.mxu0 %v1478
      %1497 = vmatprep.subr.bf16.mxu0 0
      %1498 = vmatpush1.bf16.msra.mxu0 %v1479
      %1499 = vmatprep.subr.bf16.mxu0 0
      %1500 = vmatpush1.bf16.msra.mxu0 %v1480
      %1501 = vmatprep.subr.bf16.mxu0 0
      %1502 = vmatpush1.bf16.msra.mxu0 %v1481
      %1503 = vmatprep.subr.bf16.mxu0 0
      %1504 = vmatpush1.bf16.msra.mxu0 0
      %1505 = vmatprep.subr.bf16.mxu0 0
      %1506 = vmatpush1.bf16.msra.mxu0 0
      %1507 = vmatprep.subr.bf16.mxu0 0
      %1508 = vmatpush1.bf16.msra.mxu0 0
      %1509 = vmatprep.subr.bf16.mxu0 0
      %1510 = vmatpush1.bf16.msra.mxu0 0
      %1511 = vmatprep.subr.bf16.mxu0 0
      %1512 = vmatpush1.bf16.msra.mxu0 0
      %1513 = vmatprep.subr.bf16.mxu0 0
      %1514 = vmatpush1.bf16.msra.mxu0 0
      %1515 = vmatprep.subr.bf16.mxu0 0
      %1516 = vmatpush1.bf16.msra.mxu0 0
      %1517 = vmatprep.subr.bf16.mxu0 0
      %1518 = vmatpush1.bf16.msra.mxu0 0
      %1519 = vmatprep.subr.bf16.mxu0 0
      %1520 = vmatpush1.bf16.msra.mxu0 0
      %1521 = vmatprep.subr.bf16.mxu0 0
      %1522 = vmatpush1.bf16.msra.mxu0 0
      %1523 = vmatprep.mubr.bf16.mxu0 0
      %1524 = vmatmul.mubr.bf16.gmra.mrb[0].mxu0 %v1489
      %v1525 = vpop.f32.mrb[0].mxu0
      %v1526 = vadd.f32 %v1450, %v1525
      %v1527 = vpop.f32.mrb[0].mxu0
      %v1528 = vpop.f32.mrb[0].mxu0
      %v1529 = vpop.f32.mrb[0].mxu0
      %1530 = vdwg.mxu0
      %v1531 = vmax.f32 %v1526, 0.0
      %v1532 = vpack.c.bf16 %v1531, %v1531
      %v1533 = vld [vmem:[%s15] sm:$0xf]
      %v1534 = vld [vmem:[%s15 + $0x4] sm:$0xf]
      %v1535 = vld [vmem:[%s15 + $0x8] sm:$0xf]
      %v1536 = vld [vmem:[%s15 + $0xc] sm:$0xf]
      %v1537 = vld [vmem:[%s15 + $0x10] sm:$0xf]
      %v1538 = vld [vmem:[%s15 + $0x14] sm:$0xf]
      %v1539 = vld [vmem:[%s15 + $0x18] sm:$0xf]
      %v1540 = vld [vmem:[%s15 + $0x1c] sm:$0xf]
      %v1541 = vld [vmem:[%s16] sm:$0x1]
      %v1543 = vlaneseq
      %v1544 = vshrl.u32 %v1543, 7
      %v1545 = vsub.s32 0, %v1544
      %v1546 = vrot.slane %v1541, %v1545
      %v1556 = vunpack.c.l.b16 %v1533
      %v1557 = vunpack.c.l.b16 %v1534
      %v1558 = vunpack.c.l.b16 %v1535
      %v1559 = vunpack.c.l.b16 %v1536
      %v1560 = vunpack.c.l.b16 %v1537
      %v1561 = vunpack.c.l.b16 %v1538
      %v1562 = vunpack.c.l.b16 %v1539
      %v1563 = vunpack.c.l.b16 %v1540
      %v1564 = vpack.c.b16 %v1557, %v1556
      %v1565 = vpack.c.b16 %v1559, %v1558
      %v1566 = vpack.c.b16 %v1561, %v1560
      %v1567 = vpack.c.b16 %v1563, %v1562
      %v1573 = vsel %vm1443, %v1532, 0
      %1575 = vmatprep.subr.bf16.mxu0 0
      %1576 = vmatpush1.bf16.msra.mxu0 %v1564
      %1577 = vmatprep.subr.bf16.mxu0 0
      %1578 = vmatpush1.bf16.msra.mxu0 %v1565
      %1579 = vmatprep.subr.bf16.mxu0 0
      %1580 = vmatpush1.bf16.msra.mxu0 %v1566
      %1581 = vmatprep.subr.bf16.mxu0 0
      %1582 = vmatpush1.bf16.msra.mxu0 %v1567
      %1583 = vmatprep.subr.bf16.mxu0 0
      %1584 = vmatpush1.bf16.msra.mxu0 0
      %1585 = vmatprep.subr.bf16.mxu0 0
      %1586 = vmatpush1.bf16.msra.mxu0 0
      %1587 = vmatprep.subr.bf16.mxu0 0
      %1588 = vmatpush1.bf16.msra.mxu0 0
      %1589 = vmatprep.subr.bf16.mxu0 0
      %1590 = vmatpush1.bf16.msra.mxu0 0
      %1591 = vmatprep.subr.bf16.mxu0 0
      %1592 = vmatpush1.bf16.msra.mxu0 0
      %1593 = vmatprep.subr.bf16.mxu0 0
      %1594 = vmatpush1.bf16.msra.mxu0 0
      %1595 = vmatprep.subr.bf16.mxu0 0
      %1596 = vmatpush1.bf16.msra.mxu0 0
      %1597 = vmatprep.subr.bf16.mxu0 0
      %1598 = vmatpush1.bf16.msra.mxu0 0
      %1599 = vmatprep.subr.bf16.mxu0 0
      %1600 = vmatpush1.bf16.msra.mxu0 0
      %1601 = vmatprep.subr.bf16.mxu0 0
      %1602 = vmatpush1.bf16.msra.mxu0 0
      %1603 = vmatprep.subr.bf16.mxu0 0
      %1604 = vmatpush1.bf16.msra.mxu0 0
      %1605 = vmatprep.subr.bf16.mxu0 0
      %1606 = vmatpush1.bf16.msra.mxu0 0
      %1607 = vmatprep.mubr.bf16.mxu0 0
      %1608 = vmatmul.mubr.bf16.gmra.mrb[0].mxu0 %v1573
      %v1609 = vpop.f32.mrb[0].mxu0
      %v1610 = vadd.f32 %v1546, %v1609
      %v1611 = vpop.f32.mrb[0].mxu0
      %v1612 = vpop.f32.mrb[0].mxu0
      %v1613 = vpop.f32.mrb[0].mxu0
      %1614 = vdwg.mxu0
      %v1615 = vadd.f32 %v1610, %v1397
      %v1616 = vld [vmem:[%s17] sm:$0x1]
      %v1617 = vld [vmem:[%s18] sm:$0x1]
      %v1618 = vsel %vm657, %v1615, 0.0
      %1619 = vadd.xlane.f32.xlu0 %v1618
      %v1620 = vpop.xlane.xlu0 %1619
      %v1621 = vmul.f32 %v1620, %v1367
      %v1622 = vsub.f32 %v1615, %v1621
      %v1623 = vmul.f32 %v1622, %v1622
      %v1624 = vsel %vm657, %v1623, 0.0
      %1625 = vadd.xlane.f32.xlu0 %v1624
      %v1626 = vpop.xlane.xlu0 %1625
      %v1627 = vmul.f32 %v1626, %v1367
      %v1628 = vadd.f32 %v1627, 1e-05
      %v1629 = vrsqrt.pop %v1628
      %v1630 = vmul.f32 %v1622, %v1629
      %v1632 = vlaneseq
      %v1633 = vshrl.u32 %v1632, 7
      %v1634 = vsub.s32 0, %v1633
      %v1635 = vrot.slane %v1616, %v1634
      %v1637 = vmul.f32 %v1630, %v1635
      %v1639 = vlaneseq
      %v1640 = vshrl.u32 %v1639, 7
      %v1641 = vsub.s32 0, %v1640
      %v1642 = vrot.slane %v1617, %v1641
      %v1644 = vadd.f32 %v1637, %v1642
      %v1645 = vmul.f32 %v1644, %v1395
      %1646 = vst.msk [vmem:[%s628] sm:$0xff] %vm657, %v1645
      %p1647 = scmp.lt.s32.totalorder %s30, 1
      %s1648 = scalar_select %p1647, %s30, 1
      %s1649 = smul.addr %s1648, 8
      %s1650 = scalar_lea.vmem %s19, %s1649
      // Predicated region
      $region97: #{_lambda_.2} parent=95 // pred_check
        %p1651 = pneg %p462
      $region98: #{_lambda_.2} parent=95 // pred_check_branch
        %1653 = sbr.rel (%p1651) target = $region100
      $region99: #{_lambda_.2} parent=95 // pred_region
        _
      $region100: #{_lambda_.2} parent=95 // pred_fallthru
        _
    $region96: #{_lambda_.2} parent=5 // pred_fallthru
      _
    %p1654 = scmp.le.s32.totalorder 2, %s25
    // Predicated region
    $region101: #{_lambda_.2} parent=5 // pred_check
      %p1655 = pneg %p1654
    $region102: #{_lambda_.2} parent=5 // pred_check_branch
      %1657 = sbr.rel (%p1655) target = $region104
    $region103: #{_lambda_.2} parent=5 // pred_region
      %s1658 = ssub.s32 %s25, 2
      // Predicated region
      $region105: #{_lambda_.2} parent=103 // pred_check
        %p1659 = pneg %p468
      $region106: #{_lambda_.2} parent=103 // pred_check_branch
        %1661 = sbr.rel (%p1659) target = $region108
      $region107: #{_lambda_.2} parent=103 // pred_region
        %p1662 = scmp.lt.s32.totalorder %s31, 1
        %s1663 = scalar_select %p1662, %s31, 1
        %s1664 = smul.addr %s1663, 8
        %s1665 = scalar_lea.vmem %s19, %s1664
      $region108: #{_lambda_.2} parent=103 // pred_fallthru
        _
    $region104: #{_lambda_.2} parent=5 // pred_fallthru
      _
  $region6: #{_lambda_.2} parent=0 // loop_footer
    %s29 = sadd.s32 1, %s25
  $region7: #{_lambda_.2} parent=0 // loop_footer_branch
    %24 = sbr.rel target = $region3
  $region8: #{_lambda_.2} parent=0 // loop_exit
    _

</llo_original>
